<compile_context>
chip_gen: v6e
topology: v6e:2x2x1
jax: 0.10.0
libtpu: 0.0.40
codegen_flags: <defaults>
</compile_context>

<pallas_src>
import jax
import jax.numpy as jnp
from jax import lax
from jax.experimental import pallas as pl
from jax.experimental.pallas import tpu as pltpu


def linear_kernel(x_ref, w_ref, b_ref, o_ref):
    # x_ref: (b, D)   f32, D on lanes
    # w_ref: (C, D)   f32, native nn.Linear layout, D on lanes
    # b_ref: (1, C)   f32
    # o_ref: (b, C)   f32
    logits = lax.dot_general(
        x_ref[...],
        w_ref[...],
        dimension_numbers=(((1,), (1,)), ((), ())),  # contract D with D -> x @ W^T
        preferred_element_type=jnp.float32,
    )
    o_ref[...] = (logits + b_ref[...]).astype(o_ref.dtype)


def linear_classifier_forward(x, weight, bias):
    """x: (b, 3, H, W) f32; weight: (num_classes, D) as in nn.Linear; bias: (num_classes,)."""
    b = x.shape[0]
    num_classes, d = weight.shape

    # Flatten exactly like torch .view(b, -1) (NCHW, row-major). No weight
    # transpose: keep K as the last (lane) dim for lane-dense DMAs.
    x_flat = x.reshape(b, -1)                 # (b, D)
    assert x_flat.shape[1] == d
    bias2d = bias.reshape(1, num_classes)     # (1, C)

    return pl.pallas_call(
        linear_kernel,
        out_shape=jax.ShapeDtypeStruct((b, num_classes), x.dtype),
        grid_spec=pltpu.PrefetchScalarGridSpec(
            num_scalar_prefetch=0,
            grid=(1,),  # single step: everything VMEM-resident, no reduction loop
            in_specs=[
                pl.BlockSpec((b, d), lambda i: (0, 0)),            # x (full)
                pl.BlockSpec((num_classes, d), lambda i: (0, 0)),  # W (full, native layout)
                pl.BlockSpec((1, num_classes), lambda i: (0, 0)),  # bias
            ],
            out_specs=pl.BlockSpec((b, num_classes), lambda i: (0, 0)),
        ),
        compiler_params=pltpu.CompilerParams(
            dimension_semantics=("arbitrary",),
        ),
    )(x_flat, weight, bias2d)


if __name__ == "__main__":
    key = jax.random.PRNGKey(0)
    k_x, k_w, k_b = jax.random.split(key, 3)

    B, C, H, W = 2, 3, 64, 64          # fc is hardcoded to 3*64*64 -> 6
    NUM_CLASSES = 6
    D = C * H * W

    x = jax.random.normal(k_x, (B, C, H, W), dtype=jnp.float32)
    # Deterministic synthetic params (nn.Linear shapes: weight (out, in), bias (out,))
    bound = 1.0 / (D ** 0.5)
    weight = jax.random.uniform(k_w, (NUM_CLASSES, D), jnp.float32, -bound, bound)
    bias = jax.random.uniform(k_b, (NUM_CLASSES,), jnp.float32, -bound, bound)

    out = linear_classifier_forward(x, weight, bias)
    out = jax.block_until_ready(out)

    # Reference check against plain JAX
    ref = x.reshape(B, -1) @ weight.T + bias
    assert out.shape == (B, NUM_CLASSES)
    assert jnp.allclose(out, ref, atol=1e-4, rtol=1e-4)

    print("KERNEL_OK")
</pallas_src>

<mosaic_0001>
module attributes {stable_mosaic.version = 11 : i64} {
  func.func @linear_kernel(%arg0: i32, %arg1: memref<2x12288xf32, #tpu.memory_space<vmem>>, %arg2: memref<6x12288xf32, #tpu.memory_space<vmem>>, %arg3: memref<1x6xf32, #tpu.memory_space<vmem>>, %arg4: memref<2x6xf32, #tpu.memory_space<vmem>>) attributes {dimension_semantics = [#tpu.dimension_semantics<arbitrary>], iteration_bounds = array<i64: 1>, scalar_prefetch = 0 : i64, scratch_operands = 0 : i64, tpu.core_type = #tpu.core_type<tc>, window_params = [{pipeline_mode = #tpu.pipeline_mode<synchronous>, transform_indices = @transform_0, window_bounds = array<i64: 2, 12288>}, {pipeline_mode = #tpu.pipeline_mode<synchronous>, transform_indices = @transform_1, window_bounds = array<i64: 6, 12288>}, {pipeline_mode = #tpu.pipeline_mode<synchronous>, transform_indices = @transform_2, window_bounds = array<i64: 1, 6>}, {pipeline_mode = #tpu.pipeline_mode<synchronous>, transform_indices = @transform_3, window_bounds = array<i64: 2, 6>}]} {
    %c0 = arith.constant 0 : index
    %c0_0 = arith.constant 0 : index
    %0 = vector.load %arg1[%c0, %c0_0] : memref<2x12288xf32, #tpu.memory_space<vmem>>, vector<2x12288xf32>
    %c0_1 = arith.constant 0 : index
    %c0_2 = arith.constant 0 : index
    %1 = vector.load %arg2[%c0_1, %c0_2] : memref<6x12288xf32, #tpu.memory_space<vmem>>, vector<6x12288xf32>
    %cst = arith.constant dense<0.000000e+00> : vector<2x6xf32>
    %2 = tpu.matmul %0, %1, %cst {dimension_numbers = #tpu.dot_dimension_numbers<[1], [1], [0], [0], [0, 0, 1, 0], [], []>} : vector<2x12288xf32>, vector<6x12288xf32>, vector<2x6xf32> -> vector<2x6xf32>
    %c0_3 = arith.constant 0 : index
    %c0_4 = arith.constant 0 : index
    %3 = vector.load %arg3[%c0_3, %c0_4] : memref<1x6xf32, #tpu.memory_space<vmem>>, vector<1x6xf32>
    %4 = vector.broadcast %3 : vector<1x6xf32> to vector<2x6xf32>
    %5 = arith.addf %2, %4 : vector<2x6xf32>
    %c0_5 = arith.constant 0 : index
    %c0_6 = arith.constant 0 : index
    %6 = vector.load %arg4[%c0_5, %c0_6] : memref<2x6xf32, #tpu.memory_space<vmem>>, vector<2x6xf32>
    tpu.vector_store %arg4[%c0_5, %c0_6], %5 {strides = array<i32>} : memref<2x6xf32, #tpu.memory_space<vmem>>, vector<2x6xf32>,
    return
  }
  func.func @transform_0(%arg0: i32) -> (i32, i32) {
    %c0_i32 = arith.constant 0 : i32
    %c0_i32_0 = arith.constant 0 : i32
    %c0_i32_1 = arith.constant 0 : i32
    return %c0_i32, %c0_i32_0 : i32, i32
  }
  func.func @transform_1(%arg0: i32) -> (i32, i32) {
    %c0_i32 = arith.constant 0 : i32
    %c0_i32_0 = arith.constant 0 : i32
    %c0_i32_1 = arith.constant 0 : i32
    return %c0_i32, %c0_i32_0 : i32, i32
  }
  func.func @transform_2(%arg0: i32) -> (i32, i32) {
    %c0_i32 = arith.constant 0 : i32
    %c0_i32_0 = arith.constant 0 : i32
    %c0_i32_1 = arith.constant 0 : i32
    return %c0_i32, %c0_i32_0 : i32, i32
  }
  func.func @transform_3(%arg0: i32) -> (i32, i32) {
    %c0_i32 = arith.constant 0 : i32
    %c0_i32_0 = arith.constant 0 : i32
    %c0_i32_1 = arith.constant 0 : i32
    return %c0_i32, %c0_i32_0 : i32, i32
  }
}

</mosaic_0001>

<llo_original>
// kernel: tpu_custom_call.1
$region0: #{tpu_custom_call.1}
  #allocation0 [shape = 'u32[]', space=smem, size = 0x4, offset = 0x4, fixed_abs, tag = 'smem constant byte address 0x4 - core index']
  #allocation1 [shape = 'u32[144,128]{1,0:T(1,128)}', space=vmem, size = 0x12000, scoped, tag = 'internal scratch']
  %s0 = inlined_call_operand.hbm [shape: f32[2,12288], index: 0, kind: input, shape index: {}]
  %s1 = inlined_call_operand.hbm [shape: f32[6,12288], index: 1, kind: input, shape index: {}]
  %s2 = inlined_call_operand.vmem [shape: f32[1,6], index: 2, kind: input, shape index: {}]
  %s3 = inlined_call_operand.hbm [shape: f32[2,6], index: 3, kind: output, shape index: {}]
  %s4 = sld [smem:[#allocation0]]
  $region30: #{tpu_custom_call.1} parent=0
    _
  %s6 = ssub.s32 1, %s4
  %s7 = scalar_select 0, %s6, %s4
  $region1: #{tpu_custom_call.1} parent=0
    #allocation2 [shape = 'u8[98304]{0}', space=vmem, size = 0x18000, scoped, tag = 'input window, operand 0, single buffered']
    #allocation3 [shape = 's32[1]{0}', space=sflag, size = 0x4, scoped, tag = 'scoped memory for tpu_custom_call.1']
    #allocation4 [shape = 's32[1]{0}', space=sflag, size = 0x4, scoped, tag = 'scoped memory for tpu_custom_call.1']
    #allocation5 [shape = 'u8[393216]{0}', space=vmem, size = 0x60000, scoped, tag = 'input window, operand 1, single buffered']
    #allocation6 [shape = 's32[1]{0}', space=sflag, size = 0x4, scoped, tag = 'scoped memory for tpu_custom_call.1']
    #allocation7 [shape = 'u8[1024]{0}', space=vmem, size = 0x400, scoped, tag = 'output window, operand 0, single buffered']
    %8 = vsyncpa [#allocation3], 0
    %9 = vsyncpa [#allocation6], 0
    %10 = vsyncpa [#allocation4], 0
    // Predicated region
    $region2: #{tpu_custom_call.1} parent=1 // pred_check
      _
    $region3: #{tpu_custom_call.1} parent=1 // pred_check_branch
      %12 = sbr.rel (0) target = $region5
    $region4: #{tpu_custom_call.1} parent=1 // pred_region
      %s14 = ssub.s32 3072, 3072
      %15 = vsyncadd [#allocation3], %s14
      %s17 = sshll.u32 [#allocation2], 4
      %s18 = int_to_ptr.vmem [resolvable:$true] %s17
      %20 = dma.hbm_to_vmem [thread:$0]  %s0, 3072, %s18, [#allocation3]
    $region5: #{tpu_custom_call.1} parent=1 // pred_fallthru
      _
    // Predicated region
    $region6: #{tpu_custom_call.1} parent=1 // pred_check
      _
    $region7: #{tpu_custom_call.1} parent=1 // pred_check_branch
      %22 = sbr.rel (0) target = $region9
    $region8: #{tpu_custom_call.1} parent=1 // pred_region
      %s24 = ssub.s32 12288, 12288
      %25 = vsyncadd [#allocation6], %s24
      %s27 = sshll.u32 [#allocation5], 4
      %s28 = int_to_ptr.vmem [resolvable:$true] %s27
      %30 = dma.hbm_to_vmem [thread:$0]  %s1, 12288, %s28, [#allocation6]
    $region9: #{tpu_custom_call.1} parent=1 // pred_fallthru
      _
    // Predicated region
    $region10: #{tpu_custom_call.1} parent=1 // pred_check
      _
    $region11: #{tpu_custom_call.1} parent=1 // pred_check_branch
      %32 = sbr.rel (0) target = $region13
    $region12: #{tpu_custom_call.1} parent=1 // pred_region
      _
    $region13: #{tpu_custom_call.1} parent=1 // pred_fallthru
      _
    // Predicated region
    $region14: #{tpu_custom_call.1} parent=1 // pred_check
      _
    $region15: #{tpu_custom_call.1} parent=1 // pred_check_branch
      %34 = sbr.rel (0) target = $region17
    $region16: #{tpu_custom_call.1} parent=1 // pred_region
      %35 = dma.done [#allocation3], 3072
    $region17: #{tpu_custom_call.1} parent=1 // pred_fallthru
      _
    // Predicated region
    $region18: #{tpu_custom_call.1} parent=1 // pred_check
      _
    $region19: #{tpu_custom_call.1} parent=1 // pred_check_branch
      %37 = sbr.rel (0) target = $region21
    $region20: #{tpu_custom_call.1} parent=1 // pred_region
      %38 = dma.done [#allocation6], 12288
    $region21: #{tpu_custom_call.1} parent=1 // pred_fallthru
      _
    %v39 = vld [vmem:[#allocation2] sm:$0xff]
    %v40 = vld [vmem:[#allocation2 + $0x8] sm:$0xff]
    %v41 = vld [vmem:[#allocation2 + $0x10] sm:$0xff]
    %v42 = vld [vmem:[#allocation2 + $0x18] sm:$0xff]
    %v43 = vld [vmem:[#allocation2 + $0x20] sm:$0xff]
    %v44 = vld [vmem:[#allocation2 + $0x28] sm:$0xff]
    %v45 = vld [vmem:[#allocation2 + $0x30] sm:$0xff]
    %v46 = vld [vmem:[#allocation2 + $0x38] sm:$0xff]
    %v47 = vld [vmem:[#allocation2 + $0x40] sm:$0xff]
    %v48 = vld [vmem:[#allocation2 + $0x48] sm:$0xff]
    %v49 = vld [vmem:[#allocation2 + $0x50] sm:$0xff]
    %v50 = vld [vmem:[#allocation2 + $0x58] sm:$0xff]
    %v51 = vld [vmem:[#allocation2 + $0x60] sm:$0xff]
    %v52 = vld [vmem:[#allocation2 + $0x68] sm:$0xff]
    %v53 = vld [vmem:[#allocation2 + $0x70] sm:$0xff]
    %v54 = vld [vmem:[#allocation2 + $0x78] sm:$0xff]
    %v55 = vld [vmem:[#allocation2 + $0x80] sm:$0xff]
    %v56 = vld [vmem:[#allocation2 + $0x88] sm:$0xff]
    %v57 = vld [vmem:[#allocation2 + $0x90] sm:$0xff]
    %v58 = vld [vmem:[#allocation2 + $0x98] sm:$0xff]
    %v59 = vld [vmem:[#allocation2 + $0xa0] sm:$0xff]
    %v60 = vld [vmem:[#allocation2 + $0xa8] sm:$0xff]
    %v61 = vld [vmem:[#allocation2 + $0xb0] sm:$0xff]
    %v62 = vld [vmem:[#allocation2 + $0xb8] sm:$0xff]
    %v63 = vld [vmem:[#allocation5] sm:$0x3f]
    %v64 = vld [vmem:[#allocation5 + $0x8] sm:$0x3f]
    %v65 = vld [vmem:[#allocation5 + $0x10] sm:$0x3f]
    %v66 = vld [vmem:[#allocation5 + $0x18] sm:$0x3f]
    %v67 = vld [vmem:[#allocation5 + $0x20] sm:$0x3f]
    %v68 = vld [vmem:[#allocation5 + $0x28] sm:$0x3f]
    %v69 = vld [vmem:[#allocation5 + $0x30] sm:$0x3f]
    %v70 = vld [vmem:[#allocation5 + $0x38] sm:$0x3f]
    %v71 = vld [vmem:[#allocation5 + $0x40] sm:$0x3f]
    %v72 = vld [vmem:[#allocation5 + $0x48] sm:$0x3f]
    %v73 = vld [vmem:[#allocation5 + $0x50] sm:$0x3f]
    %v74 = vld [vmem:[#allocation5 + $0x58] sm:$0x3f]
    %v75 = vld [vmem:[#allocation5 + $0x60] sm:$0x3f]
    %v76 = vld [vmem:[#allocation5 + $0x68] sm:$0x3f]
    %v77 = vld [vmem:[#allocation5 + $0x70] sm:$0x3f]
    %v78 = vld [vmem:[#allocation5 + $0x78] sm:$0x3f]
    %v79 = vld [vmem:[#allocation5 + $0x80] sm:$0x3f]
    %v80 = vld [vmem:[#allocation5 + $0x88] sm:$0x3f]
    %v81 = vld [vmem:[#allocation5 + $0x90] sm:$0x3f]
    %v82 = vld [vmem:[#allocation5 + $0x98] sm:$0x3f]
    %v83 = vld [vmem:[#allocation5 + $0xa0] sm:$0x3f]
    %v84 = vld [vmem:[#allocation5 + $0xa8] sm:$0x3f]
    %v85 = vld [vmem:[#allocation5 + $0xb0] sm:$0x3f]
    %v86 = vld [vmem:[#allocation5 + $0xb8] sm:$0x3f]
    %v87 = vld [vmem:[#allocation5 + $0xc0] sm:$0x3f]
    %v88 = vld [vmem:[#allocation5 + $0xc8] sm:$0x3f]
    %v89 = vld [vmem:[#allocation5 + $0xd0] sm:$0x3f]
    %v90 = vld [vmem:[#allocation5 + $0xd8] sm:$0x3f]
    %v91 = vld [vmem:[#allocation5 + $0xe0] sm:$0x3f]
    %v92 = vld [vmem:[#allocation5 + $0xe8] sm:$0x3f]
    %v93 = vld [vmem:[#allocation5 + $0xf0] sm:$0x3f]
    %v94 = vld [vmem:[#allocation5 + $0xf8] sm:$0x3f]
    %v95 = vld [vmem:[#allocation5 + $0x100] sm:$0x3f]
    %v96 = vld [vmem:[#allocation5 + $0x108] sm:$0x3f]
    %v97 = vld [vmem:[#allocation5 + $0x110] sm:$0x3f]
    %v98 = vld [vmem:[#allocation5 + $0x118] sm:$0x3f]
    %v99 = vld [vmem:[#allocation5 + $0x120] sm:$0x3f]
    %v100 = vld [vmem:[#allocation5 + $0x128] sm:$0x3f]
    %v101 = vld [vmem:[#allocation5 + $0x130] sm:$0x3f]
    %v102 = vld [vmem:[#allocation5 + $0x138] sm:$0x3f]
    %v103 = vld [vmem:[#allocation5 + $0x140] sm:$0x3f]
    %v104 = vld [vmem:[#allocation5 + $0x148] sm:$0x3f]
    %v105 = vld [vmem:[#allocation5 + $0x150] sm:$0x3f]
    %v106 = vld [vmem:[#allocation5 + $0x158] sm:$0x3f]
    %v107 = vld [vmem:[#allocation5 + $0x160] sm:$0x3f]
    %v108 = vld [vmem:[#allocation5 + $0x168] sm:$0x3f]
    %v109 = vld [vmem:[#allocation5 + $0x170] sm:$0x3f]
    %v110 = vld [vmem:[#allocation5 + $0x178] sm:$0x3f]
    %v111 = vld [vmem:[#allocation5 + $0x180] sm:$0x3f]
    %v112 = vld [vmem:[#allocation5 + $0x188] sm:$0x3f]
    %v113 = vld [vmem:[#allocation5 + $0x190] sm:$0x3f]
    %v114 = vld [vmem:[#allocation5 + $0x198] sm:$0x3f]
    %v115 = vld [vmem:[#allocation5 + $0x1a0] sm:$0x3f]
    %v116 = vld [vmem:[#allocation5 + $0x1a8] sm:$0x3f]
    %v117 = vld [vmem:[#allocation5 + $0x1b0] sm:$0x3f]
    %v118 = vld [vmem:[#allocation5 + $0x1b8] sm:$0x3f]
    %v119 = vld [vmem:[#allocation5 + $0x1c0] sm:$0x3f]
    %v120 = vld [vmem:[#allocation5 + $0x1c8] sm:$0x3f]
    %v121 = vld [vmem:[#allocation5 + $0x1d0] sm:$0x3f]
    %v122 = vld [vmem:[#allocation5 + $0x1d8] sm:$0x3f]
    %v123 = vld [vmem:[#allocation5 + $0x1e0] sm:$0x3f]
    %v124 = vld [vmem:[#allocation5 + $0x1e8] sm:$0x3f]
    %v125 = vld [vmem:[#allocation5 + $0x1f0] sm:$0x3f]
    %v126 = vld [vmem:[#allocation5 + $0x1f8] sm:$0x3f]
    %v127 = vld [vmem:[#allocation5 + $0x200] sm:$0x3f]
    %v128 = vld [vmem:[#allocation5 + $0x208] sm:$0x3f]
    %v129 = vld [vmem:[#allocation5 + $0x210] sm:$0x3f]
    %v130 = vld [vmem:[#allocation5 + $0x218] sm:$0x3f]
    %v131 = vld [vmem:[#allocation5 + $0x220] sm:$0x3f]
    %v132 = vld [vmem:[#allocation5 + $0x228] sm:$0x3f]
    %v133 = vld [vmem:[#allocation5 + $0x230] sm:$0x3f]
    %v134 = vld [vmem:[#allocation5 + $0x238] sm:$0x3f]
    %v135 = vld [vmem:[#allocation5 + $0x240] sm:$0x3f]
    %v136 = vld [vmem:[#allocation5 + $0x248] sm:$0x3f]
    %v137 = vld [vmem:[#allocation5 + $0x250] sm:$0x3f]
    %v138 = vld [vmem:[#allocation5 + $0x258] sm:$0x3f]
    %v139 = vld [vmem:[#allocation5 + $0x260] sm:$0x3f]
    %v140 = vld [vmem:[#allocation5 + $0x268] sm:$0x3f]
    %v141 = vld [vmem:[#allocation5 + $0x270] sm:$0x3f]
    %v142 = vld [vmem:[#allocation5 + $0x278] sm:$0x3f]
    %v143 = vld [vmem:[#allocation5 + $0x280] sm:$0x3f]
    %v144 = vld [vmem:[#allocation5 + $0x288] sm:$0x3f]
    %v145 = vld [vmem:[#allocation5 + $0x290] sm:$0x3f]
    %v146 = vld [vmem:[#allocation5 + $0x298] sm:$0x3f]
    %v147 = vld [vmem:[#allocation5 + $0x2a0] sm:$0x3f]
    %v148 = vld [vmem:[#allocation5 + $0x2a8] sm:$0x3f]
    %v149 = vld [vmem:[#allocation5 + $0x2b0] sm:$0x3f]
    %v150 = vld [vmem:[#allocation5 + $0x2b8] sm:$0x3f]
    %v151 = vld [vmem:[#allocation5 + $0x2c0] sm:$0x3f]
    %v152 = vld [vmem:[#allocation5 + $0x2c8] sm:$0x3f]
    %v153 = vld [vmem:[#allocation5 + $0x2d0] sm:$0x3f]
    %v154 = vld [vmem:[#allocation5 + $0x2d8] sm:$0x3f]
    %v155 = vld [vmem:[#allocation5 + $0x2e0] sm:$0x3f]
    %v156 = vld [vmem:[#allocation5 + $0x2e8] sm:$0x3f]
    %v157 = vld [vmem:[#allocation5 + $0x2f0] sm:$0x3f]
    %v158 = vld [vmem:[#allocation5 + $0x2f8] sm:$0x3f]
    %v159 = vld [vmem:[%s2] sm:$0x1]
    %v161 = vlaneseq
    %v162 = vshrl.u32 %v161, 7
    %v163 = vsub.s32 0, %v162
    %v164 = vrot.slane %v159, %v163
    %v190 = vcombine.high %v39, %v39
    %v192 = vunpack.c.l.s4 1983009808
    %v193 = vunpack.c.0.s8 %v192
    %v194 = vlaneseq
    %v195 = vshrl.u32 %v194, 7
    %v196 = vsub.s32 %v193, %v195
    %v197 = vrot.slane %v39, %v196
    %v199 = vunpack.c.l.s4 1983009808
    %v200 = vunpack.c.0.s8 %v199
    %v201 = vlaneseq
    %v202 = vshrl.u32 %v201, 7
    %v203 = vsub.s32 %v200, %v202
    %v204 = vrot.slane %v190, %v203
    %v205 = vcombine.high %v197, %v197
    %v206 = vcombine.high %v204, %v204
    %v207 = vcombine.high %v40, %v40
    %v209 = vunpack.c.l.s4 1983009808
    %v210 = vunpack.c.0.s8 %v209
    %v211 = vlaneseq
    %v212 = vshrl.u32 %v211, 7
    %v213 = vsub.s32 %v210, %v212
    %v214 = vrot.slane %v40, %v213
    %v216 = vunpack.c.l.s4 1983009808
    %v217 = vunpack.c.0.s8 %v216
    %v218 = vlaneseq
    %v219 = vshrl.u32 %v218, 7
    %v220 = vsub.s32 %v217, %v219
    %v221 = vrot.slane %v207, %v220
    %v222 = vcombine.high %v214, %v214
    %v223 = vcombine.high %v221, %v221
    %v224 = vcombine.high %v41, %v41
    %v226 = vunpack.c.l.s4 1983009808
    %v227 = vunpack.c.0.s8 %v226
    %v228 = vlaneseq
    %v229 = vshrl.u32 %v228, 7
    %v230 = vsub.s32 %v227, %v229
    %v231 = vrot.slane %v41, %v230
    %v233 = vunpack.c.l.s4 1983009808
    %v234 = vunpack.c.0.s8 %v233
    %v235 = vlaneseq
    %v236 = vshrl.u32 %v235, 7
    %v237 = vsub.s32 %v234, %v236
    %v238 = vrot.slane %v224, %v237
    %v239 = vcombine.high %v231, %v231
    %v240 = vcombine.high %v238, %v238
    %v241 = vcombine.high %v42, %v42
    %v243 = vunpack.c.l.s4 1983009808
    %v244 = vunpack.c.0.s8 %v243
    %v245 = vlaneseq
    %v246 = vshrl.u32 %v245, 7
    %v247 = vsub.s32 %v244, %v246
    %v248 = vrot.slane %v42, %v247
    %v250 = vunpack.c.l.s4 1983009808
    %v251 = vunpack.c.0.s8 %v250
    %v252 = vlaneseq
    %v253 = vshrl.u32 %v252, 7
    %v254 = vsub.s32 %v251, %v253
    %v255 = vrot.slane %v241, %v254
    %v256 = vcombine.high %v248, %v248
    %v257 = vcombine.high %v255, %v255
    %v258 = vcombine.high %v43, %v43
    %v260 = vunpack.c.l.s4 1983009808
    %v261 = vunpack.c.0.s8 %v260
    %v262 = vlaneseq
    %v263 = vshrl.u32 %v262, 7
    %v264 = vsub.s32 %v261, %v263
    %v265 = vrot.slane %v43, %v264
    %v267 = vunpack.c.l.s4 1983009808
    %v268 = vunpack.c.0.s8 %v267
    %v269 = vlaneseq
    %v270 = vshrl.u32 %v269, 7
    %v271 = vsub.s32 %v268, %v270
    %v272 = vrot.slane %v258, %v271
    %v273 = vcombine.high %v265, %v265
    %v274 = vcombine.high %v272, %v272
    %v275 = vcombine.high %v44, %v44
    %v277 = vunpack.c.l.s4 1983009808
    %v278 = vunpack.c.0.s8 %v277
    %v279 = vlaneseq
    %v280 = vshrl.u32 %v279, 7
    %v281 = vsub.s32 %v278, %v280
    %v282 = vrot.slane %v44, %v281
    %v284 = vunpack.c.l.s4 1983009808
    %v285 = vunpack.c.0.s8 %v284
    %v286 = vlaneseq
    %v287 = vshrl.u32 %v286, 7
    %v288 = vsub.s32 %v285, %v287
    %v289 = vrot.slane %v275, %v288
    %v290 = vcombine.high %v282, %v282
    %v291 = vcombine.high %v289, %v289
    %v292 = vcombine.high %v45, %v45
    %v294 = vunpack.c.l.s4 1983009808
    %v295 = vunpack.c.0.s8 %v294
    %v296 = vlaneseq
    %v297 = vshrl.u32 %v296, 7
    %v298 = vsub.s32 %v295, %v297
    %v299 = vrot.slane %v45, %v298
    %v301 = vunpack.c.l.s4 1983009808
    %v302 = vunpack.c.0.s8 %v301
    %v303 = vlaneseq
    %v304 = vshrl.u32 %v303, 7
    %v305 = vsub.s32 %v302, %v304
    %v306 = vrot.slane %v292, %v305
    %v307 = vcombine.high %v299, %v299
    %v308 = vcombine.high %v306, %v306
    %v309 = vcombine.high %v46, %v46
    %v311 = vunpack.c.l.s4 1983009808
    %v312 = vunpack.c.0.s8 %v311
    %v313 = vlaneseq
    %v314 = vshrl.u32 %v313, 7
    %v315 = vsub.s32 %v312, %v314
    %v316 = vrot.slane %v46, %v315
    %v318 = vunpack.c.l.s4 1983009808
    %v319 = vunpack.c.0.s8 %v318
    %v320 = vlaneseq
    %v321 = vshrl.u32 %v320, 7
    %v322 = vsub.s32 %v319, %v321
    %v323 = vrot.slane %v309, %v322
    %v324 = vcombine.high %v316, %v316
    %v325 = vcombine.high %v323, %v323
    %v326 = vcombine.high %v47, %v47
    %v328 = vunpack.c.l.s4 1983009808
    %v329 = vunpack.c.0.s8 %v328
    %v330 = vlaneseq
    %v331 = vshrl.u32 %v330, 7
    %v332 = vsub.s32 %v329, %v331
    %v333 = vrot.slane %v47, %v332
    %v335 = vunpack.c.l.s4 1983009808
    %v336 = vunpack.c.0.s8 %v335
    %v337 = vlaneseq
    %v338 = vshrl.u32 %v337, 7
    %v339 = vsub.s32 %v336, %v338
    %v340 = vrot.slane %v326, %v339
    %v341 = vcombine.high %v333, %v333
    %v342 = vcombine.high %v340, %v340
    %v343 = vcombine.high %v48, %v48
    %v345 = vunpack.c.l.s4 1983009808
    %v346 = vunpack.c.0.s8 %v345
    %v347 = vlaneseq
    %v348 = vshrl.u32 %v347, 7
    %v349 = vsub.s32 %v346, %v348
    %v350 = vrot.slane %v48, %v349
    %v352 = vunpack.c.l.s4 1983009808
    %v353 = vunpack.c.0.s8 %v352
    %v354 = vlaneseq
    %v355 = vshrl.u32 %v354, 7
    %v356 = vsub.s32 %v353, %v355
    %v357 = vrot.slane %v343, %v356
    %v358 = vcombine.high %v350, %v350
    %v359 = vcombine.high %v357, %v357
    %v360 = vcombine.high %v49, %v49
    %v362 = vunpack.c.l.s4 1983009808
    %v363 = vunpack.c.0.s8 %v362
    %v364 = vlaneseq
    %v365 = vshrl.u32 %v364, 7
    %v366 = vsub.s32 %v363, %v365
    %v367 = vrot.slane %v49, %v366
    %v369 = vunpack.c.l.s4 1983009808
    %v370 = vunpack.c.0.s8 %v369
    %v371 = vlaneseq
    %v372 = vshrl.u32 %v371, 7
    %v373 = vsub.s32 %v370, %v372
    %v374 = vrot.slane %v360, %v373
    %v375 = vcombine.high %v367, %v367
    %v376 = vcombine.high %v374, %v374
    %v377 = vcombine.high %v50, %v50
    %v379 = vunpack.c.l.s4 1983009808
    %v380 = vunpack.c.0.s8 %v379
    %v381 = vlaneseq
    %v382 = vshrl.u32 %v381, 7
    %v383 = vsub.s32 %v380, %v382
    %v384 = vrot.slane %v50, %v383
    %v386 = vunpack.c.l.s4 1983009808
    %v387 = vunpack.c.0.s8 %v386
    %v388 = vlaneseq
    %v389 = vshrl.u32 %v388, 7
    %v390 = vsub.s32 %v387, %v389
    %v391 = vrot.slane %v377, %v390
    %v392 = vcombine.high %v384, %v384
    %v393 = vcombine.high %v391, %v391
    %v394 = vcombine.high %v51, %v51
    %v396 = vunpack.c.l.s4 1983009808
    %v397 = vunpack.c.0.s8 %v396
    %v398 = vlaneseq
    %v399 = vshrl.u32 %v398, 7
    %v400 = vsub.s32 %v397, %v399
    %v401 = vrot.slane %v51, %v400
    %v403 = vunpack.c.l.s4 1983009808
    %v404 = vunpack.c.0.s8 %v403
    %v405 = vlaneseq
    %v406 = vshrl.u32 %v405, 7
    %v407 = vsub.s32 %v404, %v406
    %v408 = vrot.slane %v394, %v407
    %v409 = vcombine.high %v401, %v401
    %v410 = vcombine.high %v408, %v408
    %v411 = vcombine.high %v52, %v52
    %v413 = vunpack.c.l.s4 1983009808
    %v414 = vunpack.c.0.s8 %v413
    %v415 = vlaneseq
    %v416 = vshrl.u32 %v415, 7
    %v417 = vsub.s32 %v414, %v416
    %v418 = vrot.slane %v52, %v417
    %v420 = vunpack.c.l.s4 1983009808
    %v421 = vunpack.c.0.s8 %v420
    %v422 = vlaneseq
    %v423 = vshrl.u32 %v422, 7
    %v424 = vsub.s32 %v421, %v423
    %v425 = vrot.slane %v411, %v424
    %v426 = vcombine.high %v418, %v418
    %v427 = vcombine.high %v425, %v425
    %v428 = vcombine.high %v53, %v53
    %v430 = vunpack.c.l.s4 1983009808
    %v431 = vunpack.c.0.s8 %v430
    %v432 = vlaneseq
    %v433 = vshrl.u32 %v432, 7
    %v434 = vsub.s32 %v431, %v433
    %v435 = vrot.slane %v53, %v434
    %v437 = vunpack.c.l.s4 1983009808
    %v438 = vunpack.c.0.s8 %v437
    %v439 = vlaneseq
    %v440 = vshrl.u32 %v439, 7
    %v441 = vsub.s32 %v438, %v440
    %v442 = vrot.slane %v428, %v441
    %v443 = vcombine.high %v435, %v435
    %v444 = vcombine.high %v442, %v442
    %v445 = vcombine.high %v54, %v54
    %v447 = vunpack.c.l.s4 1983009808
    %v448 = vunpack.c.0.s8 %v447
    %v449 = vlaneseq
    %v450 = vshrl.u32 %v449, 7
    %v451 = vsub.s32 %v448, %v450
    %v452 = vrot.slane %v54, %v451
    %v454 = vunpack.c.l.s4 1983009808
    %v455 = vunpack.c.0.s8 %v454
    %v456 = vlaneseq
    %v457 = vshrl.u32 %v456, 7
    %v458 = vsub.s32 %v455, %v457
    %v459 = vrot.slane %v445, %v458
    %v460 = vcombine.high %v452, %v452
    %v461 = vcombine.high %v459, %v459
    %v462 = vcombine.high %v55, %v55
    %v464 = vunpack.c.l.s4 1983009808
    %v465 = vunpack.c.0.s8 %v464
    %v466 = vlaneseq
    %v467 = vshrl.u32 %v466, 7
    %v468 = vsub.s32 %v465, %v467
    %v469 = vrot.slane %v55, %v468
    %v471 = vunpack.c.l.s4 1983009808
    %v472 = vunpack.c.0.s8 %v471
    %v473 = vlaneseq
    %v474 = vshrl.u32 %v473, 7
    %v475 = vsub.s32 %v472, %v474
    %v476 = vrot.slane %v462, %v475
    %v477 = vcombine.high %v469, %v469
    %v478 = vcombine.high %v476, %v476
    %v479 = vcombine.high %v56, %v56
    %v481 = vunpack.c.l.s4 1983009808
    %v482 = vunpack.c.0.s8 %v481
    %v483 = vlaneseq
    %v484 = vshrl.u32 %v483, 7
    %v485 = vsub.s32 %v482, %v484
    %v486 = vrot.slane %v56, %v485
    %v488 = vunpack.c.l.s4 1983009808
    %v489 = vunpack.c.0.s8 %v488
    %v490 = vlaneseq
    %v491 = vshrl.u32 %v490, 7
    %v492 = vsub.s32 %v489, %v491
    %v493 = vrot.slane %v479, %v492
    %v494 = vcombine.high %v486, %v486
    %v495 = vcombine.high %v493, %v493
    %v496 = vcombine.high %v57, %v57
    %v498 = vunpack.c.l.s4 1983009808
    %v499 = vunpack.c.0.s8 %v498
    %v500 = vlaneseq
    %v501 = vshrl.u32 %v500, 7
    %v502 = vsub.s32 %v499, %v501
    %v503 = vrot.slane %v57, %v502
    %v505 = vunpack.c.l.s4 1983009808
    %v506 = vunpack.c.0.s8 %v505
    %v507 = vlaneseq
    %v508 = vshrl.u32 %v507, 7
    %v509 = vsub.s32 %v506, %v508
    %v510 = vrot.slane %v496, %v509
    %v511 = vcombine.high %v503, %v503
    %v512 = vcombine.high %v510, %v510
    %v513 = vcombine.high %v58, %v58
    %v515 = vunpack.c.l.s4 1983009808
    %v516 = vunpack.c.0.s8 %v515
    %v517 = vlaneseq
    %v518 = vshrl.u32 %v517, 7
    %v519 = vsub.s32 %v516, %v518
    %v520 = vrot.slane %v58, %v519
    %v522 = vunpack.c.l.s4 1983009808
    %v523 = vunpack.c.0.s8 %v522
    %v524 = vlaneseq
    %v525 = vshrl.u32 %v524, 7
    %v526 = vsub.s32 %v523, %v525
    %v527 = vrot.slane %v513, %v526
    %v528 = vcombine.high %v520, %v520
    %v529 = vcombine.high %v527, %v527
    %v530 = vcombine.high %v59, %v59
    %v532 = vunpack.c.l.s4 1983009808
    %v533 = vunpack.c.0.s8 %v532
    %v534 = vlaneseq
    %v535 = vshrl.u32 %v534, 7
    %v536 = vsub.s32 %v533, %v535
    %v537 = vrot.slane %v59, %v536
    %v539 = vunpack.c.l.s4 1983009808
    %v540 = vunpack.c.0.s8 %v539
    %v541 = vlaneseq
    %v542 = vshrl.u32 %v541, 7
    %v543 = vsub.s32 %v540, %v542
    %v544 = vrot.slane %v530, %v543
    %v545 = vcombine.high %v537, %v537
    %v546 = vcombine.high %v544, %v544
    %v547 = vcombine.high %v60, %v60
    %v549 = vunpack.c.l.s4 1983009808
    %v550 = vunpack.c.0.s8 %v549
    %v551 = vlaneseq
    %v552 = vshrl.u32 %v551, 7
    %v553 = vsub.s32 %v550, %v552
    %v554 = vrot.slane %v60, %v553
    %v556 = vunpack.c.l.s4 1983009808
    %v557 = vunpack.c.0.s8 %v556
    %v558 = vlaneseq
    %v559 = vshrl.u32 %v558, 7
    %v560 = vsub.s32 %v557, %v559
    %v561 = vrot.slane %v547, %v560
    %v562 = vcombine.high %v554, %v554
    %v563 = vcombine.high %v561, %v561
    %v564 = vcombine.high %v61, %v61
    %v566 = vunpack.c.l.s4 1983009808
    %v567 = vunpack.c.0.s8 %v566
    %v568 = vlaneseq
    %v569 = vshrl.u32 %v568, 7
    %v570 = vsub.s32 %v567, %v569
    %v571 = vrot.slane %v61, %v570
    %v573 = vunpack.c.l.s4 1983009808
    %v574 = vunpack.c.0.s8 %v573
    %v575 = vlaneseq
    %v576 = vshrl.u32 %v575, 7
    %v577 = vsub.s32 %v574, %v576
    %v578 = vrot.slane %v564, %v577
    %v579 = vcombine.high %v571, %v571
    %v580 = vcombine.high %v578, %v578
    %v581 = vcombine.high %v62, %v62
    %v583 = vunpack.c.l.s4 1983009808
    %v584 = vunpack.c.0.s8 %v583
    %v585 = vlaneseq
    %v586 = vshrl.u32 %v585, 7
    %v587 = vsub.s32 %v584, %v586
    %v588 = vrot.slane %v62, %v587
    %v590 = vunpack.c.l.s4 1983009808
    %v591 = vunpack.c.0.s8 %v590
    %v592 = vlaneseq
    %v593 = vshrl.u32 %v592, 7
    %v594 = vsub.s32 %v591, %v593
    %v595 = vrot.slane %v581, %v594
    %v596 = vcombine.high %v588, %v588
    %v597 = vcombine.high %v595, %v595
    %694 = vmatprep.subr.mxu0 0.0
    %695 = vmatpush1.xpose.msra.mxu0 0.0
    %696 = vmatprep.subr.mxu0 0.0
    %697 = vmatpush1.xpose.msra.mxu0 0.0
    %698 = vmatprep.subr.mxu0 0.0
    %699 = vmatpush1.xpose.msra.mxu0 0.0
    %700 = vmatprep.subr.mxu0 0.0
    %701 = vmatpush1.xpose.msra.mxu0 0.0
    %702 = vmatprep.subr.mxu0 0.0
    %703 = vmatpush1.xpose.msra.mxu0 0.0
    %704 = vmatprep.subr.mxu0 0.0
    %705 = vmatpush1.xpose.msra.mxu0 0.0
    %706 = vmatprep.subr.mxu0 0.0
    %707 = vmatpush1.xpose.msra.mxu0 0.0
    %708 = vmatprep.subr.mxu0 0.0
    %709 = vmatpush1.xpose.msra.mxu0 0.0
    %710 = vmatprep.subr.mxu0 0.0
    %711 = vmatpush1.xpose.msra.mxu0 0.0
    %712 = vmatprep.subr.mxu0 0.0
    %713 = vmatpush1.xpose.msra.mxu0 0.0
    %714 = vmatprep.subr.mxu0 0.0
    %715 = vmatpush1.xpose.msra.mxu0 0.0
    %716 = vmatprep.subr.mxu0 0.0
    %717 = vmatpush1.xpose.msra.mxu0 0.0
    %718 = vmatprep.subr.mxu0 0.0
    %719 = vmatpush1.xpose.msra.mxu0 0.0
    %720 = vmatprep.subr.mxu0 0.0
    %721 = vmatpush1.xpose.msra.mxu0 0.0
    %722 = vmatprep.subr.mxu0 0.0
    %723 = vmatpush1.xpose.msra.mxu0 0.0
    %724 = vmatprep.subr.mxu0 %v64
    %725 = vmatpush1.xpose.msra.mxu0 %v63
    %726 = vmatprep.subr.mxu0 0.0
    %727 = vmatpush2.xpose.msra.mxu0 0.0
    %728 = vmatprep.subr.mxu0 0.0
    %729 = vmatpush2.xpose.msra.mxu0 0.0
    %730 = vmatprep.subr.mxu0 0.0
    %731 = vmatpush2.xpose.msra.mxu0 0.0
    %732 = vmatprep.subr.mxu0 0.0
    %733 = vmatpush2.xpose.msra.mxu0 0.0
    %734 = vmatprep.subr.mxu0 0.0
    %735 = vmatpush2.xpose.msra.mxu0 0.0
    %736 = vmatprep.subr.mxu0 0.0
    %737 = vmatpush2.xpose.msra.mxu0 0.0
    %738 = vmatprep.subr.mxu0 0.0
    %739 = vmatpush2.xpose.msra.mxu0 0.0
    %740 = vmatprep.subr.mxu0 0.0
    %741 = vmatpush2.xpose.msra.mxu0 0.0
    %742 = vmatprep.subr.mxu0 0.0
    %743 = vmatpush2.xpose.msra.mxu0 0.0
    %744 = vmatprep.subr.mxu0 0.0
    %745 = vmatpush2.xpose.msra.mxu0 0.0
    %746 = vmatprep.subr.mxu0 0.0
    %747 = vmatpush2.xpose.msra.mxu0 0.0
    %748 = vmatprep.subr.mxu0 0.0
    %749 = vmatpush2.xpose.msra.mxu0 0.0
    %750 = vmatprep.subr.mxu0 0.0
    %751 = vmatpush2.xpose.msra.mxu0 0.0
    %752 = vmatprep.subr.mxu0 0.0
    %753 = vmatpush2.xpose.msra.mxu0 0.0
    %754 = vmatprep.subr.mxu0 0.0
    %755 = vmatpush2.xpose.msra.mxu0 0.0
    %756 = vmatprep.subr.mxu0 0.0
    %757 = vmatpush2.xpose.msra.mxu0 0.0
    %758 = vmatprep.mubr.f32.mxu0 %v205
    %759 = vmatmul.mubr.f32.gmra.mxu0 %v197
    %v760 = vpop.f32.mrf.mxu0
    %v761 = vadd.f32 %v164, %v760
    %v762 = vpop.f32.mrf.mxu0
    %763 = vdwg.mxu0
    %764 = vmatprep.subr.mxu0 0.0
    %765 = vmatpush1.xpose.msra.mxu0 0.0
    %766 = vmatprep.subr.mxu0 0.0
    %767 = vmatpush1.xpose.msra.mxu0 0.0
    %768 = vmatprep.subr.mxu0 0.0
    %769 = vmatpush1.xpose.msra.mxu0 0.0
    %770 = vmatprep.subr.mxu0 0.0
    %771 = vmatpush1.xpose.msra.mxu0 0.0
    %772 = vmatprep.subr.mxu0 0.0
    %773 = vmatpush1.xpose.msra.mxu0 0.0
    %774 = vmatprep.subr.mxu0 0.0
    %775 = vmatpush1.xpose.msra.mxu0 0.0
    %776 = vmatprep.subr.mxu0 0.0
    %777 = vmatpush1.xpose.msra.mxu0 0.0
    %778 = vmatprep.subr.mxu0 0.0
    %779 = vmatpush1.xpose.msra.mxu0 0.0
    %780 = vmatprep.subr.mxu0 0.0
    %781 = vmatpush1.xpose.msra.mxu0 0.0
    %782 = vmatprep.subr.mxu0 0.0
    %783 = vmatpush1.xpose.msra.mxu0 0.0
    %784 = vmatprep.subr.mxu0 0.0
    %785 = vmatpush1.xpose.msra.mxu0 0.0
    %786 = vmatprep.subr.mxu0 0.0
    %787 = vmatpush1.xpose.msra.mxu0 0.0
    %788 = vmatprep.subr.mxu0 0.0
    %789 = vmatpush1.xpose.msra.mxu0 0.0
    %790 = vmatprep.subr.mxu0 0.0
    %791 = vmatpush1.xpose.msra.mxu0 0.0
    %792 = vmatprep.subr.mxu0 0.0
    %793 = vmatpush1.xpose.msra.mxu0 0.0
    %794 = vmatprep.subr.mxu0 %v66
    %795 = vmatpush1.xpose.msra.mxu0 %v65
    %796 = vmatprep.subr.mxu0 0.0
    %797 = vmatpush2.xpose.msra.mxu0 0.0
    %798 = vmatprep.subr.mxu0 0.0
    %799 = vmatpush2.xpose.msra.mxu0 0.0
    %800 = vmatprep.subr.mxu0 0.0
    %801 = vmatpush2.xpose.msra.mxu0 0.0
    %802 = vmatprep.subr.mxu0 0.0
    %803 = vmatpush2.xpose.msra.mxu0 0.0
    %804 = vmatprep.subr.mxu0 0.0
    %805 = vmatpush2.xpose.msra.mxu0 0.0
    %806 = vmatprep.subr.mxu0 0.0
    %807 = vmatpush2.xpose.msra.mxu0 0.0
    %808 = vmatprep.subr.mxu0 0.0
    %809 = vmatpush2.xpose.msra.mxu0 0.0
    %810 = vmatprep.subr.mxu0 0.0
    %811 = vmatpush2.xpose.msra.mxu0 0.0
    %812 = vmatprep.subr.mxu0 0.0
    %813 = vmatpush2.xpose.msra.mxu0 0.0
    %814 = vmatprep.subr.mxu0 0.0
    %815 = vmatpush2.xpose.msra.mxu0 0.0
    %816 = vmatprep.subr.mxu0 0.0
    %817 = vmatpush2.xpose.msra.mxu0 0.0
    %818 = vmatprep.subr.mxu0 0.0
    %819 = vmatpush2.xpose.msra.mxu0 0.0
    %820 = vmatprep.subr.mxu0 0.0
    %821 = vmatpush2.xpose.msra.mxu0 0.0
    %822 = vmatprep.subr.mxu0 0.0
    %823 = vmatpush2.xpose.msra.mxu0 0.0
    %824 = vmatprep.subr.mxu0 0.0
    %825 = vmatpush2.xpose.msra.mxu0 0.0
    %826 = vmatprep.subr.mxu0 0.0
    %827 = vmatpush2.xpose.msra.mxu0 0.0
    %828 = vmatprep.mubr.f32.mxu0 %v206
    %829 = vmatmul.mubr.f32.gmra.mxu0 %v204
    %v830 = vpop.f32.mrf.mxu0
    %v831 = vadd.f32 %v761, %v830
    %v832 = vpop.f32.mrf.mxu0
    %833 = vdwg.mxu0
    %834 = vmatprep.subr.mxu0 0.0
    %835 = vmatpush1.xpose.msra.mxu0 0.0
    %836 = vmatprep.subr.mxu0 0.0
    %837 = vmatpush1.xpose.msra.mxu0 0.0
    %838 = vmatprep.subr.mxu0 0.0
    %839 = vmatpush1.xpose.msra.mxu0 0.0
    %840 = vmatprep.subr.mxu0 0.0
    %841 = vmatpush1.xpose.msra.mxu0 0.0
    %842 = vmatprep.subr.mxu0 0.0
    %843 = vmatpush1.xpose.msra.mxu0 0.0
    %844 = vmatprep.subr.mxu0 0.0
    %845 = vmatpush1.xpose.msra.mxu0 0.0
    %846 = vmatprep.subr.mxu0 0.0
    %847 = vmatpush1.xpose.msra.mxu0 0.0
    %848 = vmatprep.subr.mxu0 0.0
    %849 = vmatpush1.xpose.msra.mxu0 0.0
    %850 = vmatprep.subr.mxu0 0.0
    %851 = vmatpush1.xpose.msra.mxu0 0.0
    %852 = vmatprep.subr.mxu0 0.0
    %853 = vmatpush1.xpose.msra.mxu0 0.0
    %854 = vmatprep.subr.mxu0 0.0
    %855 = vmatpush1.xpose.msra.mxu0 0.0
    %856 = vmatprep.subr.mxu0 0.0
    %857 = vmatpush1.xpose.msra.mxu0 0.0
    %858 = vmatprep.subr.mxu0 0.0
    %859 = vmatpush1.xpose.msra.mxu0 0.0
    %860 = vmatprep.subr.mxu0 0.0
    %861 = vmatpush1.xpose.msra.mxu0 0.0
    %862 = vmatprep.subr.mxu0 0.0
    %863 = vmatpush1.xpose.msra.mxu0 0.0
    %864 = vmatprep.subr.mxu0 %v68
    %865 = vmatpush1.xpose.msra.mxu0 %v67
    %866 = vmatprep.subr.mxu0 0.0
    %867 = vmatpush2.xpose.msra.mxu0 0.0
    %868 = vmatprep.subr.mxu0 0.0
    %869 = vmatpush2.xpose.msra.mxu0 0.0
    %870 = vmatprep.subr.mxu0 0.0
    %871 = vmatpush2.xpose.msra.mxu0 0.0
    %872 = vmatprep.subr.mxu0 0.0
    %873 = vmatpush2.xpose.msra.mxu0 0.0
    %874 = vmatprep.subr.mxu0 0.0
    %875 = vmatpush2.xpose.msra.mxu0 0.0
    %876 = vmatprep.subr.mxu0 0.0
    %877 = vmatpush2.xpose.msra.mxu0 0.0
    %878 = vmatprep.subr.mxu0 0.0
    %879 = vmatpush2.xpose.msra.mxu0 0.0
    %880 = vmatprep.subr.mxu0 0.0
    %881 = vmatpush2.xpose.msra.mxu0 0.0
    %882 = vmatprep.subr.mxu0 0.0
    %883 = vmatpush2.xpose.msra.mxu0 0.0
    %884 = vmatprep.subr.mxu0 0.0
    %885 = vmatpush2.xpose.msra.mxu0 0.0
    %886 = vmatprep.subr.mxu0 0.0
    %887 = vmatpush2.xpose.msra.mxu0 0.0
    %888 = vmatprep.subr.mxu0 0.0
    %889 = vmatpush2.xpose.msra.mxu0 0.0
    %890 = vmatprep.subr.mxu0 0.0
    %891 = vmatpush2.xpose.msra.mxu0 0.0
    %892 = vmatprep.subr.mxu0 0.0
    %893 = vmatpush2.xpose.msra.mxu0 0.0
    %894 = vmatprep.subr.mxu0 0.0
    %895 = vmatpush2.xpose.msra.mxu0 0.0
    %896 = vmatprep.subr.mxu0 0.0
    %897 = vmatpush2.xpose.msra.mxu0 0.0
    %898 = vmatprep.mubr.f32.mxu0 %v222
    %899 = vmatmul.mubr.f32.gmra.mxu0 %v214
    %v900 = vpop.f32.mrf.mxu0
    %v901 = vadd.f32 %v831, %v900
    %v902 = vpop.f32.mrf.mxu0
    %903 = vdwg.mxu0
    %904 = vmatprep.subr.mxu0 0.0
    %905 = vmatpush1.xpose.msra.mxu0 0.0
    %906 = vmatprep.subr.mxu0 0.0
    %907 = vmatpush1.xpose.msra.mxu0 0.0
    %908 = vmatprep.subr.mxu0 0.0
    %909 = vmatpush1.xpose.msra.mxu0 0.0
    %910 = vmatprep.subr.mxu0 0.0
    %911 = vmatpush1.xpose.msra.mxu0 0.0
    %912 = vmatprep.subr.mxu0 0.0
    %913 = vmatpush1.xpose.msra.mxu0 0.0
    %914 = vmatprep.subr.mxu0 0.0
    %915 = vmatpush1.xpose.msra.mxu0 0.0
    %916 = vmatprep.subr.mxu0 0.0
    %917 = vmatpush1.xpose.msra.mxu0 0.0
    %918 = vmatprep.subr.mxu0 0.0
    %919 = vmatpush1.xpose.msra.mxu0 0.0
    %920 = vmatprep.subr.mxu0 0.0
    %921 = vmatpush1.xpose.msra.mxu0 0.0
    %922 = vmatprep.subr.mxu0 0.0
    %923 = vmatpush1.xpose.msra.mxu0 0.0
    %924 = vmatprep.subr.mxu0 0.0
    %925 = vmatpush1.xpose.msra.mxu0 0.0
    %926 = vmatprep.subr.mxu0 0.0
    %927 = vmatpush1.xpose.msra.mxu0 0.0
    %928 = vmatprep.subr.mxu0 0.0
    %929 = vmatpush1.xpose.msra.mxu0 0.0
    %930 = vmatprep.subr.mxu0 0.0
    %931 = vmatpush1.xpose.msra.mxu0 0.0
    %932 = vmatprep.subr.mxu0 0.0
    %933 = vmatpush1.xpose.msra.mxu0 0.0
    %934 = vmatprep.subr.mxu0 %v70
    %935 = vmatpush1.xpose.msra.mxu0 %v69
    %936 = vmatprep.subr.mxu0 0.0
    %937 = vmatpush2.xpose.msra.mxu0 0.0
    %938 = vmatprep.subr.mxu0 0.0
    %939 = vmatpush2.xpose.msra.mxu0 0.0
    %940 = vmatprep.subr.mxu0 0.0
    %941 = vmatpush2.xpose.msra.mxu0 0.0
    %942 = vmatprep.subr.mxu0 0.0
    %943 = vmatpush2.xpose.msra.mxu0 0.0
    %944 = vmatprep.subr.mxu0 0.0
    %945 = vmatpush2.xpose.msra.mxu0 0.0
    %946 = vmatprep.subr.mxu0 0.0
    %947 = vmatpush2.xpose.msra.mxu0 0.0
    %948 = vmatprep.subr.mxu0 0.0
    %949 = vmatpush2.xpose.msra.mxu0 0.0
    %950 = vmatprep.subr.mxu0 0.0
    %951 = vmatpush2.xpose.msra.mxu0 0.0
    %952 = vmatprep.subr.mxu0 0.0
    %953 = vmatpush2.xpose.msra.mxu0 0.0
    %954 = vmatprep.subr.mxu0 0.0
    %955 = vmatpush2.xpose.msra.mxu0 0.0
    %956 = vmatprep.subr.mxu0 0.0
    %957 = vmatpush2.xpose.msra.mxu0 0.0
    %958 = vmatprep.subr.mxu0 0.0
    %959 = vmatpush2.xpose.msra.mxu0 0.0
    %960 = vmatprep.subr.mxu0 0.0
    %961 = vmatpush2.xpose.msra.mxu0 0.0
    %962 = vmatprep.subr.mxu0 0.0
    %963 = vmatpush2.xpose.msra.mxu0 0.0
    %964 = vmatprep.subr.mxu0 0.0
    %965 = vmatpush2.xpose.msra.mxu0 0.0
    %966 = vmatprep.subr.mxu0 0.0
    %967 = vmatpush2.xpose.msra.mxu0 0.0
    %968 = vmatprep.mubr.f32.mxu0 %v223
    %969 = vmatmul.mubr.f32.gmra.mxu0 %v221
    %v970 = vpop.f32.mrf.mxu0
    %v971 = vadd.f32 %v901, %v970
    %v972 = vpop.f32.mrf.mxu0
    %973 = vdwg.mxu0
    %974 = vmatprep.subr.mxu0 0.0
    %975 = vmatpush1.xpose.msra.mxu0 0.0
    %976 = vmatprep.subr.mxu0 0.0
    %977 = vmatpush1.xpose.msra.mxu0 0.0
    %978 = vmatprep.subr.mxu0 0.0
    %979 = vmatpush1.xpose.msra.mxu0 0.0
    %980 = vmatprep.subr.mxu0 0.0
    %981 = vmatpush1.xpose.msra.mxu0 0.0
    %982 = vmatprep.subr.mxu0 0.0
    %983 = vmatpush1.xpose.msra.mxu0 0.0
    %984 = vmatprep.subr.mxu0 0.0
    %985 = vmatpush1.xpose.msra.mxu0 0.0
    %986 = vmatprep.subr.mxu0 0.0
    %987 = vmatpush1.xpose.msra.mxu0 0.0
    %988 = vmatprep.subr.mxu0 0.0
    %989 = vmatpush1.xpose.msra.mxu0 0.0
    %990 = vmatprep.subr.mxu0 0.0
    %991 = vmatpush1.xpose.msra.mxu0 0.0
    %992 = vmatprep.subr.mxu0 0.0
    %993 = vmatpush1.xpose.msra.mxu0 0.0
    %994 = vmatprep.subr.mxu0 0.0
    %995 = vmatpush1.xpose.msra.mxu0 0.0
    %996 = vmatprep.subr.mxu0 0.0
    %997 = vmatpush1.xpose.msra.mxu0 0.0
    %998 = vmatprep.subr.mxu0 0.0
    %999 = vmatpush1.xpose.msra.mxu0 0.0
    %1000 = vmatprep.subr.mxu0 0.0
    %1001 = vmatpush1.xpose.msra.mxu0 0.0
    %1002 = vmatprep.subr.mxu0 0.0
    %1003 = vmatpush1.xpose.msra.mxu0 0.0
    %1004 = vmatprep.subr.mxu0 %v72
    %1005 = vmatpush1.xpose.msra.mxu0 %v71
    %1006 = vmatprep.subr.mxu0 0.0
    %1007 = vmatpush2.xpose.msra.mxu0 0.0
    %1008 = vmatprep.subr.mxu0 0.0
    %1009 = vmatpush2.xpose.msra.mxu0 0.0
    %1010 = vmatprep.subr.mxu0 0.0
    %1011 = vmatpush2.xpose.msra.mxu0 0.0
    %1012 = vmatprep.subr.mxu0 0.0
    %1013 = vmatpush2.xpose.msra.mxu0 0.0
    %1014 = vmatprep.subr.mxu0 0.0
    %1015 = vmatpush2.xpose.msra.mxu0 0.0
    %1016 = vmatprep.subr.mxu0 0.0
    %1017 = vmatpush2.xpose.msra.mxu0 0.0
    %1018 = vmatprep.subr.mxu0 0.0
    %1019 = vmatpush2.xpose.msra.mxu0 0.0
    %1020 = vmatprep.subr.mxu0 0.0
    %1021 = vmatpush2.xpose.msra.mxu0 0.0
    %1022 = vmatprep.subr.mxu0 0.0
    %1023 = vmatpush2.xpose.msra.mxu0 0.0
    %1024 = vmatprep.subr.mxu0 0.0
    %1025 = vmatpush2.xpose.msra.mxu0 0.0
    %1026 = vmatprep.subr.mxu0 0.0
    %1027 = vmatpush2.xpose.msra.mxu0 0.0
    %1028 = vmatprep.subr.mxu0 0.0
    %1029 = vmatpush2.xpose.msra.mxu0 0.0
    %1030 = vmatprep.subr.mxu0 0.0
    %1031 = vmatpush2.xpose.msra.mxu0 0.0
    %1032 = vmatprep.subr.mxu0 0.0
    %1033 = vmatpush2.xpose.msra.mxu0 0.0
    %1034 = vmatprep.subr.mxu0 0.0
    %1035 = vmatpush2.xpose.msra.mxu0 0.0
    %1036 = vmatprep.subr.mxu0 0.0
    %1037 = vmatpush2.xpose.msra.mxu0 0.0
    %1038 = vmatprep.mubr.f32.mxu0 %v239
    %1039 = vmatmul.mubr.f32.gmra.mxu0 %v231
    %v1040 = vpop.f32.mrf.mxu0
    %v1041 = vadd.f32 %v971, %v1040
    %v1042 = vpop.f32.mrf.mxu0
    %1043 = vdwg.mxu0
    %1044 = vmatprep.subr.mxu0 0.0
    %1045 = vmatpush1.xpose.msra.mxu0 0.0
    %1046 = vmatprep.subr.mxu0 0.0
    %1047 = vmatpush1.xpose.msra.mxu0 0.0
    %1048 = vmatprep.subr.mxu0 0.0
    %1049 = vmatpush1.xpose.msra.mxu0 0.0
    %1050 = vmatprep.subr.mxu0 0.0
    %1051 = vmatpush1.xpose.msra.mxu0 0.0
    %1052 = vmatprep.subr.mxu0 0.0
    %1053 = vmatpush1.xpose.msra.mxu0 0.0
    %1054 = vmatprep.subr.mxu0 0.0
    %1055 = vmatpush1.xpose.msra.mxu0 0.0
    %1056 = vmatprep.subr.mxu0 0.0
    %1057 = vmatpush1.xpose.msra.mxu0 0.0
    %1058 = vmatprep.subr.mxu0 0.0
    %1059 = vmatpush1.xpose.msra.mxu0 0.0
    %1060 = vmatprep.subr.mxu0 0.0
    %1061 = vmatpush1.xpose.msra.mxu0 0.0
    %1062 = vmatprep.subr.mxu0 0.0
    %1063 = vmatpush1.xpose.msra.mxu0 0.0
    %1064 = vmatprep.subr.mxu0 0.0
    %1065 = vmatpush1.xpose.msra.mxu0 0.0
    %1066 = vmatprep.subr.mxu0 0.0
    %1067 = vmatpush1.xpose.msra.mxu0 0.0
    %1068 = vmatprep.subr.mxu0 0.0
    %1069 = vmatpush1.xpose.msra.mxu0 0.0
    %1070 = vmatprep.subr.mxu0 0.0
    %1071 = vmatpush1.xpose.msra.mxu0 0.0
    %1072 = vmatprep.subr.mxu0 0.0
    %1073 = vmatpush1.xpose.msra.mxu0 0.0
    %1074 = vmatprep.subr.mxu0 %v74
    %1075 = vmatpush1.xpose.msra.mxu0 %v73
    %1076 = vmatprep.subr.mxu0 0.0
    %1077 = vmatpush2.xpose.msra.mxu0 0.0
    %1078 = vmatprep.subr.mxu0 0.0
    %1079 = vmatpush2.xpose.msra.mxu0 0.0
    %1080 = vmatprep.subr.mxu0 0.0
    %1081 = vmatpush2.xpose.msra.mxu0 0.0
    %1082 = vmatprep.subr.mxu0 0.0
    %1083 = vmatpush2.xpose.msra.mxu0 0.0
    %1084 = vmatprep.subr.mxu0 0.0
    %1085 = vmatpush2.xpose.msra.mxu0 0.0
    %1086 = vmatprep.subr.mxu0 0.0
    %1087 = vmatpush2.xpose.msra.mxu0 0.0
    %1088 = vmatprep.subr.mxu0 0.0
    %1089 = vmatpush2.xpose.msra.mxu0 0.0
    %1090 = vmatprep.subr.mxu0 0.0
    %1091 = vmatpush2.xpose.msra.mxu0 0.0
    %1092 = vmatprep.subr.mxu0 0.0
    %1093 = vmatpush2.xpose.msra.mxu0 0.0
    %1094 = vmatprep.subr.mxu0 0.0
    %1095 = vmatpush2.xpose.msra.mxu0 0.0
    %1096 = vmatprep.subr.mxu0 0.0
    %1097 = vmatpush2.xpose.msra.mxu0 0.0
    %1098 = vmatprep.subr.mxu0 0.0
    %1099 = vmatpush2.xpose.msra.mxu0 0.0
    %1100 = vmatprep.subr.mxu0 0.0
    %1101 = vmatpush2.xpose.msra.mxu0 0.0
    %1102 = vmatprep.subr.mxu0 0.0
    %1103 = vmatpush2.xpose.msra.mxu0 0.0
    %1104 = vmatprep.subr.mxu0 0.0
    %1105 = vmatpush2.xpose.msra.mxu0 0.0
    %1106 = vmatprep.subr.mxu0 0.0
    %1107 = vmatpush2.xpose.msra.mxu0 0.0
    %1108 = vmatprep.mubr.f32.mxu0 %v240
    %1109 = vmatmul.mubr.f32.gmra.mxu0 %v238
    %v1110 = vpop.f32.mrf.mxu0
    %v1111 = vadd.f32 %v1041, %v1110
    %v1112 = vpop.f32.mrf.mxu0
    %1113 = vdwg.mxu0
    %1114 = vmatprep.subr.mxu0 0.0
    %1115 = vmatpush1.xpose.msra.mxu0 0.0
    %1116 = vmatprep.subr.mxu0 0.0
    %1117 = vmatpush1.xpose.msra.mxu0 0.0
    %1118 = vmatprep.subr.mxu0 0.0
    %1119 = vmatpush1.xpose.msra.mxu0 0.0
    %1120 = vmatprep.subr.mxu0 0.0
    %1121 = vmatpush1.xpose.msra.mxu0 0.0
    %1122 = vmatprep.subr.mxu0 0.0
    %1123 = vmatpush1.xpose.msra.mxu0 0.0
    %1124 = vmatprep.subr.mxu0 0.0
    %1125 = vmatpush1.xpose.msra.mxu0 0.0
    %1126 = vmatprep.subr.mxu0 0.0
    %1127 = vmatpush1.xpose.msra.mxu0 0.0
    %1128 = vmatprep.subr.mxu0 0.0
    %1129 = vmatpush1.xpose.msra.mxu0 0.0
    %1130 = vmatprep.subr.mxu0 0.0
    %1131 = vmatpush1.xpose.msra.mxu0 0.0
    %1132 = vmatprep.subr.mxu0 0.0
    %1133 = vmatpush1.xpose.msra.mxu0 0.0
    %1134 = vmatprep.subr.mxu0 0.0
    %1135 = vmatpush1.xpose.msra.mxu0 0.0
    %1136 = vmatprep.subr.mxu0 0.0
    %1137 = vmatpush1.xpose.msra.mxu0 0.0
    %1138 = vmatprep.subr.mxu0 0.0
    %1139 = vmatpush1.xpose.msra.mxu0 0.0
    %1140 = vmatprep.subr.mxu0 0.0
    %1141 = vmatpush1.xpose.msra.mxu0 0.0
    %1142 = vmatprep.subr.mxu0 0.0
    %1143 = vmatpush1.xpose.msra.mxu0 0.0
    %1144 = vmatprep.subr.mxu0 %v76
    %1145 = vmatpush1.xpose.msra.mxu0 %v75
    %1146 = vmatprep.subr.mxu0 0.0
    %1147 = vmatpush2.xpose.msra.mxu0 0.0
    %1148 = vmatprep.subr.mxu0 0.0
    %1149 = vmatpush2.xpose.msra.mxu0 0.0
    %1150 = vmatprep.subr.mxu0 0.0
    %1151 = vmatpush2.xpose.msra.mxu0 0.0
    %1152 = vmatprep.subr.mxu0 0.0
    %1153 = vmatpush2.xpose.msra.mxu0 0.0
    %1154 = vmatprep.subr.mxu0 0.0
    %1155 = vmatpush2.xpose.msra.mxu0 0.0
    %1156 = vmatprep.subr.mxu0 0.0
    %1157 = vmatpush2.xpose.msra.mxu0 0.0
    %1158 = vmatprep.subr.mxu0 0.0
    %1159 = vmatpush2.xpose.msra.mxu0 0.0
    %1160 = vmatprep.subr.mxu0 0.0
    %1161 = vmatpush2.xpose.msra.mxu0 0.0
    %1162 = vmatprep.subr.mxu0 0.0
    %1163 = vmatpush2.xpose.msra.mxu0 0.0
    %1164 = vmatprep.subr.mxu0 0.0
    %1165 = vmatpush2.xpose.msra.mxu0 0.0
    %1166 = vmatprep.subr.mxu0 0.0
    %1167 = vmatpush2.xpose.msra.mxu0 0.0
    %1168 = vmatprep.subr.mxu0 0.0
    %1169 = vmatpush2.xpose.msra.mxu0 0.0
    %1170 = vmatprep.subr.mxu0 0.0
    %1171 = vmatpush2.xpose.msra.mxu0 0.0
    %1172 = vmatprep.subr.mxu0 0.0
    %1173 = vmatpush2.xpose.msra.mxu0 0.0
    %1174 = vmatprep.subr.mxu0 0.0
    %1175 = vmatpush2.xpose.msra.mxu0 0.0
    %1176 = vmatprep.subr.mxu0 0.0
    %1177 = vmatpush2.xpose.msra.mxu0 0.0
    %1178 = vmatprep.mubr.f32.mxu0 %v256
    %1179 = vmatmul.mubr.f32.gmra.mxu0 %v248
    %v1180 = vpop.f32.mrf.mxu0
    %v1181 = vadd.f32 %v1111, %v1180
    %v1182 = vpop.f32.mrf.mxu0
    %1183 = vdwg.mxu0
    %1184 = vmatprep.subr.mxu0 0.0
    %1185 = vmatpush1.xpose.msra.mxu0 0.0
    %1186 = vmatprep.subr.mxu0 0.0
    %1187 = vmatpush1.xpose.msra.mxu0 0.0
    %1188 = vmatprep.subr.mxu0 0.0
    %1189 = vmatpush1.xpose.msra.mxu0 0.0
    %1190 = vmatprep.subr.mxu0 0.0
    %1191 = vmatpush1.xpose.msra.mxu0 0.0
    %1192 = vmatprep.subr.mxu0 0.0
    %1193 = vmatpush1.xpose.msra.mxu0 0.0
    %1194 = vmatprep.subr.mxu0 0.0
    %1195 = vmatpush1.xpose.msra.mxu0 0.0
    %1196 = vmatprep.subr.mxu0 0.0
    %1197 = vmatpush1.xpose.msra.mxu0 0.0
    %1198 = vmatprep.subr.mxu0 0.0
    %1199 = vmatpush1.xpose.msra.mxu0 0.0
    %1200 = vmatprep.subr.mxu0 0.0
    %1201 = vmatpush1.xpose.msra.mxu0 0.0
    %1202 = vmatprep.subr.mxu0 0.0
    %1203 = vmatpush1.xpose.msra.mxu0 0.0
    %1204 = vmatprep.subr.mxu0 0.0
    %1205 = vmatpush1.xpose.msra.mxu0 0.0
    %1206 = vmatprep.subr.mxu0 0.0
    %1207 = vmatpush1.xpose.msra.mxu0 0.0
    %1208 = vmatprep.subr.mxu0 0.0
    %1209 = vmatpush1.xpose.msra.mxu0 0.0
    %1210 = vmatprep.subr.mxu0 0.0
    %1211 = vmatpush1.xpose.msra.mxu0 0.0
    %1212 = vmatprep.subr.mxu0 0.0
    %1213 = vmatpush1.xpose.msra.mxu0 0.0
    %1214 = vmatprep.subr.mxu0 %v78
    %1215 = vmatpush1.xpose.msra.mxu0 %v77
    %1216 = vmatprep.subr.mxu0 0.0
    %1217 = vmatpush2.xpose.msra.mxu0 0.0
    %1218 = vmatprep.subr.mxu0 0.0
    %1219 = vmatpush2.xpose.msra.mxu0 0.0
    %1220 = vmatprep.subr.mxu0 0.0
    %1221 = vmatpush2.xpose.msra.mxu0 0.0
    %1222 = vmatprep.subr.mxu0 0.0
    %1223 = vmatpush2.xpose.msra.mxu0 0.0
    %1224 = vmatprep.subr.mxu0 0.0
    %1225 = vmatpush2.xpose.msra.mxu0 0.0
    %1226 = vmatprep.subr.mxu0 0.0
    %1227 = vmatpush2.xpose.msra.mxu0 0.0
    %1228 = vmatprep.subr.mxu0 0.0
    %1229 = vmatpush2.xpose.msra.mxu0 0.0
    %1230 = vmatprep.subr.mxu0 0.0
    %1231 = vmatpush2.xpose.msra.mxu0 0.0
    %1232 = vmatprep.subr.mxu0 0.0
    %1233 = vmatpush2.xpose.msra.mxu0 0.0
    %1234 = vmatprep.subr.mxu0 0.0
    %1235 = vmatpush2.xpose.msra.mxu0 0.0
    %1236 = vmatprep.subr.mxu0 0.0
    %1237 = vmatpush2.xpose.msra.mxu0 0.0
    %1238 = vmatprep.subr.mxu0 0.0
    %1239 = vmatpush2.xpose.msra.mxu0 0.0
    %1240 = vmatprep.subr.mxu0 0.0
    %1241 = vmatpush2.xpose.msra.mxu0 0.0
    %1242 = vmatprep.subr.mxu0 0.0
    %1243 = vmatpush2.xpose.msra.mxu0 0.0
    %1244 = vmatprep.subr.mxu0 0.0
    %1245 = vmatpush2.xpose.msra.mxu0 0.0
    %1246 = vmatprep.subr.mxu0 0.0
    %1247 = vmatpush2.xpose.msra.mxu0 0.0
    %1248 = vmatprep.mubr.f32.mxu0 %v257
    %1249 = vmatmul.mubr.f32.gmra.mxu0 %v255
    %v1250 = vpop.f32.mrf.mxu0
    %v1251 = vadd.f32 %v1181, %v1250
    %v1252 = vpop.f32.mrf.mxu0
    %1253 = vdwg.mxu0
    %1254 = vmatprep.subr.mxu0 0.0
    %1255 = vmatpush1.xpose.msra.mxu0 0.0
    %1256 = vmatprep.subr.mxu0 0.0
    %1257 = vmatpush1.xpose.msra.mxu0 0.0
    %1258 = vmatprep.subr.mxu0 0.0
    %1259 = vmatpush1.xpose.msra.mxu0 0.0
    %1260 = vmatprep.subr.mxu0 0.0
    %1261 = vmatpush1.xpose.msra.mxu0 0.0
    %1262 = vmatprep.subr.mxu0 0.0
    %1263 = vmatpush1.xpose.msra.mxu0 0.0
    %1264 = vmatprep.subr.mxu0 0.0
    %1265 = vmatpush1.xpose.msra.mxu0 0.0
    %1266 = vmatprep.subr.mxu0 0.0
    %1267 = vmatpush1.xpose.msra.mxu0 0.0
    %1268 = vmatprep.subr.mxu0 0.0
    %1269 = vmatpush1.xpose.msra.mxu0 0.0
    %1270 = vmatprep.subr.mxu0 0.0
    %1271 = vmatpush1.xpose.msra.mxu0 0.0
    %1272 = vmatprep.subr.mxu0 0.0
    %1273 = vmatpush1.xpose.msra.mxu0 0.0
    %1274 = vmatprep.subr.mxu0 0.0
    %1275 = vmatpush1.xpose.msra.mxu0 0.0
    %1276 = vmatprep.subr.mxu0 0.0
    %1277 = vmatpush1.xpose.msra.mxu0 0.0
    %1278 = vmatprep.subr.mxu0 0.0
    %1279 = vmatpush1.xpose.msra.mxu0 0.0
    %1280 = vmatprep.subr.mxu0 0.0
    %1281 = vmatpush1.xpose.msra.mxu0 0.0
    %1282 = vmatprep.subr.mxu0 0.0
    %1283 = vmatpush1.xpose.msra.mxu0 0.0
    %1284 = vmatprep.subr.mxu0 %v80
    %1285 = vmatpush1.xpose.msra.mxu0 %v79
    %1286 = vmatprep.subr.mxu0 0.0
    %1287 = vmatpush2.xpose.msra.mxu0 0.0
    %1288 = vmatprep.subr.mxu0 0.0
    %1289 = vmatpush2.xpose.msra.mxu0 0.0
    %1290 = vmatprep.subr.mxu0 0.0
    %1291 = vmatpush2.xpose.msra.mxu0 0.0
    %1292 = vmatprep.subr.mxu0 0.0
    %1293 = vmatpush2.xpose.msra.mxu0 0.0
    %1294 = vmatprep.subr.mxu0 0.0
    %1295 = vmatpush2.xpose.msra.mxu0 0.0
    %1296 = vmatprep.subr.mxu0 0.0
    %1297 = vmatpush2.xpose.msra.mxu0 0.0
    %1298 = vmatprep.subr.mxu0 0.0
    %1299 = vmatpush2.xpose.msra.mxu0 0.0
    %1300 = vmatprep.subr.mxu0 0.0
    %1301 = vmatpush2.xpose.msra.mxu0 0.0
    %1302 = vmatprep.subr.mxu0 0.0
    %1303 = vmatpush2.xpose.msra.mxu0 0.0
    %1304 = vmatprep.subr.mxu0 0.0
    %1305 = vmatpush2.xpose.msra.mxu0 0.0
    %1306 = vmatprep.subr.mxu0 0.0
    %1307 = vmatpush2.xpose.msra.mxu0 0.0
    %1308 = vmatprep.subr.mxu0 0.0
    %1309 = vmatpush2.xpose.msra.mxu0 0.0
    %1310 = vmatprep.subr.mxu0 0.0
    %1311 = vmatpush2.xpose.msra.mxu0 0.0
    %1312 = vmatprep.subr.mxu0 0.0
    %1313 = vmatpush2.xpose.msra.mxu0 0.0
    %1314 = vmatprep.subr.mxu0 0.0
    %1315 = vmatpush2.xpose.msra.mxu0 0.0
    %1316 = vmatprep.subr.mxu0 0.0
    %1317 = vmatpush2.xpose.msra.mxu0 0.0
    %1318 = vmatprep.mubr.f32.mxu0 %v273
    %1319 = vmatmul.mubr.f32.gmra.mxu0 %v265
    %v1320 = vpop.f32.mrf.mxu0
    %v1321 = vadd.f32 %v1251, %v1320
    %v1322 = vpop.f32.mrf.mxu0
    %1323 = vdwg.mxu0
    %1324 = vmatprep.subr.mxu0 0.0
    %1325 = vmatpush1.xpose.msra.mxu0 0.0
    %1326 = vmatprep.subr.mxu0 0.0
    %1327 = vmatpush1.xpose.msra.mxu0 0.0
    %1328 = vmatprep.subr.mxu0 0.0
    %1329 = vmatpush1.xpose.msra.mxu0 0.0
    %1330 = vmatprep.subr.mxu0 0.0
    %1331 = vmatpush1.xpose.msra.mxu0 0.0
    %1332 = vmatprep.subr.mxu0 0.0
    %1333 = vmatpush1.xpose.msra.mxu0 0.0
    %1334 = vmatprep.subr.mxu0 0.0
    %1335 = vmatpush1.xpose.msra.mxu0 0.0
    %1336 = vmatprep.subr.mxu0 0.0
    %1337 = vmatpush1.xpose.msra.mxu0 0.0
    %1338 = vmatprep.subr.mxu0 0.0
    %1339 = vmatpush1.xpose.msra.mxu0 0.0
    %1340 = vmatprep.subr.mxu0 0.0
    %1341 = vmatpush1.xpose.msra.mxu0 0.0
    %1342 = vmatprep.subr.mxu0 0.0
    %1343 = vmatpush1.xpose.msra.mxu0 0.0
    %1344 = vmatprep.subr.mxu0 0.0
    %1345 = vmatpush1.xpose.msra.mxu0 0.0
    %1346 = vmatprep.subr.mxu0 0.0
    %1347 = vmatpush1.xpose.msra.mxu0 0.0
    %1348 = vmatprep.subr.mxu0 0.0
    %1349 = vmatpush1.xpose.msra.mxu0 0.0
    %1350 = vmatprep.subr.mxu0 0.0
    %1351 = vmatpush1.xpose.msra.mxu0 0.0
    %1352 = vmatprep.subr.mxu0 0.0
    %1353 = vmatpush1.xpose.msra.mxu0 0.0
    %1354 = vmatprep.subr.mxu0 %v82
    %1355 = vmatpush1.xpose.msra.mxu0 %v81
    %1356 = vmatprep.subr.mxu0 0.0
    %1357 = vmatpush2.xpose.msra.mxu0 0.0
    %1358 = vmatprep.subr.mxu0 0.0
    %1359 = vmatpush2.xpose.msra.mxu0 0.0
    %1360 = vmatprep.subr.mxu0 0.0
    %1361 = vmatpush2.xpose.msra.mxu0 0.0
    %1362 = vmatprep.subr.mxu0 0.0
    %1363 = vmatpush2.xpose.msra.mxu0 0.0
    %1364 = vmatprep.subr.mxu0 0.0
    %1365 = vmatpush2.xpose.msra.mxu0 0.0
    %1366 = vmatprep.subr.mxu0 0.0
    %1367 = vmatpush2.xpose.msra.mxu0 0.0
    %1368 = vmatprep.subr.mxu0 0.0
    %1369 = vmatpush2.xpose.msra.mxu0 0.0
    %1370 = vmatprep.subr.mxu0 0.0
    %1371 = vmatpush2.xpose.msra.mxu0 0.0
    %1372 = vmatprep.subr.mxu0 0.0
    %1373 = vmatpush2.xpose.msra.mxu0 0.0
    %1374 = vmatprep.subr.mxu0 0.0
    %1375 = vmatpush2.xpose.msra.mxu0 0.0
    %1376 = vmatprep.subr.mxu0 0.0
    %1377 = vmatpush2.xpose.msra.mxu0 0.0
    %1378 = vmatprep.subr.mxu0 0.0
    %1379 = vmatpush2.xpose.msra.mxu0 0.0
    %1380 = vmatprep.subr.mxu0 0.0
    %1381 = vmatpush2.xpose.msra.mxu0 0.0
    %1382 = vmatprep.subr.mxu0 0.0
    %1383 = vmatpush2.xpose.msra.mxu0 0.0
    %1384 = vmatprep.subr.mxu0 0.0
    %1385 = vmatpush2.xpose.msra.mxu0 0.0
    %1386 = vmatprep.subr.mxu0 0.0
    %1387 = vmatpush2.xpose.msra.mxu0 0.0
    %1388 = vmatprep.mubr.f32.mxu0 %v274
    %1389 = vmatmul.mubr.f32.gmra.mxu0 %v272
    %v1390 = vpop.f32.mrf.mxu0
    %v1391 = vadd.f32 %v1321, %v1390
    %v1392 = vpop.f32.mrf.mxu0
    %1393 = vdwg.mxu0
    %1394 = vmatprep.subr.mxu0 0.0
    %1395 = vmatpush1.xpose.msra.mxu0 0.0
    %1396 = vmatprep.subr.mxu0 0.0
    %1397 = vmatpush1.xpose.msra.mxu0 0.0
    %1398 = vmatprep.subr.mxu0 0.0
    %1399 = vmatpush1.xpose.msra.mxu0 0.0
    %1400 = vmatprep.subr.mxu0 0.0
    %1401 = vmatpush1.xpose.msra.mxu0 0.0
    %1402 = vmatprep.subr.mxu0 0.0
    %1403 = vmatpush1.xpose.msra.mxu0 0.0
    %1404 = vmatprep.subr.mxu0 0.0
    %1405 = vmatpush1.xpose.msra.mxu0 0.0
    %1406 = vmatprep.subr.mxu0 0.0
    %1407 = vmatpush1.xpose.msra.mxu0 0.0
    %1408 = vmatprep.subr.mxu0 0.0
    %1409 = vmatpush1.xpose.msra.mxu0 0.0
    %1410 = vmatprep.subr.mxu0 0.0
    %1411 = vmatpush1.xpose.msra.mxu0 0.0
    %1412 = vmatprep.subr.mxu0 0.0
    %1413 = vmatpush1.xpose.msra.mxu0 0.0
    %1414 = vmatprep.subr.mxu0 0.0
    %1415 = vmatpush1.xpose.msra.mxu0 0.0
    %1416 = vmatprep.subr.mxu0 0.0
    %1417 = vmatpush1.xpose.msra.mxu0 0.0
    %1418 = vmatprep.subr.mxu0 0.0
    %1419 = vmatpush1.xpose.msra.mxu0 0.0
    %1420 = vmatprep.subr.mxu0 0.0
    %1421 = vmatpush1.xpose.msra.mxu0 0.0
    %1422 = vmatprep.subr.mxu0 0.0
    %1423 = vmatpush1.xpose.msra.mxu0 0.0
    %1424 = vmatprep.subr.mxu0 %v84
    %1425 = vmatpush1.xpose.msra.mxu0 %v83
    %1426 = vmatprep.subr.mxu0 0.0
    %1427 = vmatpush2.xpose.msra.mxu0 0.0
    %1428 = vmatprep.subr.mxu0 0.0
    %1429 = vmatpush2.xpose.msra.mxu0 0.0
    %1430 = vmatprep.subr.mxu0 0.0
    %1431 = vmatpush2.xpose.msra.mxu0 0.0
    %1432 = vmatprep.subr.mxu0 0.0
    %1433 = vmatpush2.xpose.msra.mxu0 0.0
    %1434 = vmatprep.subr.mxu0 0.0
    %1435 = vmatpush2.xpose.msra.mxu0 0.0
    %1436 = vmatprep.subr.mxu0 0.0
    %1437 = vmatpush2.xpose.msra.mxu0 0.0
    %1438 = vmatprep.subr.mxu0 0.0
    %1439 = vmatpush2.xpose.msra.mxu0 0.0
    %1440 = vmatprep.subr.mxu0 0.0
    %1441 = vmatpush2.xpose.msra.mxu0 0.0
    %1442 = vmatprep.subr.mxu0 0.0
    %1443 = vmatpush2.xpose.msra.mxu0 0.0
    %1444 = vmatprep.subr.mxu0 0.0
    %1445 = vmatpush2.xpose.msra.mxu0 0.0
    %1446 = vmatprep.subr.mxu0 0.0
    %1447 = vmatpush2.xpose.msra.mxu0 0.0
    %1448 = vmatprep.subr.mxu0 0.0
    %1449 = vmatpush2.xpose.msra.mxu0 0.0
    %1450 = vmatprep.subr.mxu0 0.0
    %1451 = vmatpush2.xpose.msra.mxu0 0.0
    %1452 = vmatprep.subr.mxu0 0.0
    %1453 = vmatpush2.xpose.msra.mxu0 0.0
    %1454 = vmatprep.subr.mxu0 0.0
    %1455 = vmatpush2.xpose.msra.mxu0 0.0
    %1456 = vmatprep.subr.mxu0 0.0
    %1457 = vmatpush2.xpose.msra.mxu0 0.0
    %1458 = vmatprep.mubr.f32.mxu0 %v290
    %1459 = vmatmul.mubr.f32.gmra.mxu0 %v282
    %v1460 = vpop.f32.mrf.mxu0
    %v1461 = vadd.f32 %v1391, %v1460
    %v1462 = vpop.f32.mrf.mxu0
    %1463 = vdwg.mxu0
    %1464 = vmatprep.subr.mxu0 0.0
    %1465 = vmatpush1.xpose.msra.mxu0 0.0
    %1466 = vmatprep.subr.mxu0 0.0
    %1467 = vmatpush1.xpose.msra.mxu0 0.0
    %1468 = vmatprep.subr.mxu0 0.0
    %1469 = vmatpush1.xpose.msra.mxu0 0.0
    %1470 = vmatprep.subr.mxu0 0.0
    %1471 = vmatpush1.xpose.msra.mxu0 0.0
    %1472 = vmatprep.subr.mxu0 0.0
    %1473 = vmatpush1.xpose.msra.mxu0 0.0
    %1474 = vmatprep.subr.mxu0 0.0
    %1475 = vmatpush1.xpose.msra.mxu0 0.0
    %1476 = vmatprep.subr.mxu0 0.0
    %1477 = vmatpush1.xpose.msra.mxu0 0.0
    %1478 = vmatprep.subr.mxu0 0.0
    %1479 = vmatpush1.xpose.msra.mxu0 0.0
    %1480 = vmatprep.subr.mxu0 0.0
    %1481 = vmatpush1.xpose.msra.mxu0 0.0
    %1482 = vmatprep.subr.mxu0 0.0
    %1483 = vmatpush1.xpose.msra.mxu0 0.0
    %1484 = vmatprep.subr.mxu0 0.0
    %1485 = vmatpush1.xpose.msra.mxu0 0.0
    %1486 = vmatprep.subr.mxu0 0.0
    %1487 = vmatpush1.xpose.msra.mxu0 0.0
    %1488 = vmatprep.subr.mxu0 0.0
    %1489 = vmatpush1.xpose.msra.mxu0 0.0
    %1490 = vmatprep.subr.mxu0 0.0
    %1491 = vmatpush1.xpose.msra.mxu0 0.0
    %1492 = vmatprep.subr.mxu0 0.0
    %1493 = vmatpush1.xpose.msra.mxu0 0.0
    %1494 = vmatprep.subr.mxu0 %v86
    %1495 = vmatpush1.xpose.msra.mxu0 %v85
    %1496 = vmatprep.subr.mxu0 0.0
    %1497 = vmatpush2.xpose.msra.mxu0 0.0
    %1498 = vmatprep.subr.mxu0 0.0
    %1499 = vmatpush2.xpose.msra.mxu0 0.0
    %1500 = vmatprep.subr.mxu0 0.0
    %1501 = vmatpush2.xpose.msra.mxu0 0.0
    %1502 = vmatprep.subr.mxu0 0.0
    %1503 = vmatpush2.xpose.msra.mxu0 0.0
    %1504 = vmatprep.subr.mxu0 0.0
    %1505 = vmatpush2.xpose.msra.mxu0 0.0
    %1506 = vmatprep.subr.mxu0 0.0
    %1507 = vmatpush2.xpose.msra.mxu0 0.0
    %1508 = vmatprep.subr.mxu0 0.0
    %1509 = vmatpush2.xpose.msra.mxu0 0.0
    %1510 = vmatprep.subr.mxu0 0.0
    %1511 = vmatpush2.xpose.msra.mxu0 0.0
    %1512 = vmatprep.subr.mxu0 0.0
    %1513 = vmatpush2.xpose.msra.mxu0 0.0
    %1514 = vmatprep.subr.mxu0 0.0
    %1515 = vmatpush2.xpose.msra.mxu0 0.0
    %1516 = vmatprep.subr.mxu0 0.0
    %1517 = vmatpush2.xpose.msra.mxu0 0.0
    %1518 = vmatprep.subr.mxu0 0.0
    %1519 = vmatpush2.xpose.msra.mxu0 0.0
    %1520 = vmatprep.subr.mxu0 0.0
    %1521 = vmatpush2.xpose.msra.mxu0 0.0
    %1522 = vmatprep.subr.mxu0 0.0
    %1523 = vmatpush2.xpose.msra.mxu0 0.0
    %1524 = vmatprep.subr.mxu0 0.0
    %1525 = vmatpush2.xpose.msra.mxu0 0.0
    %1526 = vmatprep.subr.mxu0 0.0
    %1527 = vmatpush2.xpose.msra.mxu0 0.0
    %1528 = vmatprep.mubr.f32.mxu0 %v291
    %1529 = vmatmul.mubr.f32.gmra.mxu0 %v289
    %v1530 = vpop.f32.mrf.mxu0
    %v1531 = vadd.f32 %v1461, %v1530
    %v1532 = vpop.f32.mrf.mxu0
    %1533 = vdwg.mxu0
    %1534 = vmatprep.subr.mxu0 0.0
    %1535 = vmatpush1.xpose.msra.mxu0 0.0
    %1536 = vmatprep.subr.mxu0 0.0
    %1537 = vmatpush1.xpose.msra.mxu0 0.0
    %1538 = vmatprep.subr.mxu0 0.0
    %1539 = vmatpush1.xpose.msra.mxu0 0.0
    %1540 = vmatprep.subr.mxu0 0.0
    %1541 = vmatpush1.xpose.msra.mxu0 0.0
    %1542 = vmatprep.subr.mxu0 0.0
    %1543 = vmatpush1.xpose.msra.mxu0 0.0
    %1544 = vmatprep.subr.mxu0 0.0
    %1545 = vmatpush1.xpose.msra.mxu0 0.0
    %1546 = vmatprep.subr.mxu0 0.0
    %1547 = vmatpush1.xpose.msra.mxu0 0.0
    %1548 = vmatprep.subr.mxu0 0.0
    %1549 = vmatpush1.xpose.msra.mxu0 0.0
    %1550 = vmatprep.subr.mxu0 0.0
    %1551 = vmatpush1.xpose.msra.mxu0 0.0
    %1552 = vmatprep.subr.mxu0 0.0
    %1553 = vmatpush1.xpose.msra.mxu0 0.0
    %1554 = vmatprep.subr.mxu0 0.0
    %1555 = vmatpush1.xpose.msra.mxu0 0.0
    %1556 = vmatprep.subr.mxu0 0.0
    %1557 = vmatpush1.xpose.msra.mxu0 0.0
    %1558 = vmatprep.subr.mxu0 0.0
    %1559 = vmatpush1.xpose.msra.mxu0 0.0
    %1560 = vmatprep.subr.mxu0 0.0
    %1561 = vmatpush1.xpose.msra.mxu0 0.0
    %1562 = vmatprep.subr.mxu0 0.0
    %1563 = vmatpush1.xpose.msra.mxu0 0.0
    %1564 = vmatprep.subr.mxu0 %v88
    %1565 = vmatpush1.xpose.msra.mxu0 %v87
    %1566 = vmatprep.subr.mxu0 0.0
    %1567 = vmatpush2.xpose.msra.mxu0 0.0
    %1568 = vmatprep.subr.mxu0 0.0
    %1569 = vmatpush2.xpose.msra.mxu0 0.0
    %1570 = vmatprep.subr.mxu0 0.0
    %1571 = vmatpush2.xpose.msra.mxu0 0.0
    %1572 = vmatprep.subr.mxu0 0.0
    %1573 = vmatpush2.xpose.msra.mxu0 0.0
    %1574 = vmatprep.subr.mxu0 0.0
    %1575 = vmatpush2.xpose.msra.mxu0 0.0
    %1576 = vmatprep.subr.mxu0 0.0
    %1577 = vmatpush2.xpose.msra.mxu0 0.0
    %1578 = vmatprep.subr.mxu0 0.0
    %1579 = vmatpush2.xpose.msra.mxu0 0.0
    %1580 = vmatprep.subr.mxu0 0.0
    %1581 = vmatpush2.xpose.msra.mxu0 0.0
    %1582 = vmatprep.subr.mxu0 0.0
    %1583 = vmatpush2.xpose.msra.mxu0 0.0
    %1584 = vmatprep.subr.mxu0 0.0
    %1585 = vmatpush2.xpose.msra.mxu0 0.0
    %1586 = vmatprep.subr.mxu0 0.0
    %1587 = vmatpush2.xpose.msra.mxu0 0.0
    %1588 = vmatprep.subr.mxu0 0.0
    %1589 = vmatpush2.xpose.msra.mxu0 0.0
    %1590 = vmatprep.subr.mxu0 0.0
    %1591 = vmatpush2.xpose.msra.mxu0 0.0
    %1592 = vmatprep.subr.mxu0 0.0
    %1593 = vmatpush2.xpose.msra.mxu0 0.0
    %1594 = vmatprep.subr.mxu0 0.0
    %1595 = vmatpush2.xpose.msra.mxu0 0.0
    %1596 = vmatprep.subr.mxu0 0.0
    %1597 = vmatpush2.xpose.msra.mxu0 0.0
    %1598 = vmatprep.mubr.f32.mxu0 %v307
    %1599 = vmatmul.mubr.f32.gmra.mxu0 %v299
    %v1600 = vpop.f32.mrf.mxu0
    %v1601 = vadd.f32 %v1531, %v1600
    %v1602 = vpop.f32.mrf.mxu0
    %1603 = vdwg.mxu0
    %1604 = vmatprep.subr.mxu0 0.0
    %1605 = vmatpush1.xpose.msra.mxu0 0.0
    %1606 = vmatprep.subr.mxu0 0.0
    %1607 = vmatpush1.xpose.msra.mxu0 0.0
    %1608 = vmatprep.subr.mxu0 0.0
    %1609 = vmatpush1.xpose.msra.mxu0 0.0
    %1610 = vmatprep.subr.mxu0 0.0
    %1611 = vmatpush1.xpose.msra.mxu0 0.0
    %1612 = vmatprep.subr.mxu0 0.0
    %1613 = vmatpush1.xpose.msra.mxu0 0.0
    %1614 = vmatprep.subr.mxu0 0.0
    %1615 = vmatpush1.xpose.msra.mxu0 0.0
    %1616 = vmatprep.subr.mxu0 0.0
    %1617 = vmatpush1.xpose.msra.mxu0 0.0
    %1618 = vmatprep.subr.mxu0 0.0
    %1619 = vmatpush1.xpose.msra.mxu0 0.0
    %1620 = vmatprep.subr.mxu0 0.0
    %1621 = vmatpush1.xpose.msra.mxu0 0.0
    %1622 = vmatprep.subr.mxu0 0.0
    %1623 = vmatpush1.xpose.msra.mxu0 0.0
    %1624 = vmatprep.subr.mxu0 0.0
    %1625 = vmatpush1.xpose.msra.mxu0 0.0
    %1626 = vmatprep.subr.mxu0 0.0
    %1627 = vmatpush1.xpose.msra.mxu0 0.0
    %1628 = vmatprep.subr.mxu0 0.0
    %1629 = vmatpush1.xpose.msra.mxu0 0.0
    %1630 = vmatprep.subr.mxu0 0.0
    %1631 = vmatpush1.xpose.msra.mxu0 0.0
    %1632 = vmatprep.subr.mxu0 0.0
    %1633 = vmatpush1.xpose.msra.mxu0 0.0
    %1634 = vmatprep.subr.mxu0 %v90
    %1635 = vmatpush1.xpose.msra.mxu0 %v89
    %1636 = vmatprep.subr.mxu0 0.0
    %1637 = vmatpush2.xpose.msra.mxu0 0.0
    %1638 = vmatprep.subr.mxu0 0.0
    %1639 = vmatpush2.xpose.msra.mxu0 0.0
    %1640 = vmatprep.subr.mxu0 0.0
    %1641 = vmatpush2.xpose.msra.mxu0 0.0
    %1642 = vmatprep.subr.mxu0 0.0
    %1643 = vmatpush2.xpose.msra.mxu0 0.0
    %1644 = vmatprep.subr.mxu0 0.0
    %1645 = vmatpush2.xpose.msra.mxu0 0.0
    %1646 = vmatprep.subr.mxu0 0.0
    %1647 = vmatpush2.xpose.msra.mxu0 0.0
    %1648 = vmatprep.subr.mxu0 0.0
    %1649 = vmatpush2.xpose.msra.mxu0 0.0
    %1650 = vmatprep.subr.mxu0 0.0
    %1651 = vmatpush2.xpose.msra.mxu0 0.0
    %1652 = vmatprep.subr.mxu0 0.0
    %1653 = vmatpush2.xpose.msra.mxu0 0.0
    %1654 = vmatprep.subr.mxu0 0.0
    %1655 = vmatpush2.xpose.msra.mxu0 0.0
    %1656 = vmatprep.subr.mxu0 0.0
    %1657 = vmatpush2.xpose.msra.mxu0 0.0
    %1658 = vmatprep.subr.mxu0 0.0
    %1659 = vmatpush2.xpose.msra.mxu0 0.0
    %1660 = vmatprep.subr.mxu0 0.0
    %1661 = vmatpush2.xpose.msra.mxu0 0.0
    %1662 = vmatprep.subr.mxu0 0.0
    %1663 = vmatpush2.xpose.msra.mxu0 0.0
    %1664 = vmatprep.subr.mxu0 0.0
    %1665 = vmatpush2.xpose.msra.mxu0 0.0
    %1666 = vmatprep.subr.mxu0 0.0
    %1667 = vmatpush2.xpose.msra.mxu0 0.0
    %1668 = vmatprep.mubr.f32.mxu0 %v308
    %1669 = vmatmul.mubr.f32.gmra.mxu0 %v306
    %v1670 = vpop.f32.mrf.mxu0
    %v1671 = vadd.f32 %v1601, %v1670
    %v1672 = vpop.f32.mrf.mxu0
    %1673 = vdwg.mxu0
    %1674 = vmatprep.subr.mxu0 0.0
    %1675 = vmatpush1.xpose.msra.mxu0 0.0
    %1676 = vmatprep.subr.mxu0 0.0
    %1677 = vmatpush1.xpose.msra.mxu0 0.0
    %1678 = vmatprep.subr.mxu0 0.0
    %1679 = vmatpush1.xpose.msra.mxu0 0.0
    %1680 = vmatprep.subr.mxu0 0.0
    %1681 = vmatpush1.xpose.msra.mxu0 0.0
    %1682 = vmatprep.subr.mxu0 0.0
    %1683 = vmatpush1.xpose.msra.mxu0 0.0
    %1684 = vmatprep.subr.mxu0 0.0
    %1685 = vmatpush1.xpose.msra.mxu0 0.0
    %1686 = vmatprep.subr.mxu0 0.0
    %1687 = vmatpush1.xpose.msra.mxu0 0.0
    %1688 = vmatprep.subr.mxu0 0.0
    %1689 = vmatpush1.xpose.msra.mxu0 0.0
    %1690 = vmatprep.subr.mxu0 0.0
    %1691 = vmatpush1.xpose.msra.mxu0 0.0
    %1692 = vmatprep.subr.mxu0 0.0
    %1693 = vmatpush1.xpose.msra.mxu0 0.0
    %1694 = vmatprep.subr.mxu0 0.0
    %1695 = vmatpush1.xpose.msra.mxu0 0.0
    %1696 = vmatprep.subr.mxu0 0.0
    %1697 = vmatpush1.xpose.msra.mxu0 0.0
    %1698 = vmatprep.subr.mxu0 0.0
    %1699 = vmatpush1.xpose.msra.mxu0 0.0
    %1700 = vmatprep.subr.mxu0 0.0
    %1701 = vmatpush1.xpose.msra.mxu0 0.0
    %1702 = vmatprep.subr.mxu0 0.0
    %1703 = vmatpush1.xpose.msra.mxu0 0.0
    %1704 = vmatprep.subr.mxu0 %v92
    %1705 = vmatpush1.xpose.msra.mxu0 %v91
    %1706 = vmatprep.subr.mxu0 0.0
    %1707 = vmatpush2.xpose.msra.mxu0 0.0
    %1708 = vmatprep.subr.mxu0 0.0
    %1709 = vmatpush2.xpose.msra.mxu0 0.0
    %1710 = vmatprep.subr.mxu0 0.0
    %1711 = vmatpush2.xpose.msra.mxu0 0.0
    %1712 = vmatprep.subr.mxu0 0.0
    %1713 = vmatpush2.xpose.msra.mxu0 0.0
    %1714 = vmatprep.subr.mxu0 0.0
    %1715 = vmatpush2.xpose.msra.mxu0 0.0
    %1716 = vmatprep.subr.mxu0 0.0
    %1717 = vmatpush2.xpose.msra.mxu0 0.0
    %1718 = vmatprep.subr.mxu0 0.0
    %1719 = vmatpush2.xpose.msra.mxu0 0.0
    %1720 = vmatprep.subr.mxu0 0.0
    %1721 = vmatpush2.xpose.msra.mxu0 0.0
    %1722 = vmatprep.subr.mxu0 0.0
    %1723 = vmatpush2.xpose.msra.mxu0 0.0
    %1724 = vmatprep.subr.mxu0 0.0
    %1725 = vmatpush2.xpose.msra.mxu0 0.0
    %1726 = vmatprep.subr.mxu0 0.0
    %1727 = vmatpush2.xpose.msra.mxu0 0.0
    %1728 = vmatprep.subr.mxu0 0.0
    %1729 = vmatpush2.xpose.msra.mxu0 0.0
    %1730 = vmatprep.subr.mxu0 0.0
    %1731 = vmatpush2.xpose.msra.mxu0 0.0
    %1732 = vmatprep.subr.mxu0 0.0
    %1733 = vmatpush2.xpose.msra.mxu0 0.0
    %1734 = vmatprep.subr.mxu0 0.0
    %1735 = vmatpush2.xpose.msra.mxu0 0.0
    %1736 = vmatprep.subr.mxu0 0.0
    %1737 = vmatpush2.xpose.msra.mxu0 0.0
    %1738 = vmatprep.mubr.f32.mxu0 %v324
    %1739 = vmatmul.mubr.f32.gmra.mxu0 %v316
    %v1740 = vpop.f32.mrf.mxu0
    %v1741 = vadd.f32 %v1671, %v1740
    %v1742 = vpop.f32.mrf.mxu0
    %1743 = vdwg.mxu0
    %1744 = vmatprep.subr.mxu0 0.0
    %1745 = vmatpush1.xpose.msra.mxu0 0.0
    %1746 = vmatprep.subr.mxu0 0.0
    %1747 = vmatpush1.xpose.msra.mxu0 0.0
    %1748 = vmatprep.subr.mxu0 0.0
    %1749 = vmatpush1.xpose.msra.mxu0 0.0
    %1750 = vmatprep.subr.mxu0 0.0
    %1751 = vmatpush1.xpose.msra.mxu0 0.0
    %1752 = vmatprep.subr.mxu0 0.0
    %1753 = vmatpush1.xpose.msra.mxu0 0.0
    %1754 = vmatprep.subr.mxu0 0.0
    %1755 = vmatpush1.xpose.msra.mxu0 0.0
    %1756 = vmatprep.subr.mxu0 0.0
    %1757 = vmatpush1.xpose.msra.mxu0 0.0
    %1758 = vmatprep.subr.mxu0 0.0
    %1759 = vmatpush1.xpose.msra.mxu0 0.0
    %1760 = vmatprep.subr.mxu0 0.0
    %1761 = vmatpush1.xpose.msra.mxu0 0.0
    %1762 = vmatprep.subr.mxu0 0.0
    %1763 = vmatpush1.xpose.msra.mxu0 0.0
    %1764 = vmatprep.subr.mxu0 0.0
    %1765 = vmatpush1.xpose.msra.mxu0 0.0
    %1766 = vmatprep.subr.mxu0 0.0
    %1767 = vmatpush1.xpose.msra.mxu0 0.0
    %1768 = vmatprep.subr.mxu0 0.0
    %1769 = vmatpush1.xpose.msra.mxu0 0.0
    %1770 = vmatprep.subr.mxu0 0.0
    %1771 = vmatpush1.xpose.msra.mxu0 0.0
    %1772 = vmatprep.subr.mxu0 0.0
    %1773 = vmatpush1.xpose.msra.mxu0 0.0
    %1774 = vmatprep.subr.mxu0 %v94
    %1775 = vmatpush1.xpose.msra.mxu0 %v93
    %1776 = vmatprep.subr.mxu0 0.0
    %1777 = vmatpush2.xpose.msra.mxu0 0.0
    %1778 = vmatprep.subr.mxu0 0.0
    %1779 = vmatpush2.xpose.msra.mxu0 0.0
    %1780 = vmatprep.subr.mxu0 0.0
    %1781 = vmatpush2.xpose.msra.mxu0 0.0
    %1782 = vmatprep.subr.mxu0 0.0
    %1783 = vmatpush2.xpose.msra.mxu0 0.0
    %1784 = vmatprep.subr.mxu0 0.0
    %1785 = vmatpush2.xpose.msra.mxu0 0.0
    %1786 = vmatprep.subr.mxu0 0.0
    %1787 = vmatpush2.xpose.msra.mxu0 0.0
    %1788 = vmatprep.subr.mxu0 0.0
    %1789 = vmatpush2.xpose.msra.mxu0 0.0
    %1790 = vmatprep.subr.mxu0 0.0
    %1791 = vmatpush2.xpose.msra.mxu0 0.0
    %1792 = vmatprep.subr.mxu0 0.0
    %1793 = vmatpush2.xpose.msra.mxu0 0.0
    %1794 = vmatprep.subr.mxu0 0.0
    %1795 = vmatpush2.xpose.msra.mxu0 0.0
    %1796 = vmatprep.subr.mxu0 0.0
    %1797 = vmatpush2.xpose.msra.mxu0 0.0
    %1798 = vmatprep.subr.mxu0 0.0
    %1799 = vmatpush2.xpose.msra.mxu0 0.0
    %1800 = vmatprep.subr.mxu0 0.0
    %1801 = vmatpush2.xpose.msra.mxu0 0.0
    %1802 = vmatprep.subr.mxu0 0.0
    %1803 = vmatpush2.xpose.msra.mxu0 0.0
    %1804 = vmatprep.subr.mxu0 0.0
    %1805 = vmatpush2.xpose.msra.mxu0 0.0
    %1806 = vmatprep.subr.mxu0 0.0
    %1807 = vmatpush2.xpose.msra.mxu0 0.0
    %1808 = vmatprep.mubr.f32.mxu0 %v325
    %1809 = vmatmul.mubr.f32.gmra.mxu0 %v323
    %v1810 = vpop.f32.mrf.mxu0
    %v1811 = vadd.f32 %v1741, %v1810
    %v1812 = vpop.f32.mrf.mxu0
    %1813 = vdwg.mxu0
    %1814 = vmatprep.subr.mxu0 0.0
    %1815 = vmatpush1.xpose.msra.mxu0 0.0
    %1816 = vmatprep.subr.mxu0 0.0
    %1817 = vmatpush1.xpose.msra.mxu0 0.0
    %1818 = vmatprep.subr.mxu0 0.0
    %1819 = vmatpush1.xpose.msra.mxu0 0.0
    %1820 = vmatprep.subr.mxu0 0.0
    %1821 = vmatpush1.xpose.msra.mxu0 0.0
    %1822 = vmatprep.subr.mxu0 0.0
    %1823 = vmatpush1.xpose.msra.mxu0 0.0
    %1824 = vmatprep.subr.mxu0 0.0
    %1825 = vmatpush1.xpose.msra.mxu0 0.0
    %1826 = vmatprep.subr.mxu0 0.0
    %1827 = vmatpush1.xpose.msra.mxu0 0.0
    %1828 = vmatprep.subr.mxu0 0.0
    %1829 = vmatpush1.xpose.msra.mxu0 0.0
    %1830 = vmatprep.subr.mxu0 0.0
    %1831 = vmatpush1.xpose.msra.mxu0 0.0
    %1832 = vmatprep.subr.mxu0 0.0
    %1833 = vmatpush1.xpose.msra.mxu0 0.0
    %1834 = vmatprep.subr.mxu0 0.0
    %1835 = vmatpush1.xpose.msra.mxu0 0.0
    %1836 = vmatprep.subr.mxu0 0.0
    %1837 = vmatpush1.xpose.msra.mxu0 0.0
    %1838 = vmatprep.subr.mxu0 0.0
    %1839 = vmatpush1.xpose.msra.mxu0 0.0
    %1840 = vmatprep.subr.mxu0 0.0
    %1841 = vmatpush1.xpose.msra.mxu0 0.0
    %1842 = vmatprep.subr.mxu0 0.0
    %1843 = vmatpush1.xpose.msra.mxu0 0.0
    %1844 = vmatprep.subr.mxu0 %v96
    %1845 = vmatpush1.xpose.msra.mxu0 %v95
    %1846 = vmatprep.subr.mxu0 0.0
    %1847 = vmatpush2.xpose.msra.mxu0 0.0
    %1848 = vmatprep.subr.mxu0 0.0
    %1849 = vmatpush2.xpose.msra.mxu0 0.0
    %1850 = vmatprep.subr.mxu0 0.0
    %1851 = vmatpush2.xpose.msra.mxu0 0.0
    %1852 = vmatprep.subr.mxu0 0.0
    %1853 = vmatpush2.xpose.msra.mxu0 0.0
    %1854 = vmatprep.subr.mxu0 0.0
    %1855 = vmatpush2.xpose.msra.mxu0 0.0
    %1856 = vmatprep.subr.mxu0 0.0
    %1857 = vmatpush2.xpose.msra.mxu0 0.0
    %1858 = vmatprep.subr.mxu0 0.0
    %1859 = vmatpush2.xpose.msra.mxu0 0.0
    %1860 = vmatprep.subr.mxu0 0.0
    %1861 = vmatpush2.xpose.msra.mxu0 0.0
    %1862 = vmatprep.subr.mxu0 0.0
    %1863 = vmatpush2.xpose.msra.mxu0 0.0
    %1864 = vmatprep.subr.mxu0 0.0
    %1865 = vmatpush2.xpose.msra.mxu0 0.0
    %1866 = vmatprep.subr.mxu0 0.0
    %1867 = vmatpush2.xpose.msra.mxu0 0.0
    %1868 = vmatprep.subr.mxu0 0.0
    %1869 = vmatpush2.xpose.msra.mxu0 0.0
    %1870 = vmatprep.subr.mxu0 0.0
    %1871 = vmatpush2.xpose.msra.mxu0 0.0
    %1872 = vmatprep.subr.mxu0 0.0
    %1873 = vmatpush2.xpose.msra.mxu0 0.0
    %1874 = vmatprep.subr.mxu0 0.0
    %1875 = vmatpush2.xpose.msra.mxu0 0.0
    %1876 = vmatprep.subr.mxu0 0.0
    %1877 = vmatpush2.xpose.msra.mxu0 0.0
    %1878 = vmatprep.mubr.f32.mxu0 %v341
    %1879 = vmatmul.mubr.f32.gmra.mxu0 %v333
    %v1880 = vpop.f32.mrf.mxu0
    %v1881 = vadd.f32 %v1811, %v1880
    %v1882 = vpop.f32.mrf.mxu0
    %1883 = vdwg.mxu0
    %1884 = vmatprep.subr.mxu0 0.0
    %1885 = vmatpush1.xpose.msra.mxu0 0.0
    %1886 = vmatprep.subr.mxu0 0.0
    %1887 = vmatpush1.xpose.msra.mxu0 0.0
    %1888 = vmatprep.subr.mxu0 0.0
    %1889 = vmatpush1.xpose.msra.mxu0 0.0
    %1890 = vmatprep.subr.mxu0 0.0
    %1891 = vmatpush1.xpose.msra.mxu0 0.0
    %1892 = vmatprep.subr.mxu0 0.0
    %1893 = vmatpush1.xpose.msra.mxu0 0.0
    %1894 = vmatprep.subr.mxu0 0.0
    %1895 = vmatpush1.xpose.msra.mxu0 0.0
    %1896 = vmatprep.subr.mxu0 0.0
    %1897 = vmatpush1.xpose.msra.mxu0 0.0
    %1898 = vmatprep.subr.mxu0 0.0
    %1899 = vmatpush1.xpose.msra.mxu0 0.0
    %1900 = vmatprep.subr.mxu0 0.0
    %1901 = vmatpush1.xpose.msra.mxu0 0.0
    %1902 = vmatprep.subr.mxu0 0.0
    %1903 = vmatpush1.xpose.msra.mxu0 0.0
    %1904 = vmatprep.subr.mxu0 0.0
    %1905 = vmatpush1.xpose.msra.mxu0 0.0
    %1906 = vmatprep.subr.mxu0 0.0
    %1907 = vmatpush1.xpose.msra.mxu0 0.0
    %1908 = vmatprep.subr.mxu0 0.0
    %1909 = vmatpush1.xpose.msra.mxu0 0.0
    %1910 = vmatprep.subr.mxu0 0.0
    %1911 = vmatpush1.xpose.msra.mxu0 0.0
    %1912 = vmatprep.subr.mxu0 0.0
    %1913 = vmatpush1.xpose.msra.mxu0 0.0
    %1914 = vmatprep.subr.mxu0 %v98
    %1915 = vmatpush1.xpose.msra.mxu0 %v97
    %1916 = vmatprep.subr.mxu0 0.0
    %1917 = vmatpush2.xpose.msra.mxu0 0.0
    %1918 = vmatprep.subr.mxu0 0.0
    %1919 = vmatpush2.xpose.msra.mxu0 0.0
    %1920 = vmatprep.subr.mxu0 0.0
    %1921 = vmatpush2.xpose.msra.mxu0 0.0
    %1922 = vmatprep.subr.mxu0 0.0
    %1923 = vmatpush2.xpose.msra.mxu0 0.0
    %1924 = vmatprep.subr.mxu0 0.0
    %1925 = vmatpush2.xpose.msra.mxu0 0.0
    %1926 = vmatprep.subr.mxu0 0.0
    %1927 = vmatpush2.xpose.msra.mxu0 0.0
    %1928 = vmatprep.subr.mxu0 0.0
    %1929 = vmatpush2.xpose.msra.mxu0 0.0
    %1930 = vmatprep.subr.mxu0 0.0
    %1931 = vmatpush2.xpose.msra.mxu0 0.0
    %1932 = vmatprep.subr.mxu0 0.0
    %1933 = vmatpush2.xpose.msra.mxu0 0.0
    %1934 = vmatprep.subr.mxu0 0.0
    %1935 = vmatpush2.xpose.msra.mxu0 0.0
    %1936 = vmatprep.subr.mxu0 0.0
    %1937 = vmatpush2.xpose.msra.mxu0 0.0
    %1938 = vmatprep.subr.mxu0 0.0
    %1939 = vmatpush2.xpose.msra.mxu0 0.0
    %1940 = vmatprep.subr.mxu0 0.0
    %1941 = vmatpush2.xpose.msra.mxu0 0.0
    %1942 = vmatprep.subr.mxu0 0.0
    %1943 = vmatpush2.xpose.msra.mxu0 0.0
    %1944 = vmatprep.subr.mxu0 0.0
    %1945 = vmatpush2.xpose.msra.mxu0 0.0
    %1946 = vmatprep.subr.mxu0 0.0
    %1947 = vmatpush2.xpose.msra.mxu0 0.0
    %1948 = vmatprep.mubr.f32.mxu0 %v342
    %1949 = vmatmul.mubr.f32.gmra.mxu0 %v340
    %v1950 = vpop.f32.mrf.mxu0
    %v1951 = vadd.f32 %v1881, %v1950
    %v1952 = vpop.f32.mrf.mxu0
    %1953 = vdwg.mxu0
    %1954 = vmatprep.subr.mxu0 0.0
    %1955 = vmatpush1.xpose.msra.mxu0 0.0
    %1956 = vmatprep.subr.mxu0 0.0
    %1957 = vmatpush1.xpose.msra.mxu0 0.0
    %1958 = vmatprep.subr.mxu0 0.0
    %1959 = vmatpush1.xpose.msra.mxu0 0.0
    %1960 = vmatprep.subr.mxu0 0.0
    %1961 = vmatpush1.xpose.msra.mxu0 0.0
    %1962 = vmatprep.subr.mxu0 0.0
    %1963 = vmatpush1.xpose.msra.mxu0 0.0
    %1964 = vmatprep.subr.mxu0 0.0
    %1965 = vmatpush1.xpose.msra.mxu0 0.0
    %1966 = vmatprep.subr.mxu0 0.0
    %1967 = vmatpush1.xpose.msra.mxu0 0.0
    %1968 = vmatprep.subr.mxu0 0.0
    %1969 = vmatpush1.xpose.msra.mxu0 0.0
    %1970 = vmatprep.subr.mxu0 0.0
    %1971 = vmatpush1.xpose.msra.mxu0 0.0
    %1972 = vmatprep.subr.mxu0 0.0
    %1973 = vmatpush1.xpose.msra.mxu0 0.0
    %1974 = vmatprep.subr.mxu0 0.0
    %1975 = vmatpush1.xpose.msra.mxu0 0.0
    %1976 = vmatprep.subr.mxu0 0.0
    %1977 = vmatpush1.xpose.msra.mxu0 0.0
    %1978 = vmatprep.subr.mxu0 0.0
    %1979 = vmatpush1.xpose.msra.mxu0 0.0
    %1980 = vmatprep.subr.mxu0 0.0
    %1981 = vmatpush1.xpose.msra.mxu0 0.0
    %1982 = vmatprep.subr.mxu0 0.0
    %1983 = vmatpush1.xpose.msra.mxu0 0.0
    %1984 = vmatprep.subr.mxu0 %v100
    %1985 = vmatpush1.xpose.msra.mxu0 %v99
    %1986 = vmatprep.subr.mxu0 0.0
    %1987 = vmatpush2.xpose.msra.mxu0 0.0
    %1988 = vmatprep.subr.mxu0 0.0
    %1989 = vmatpush2.xpose.msra.mxu0 0.0
    %1990 = vmatprep.subr.mxu0 0.0
    %1991 = vmatpush2.xpose.msra.mxu0 0.0
    %1992 = vmatprep.subr.mxu0 0.0
    %1993 = vmatpush2.xpose.msra.mxu0 0.0
    %1994 = vmatprep.subr.mxu0 0.0
    %1995 = vmatpush2.xpose.msra.mxu0 0.0
    %1996 = vmatprep.subr.mxu0 0.0
    %1997 = vmatpush2.xpose.msra.mxu0 0.0
    %1998 = vmatprep.subr.mxu0 0.0
    %1999 = vmatpush2.xpose.msra.mxu0 0.0
    %2000 = vmatprep.subr.mxu0 0.0
    %2001 = vmatpush2.xpose.msra.mxu0 0.0
    %2002 = vmatprep.subr.mxu0 0.0
    %2003 = vmatpush2.xpose.msra.mxu0 0.0
    %2004 = vmatprep.subr.mxu0 0.0
    %2005 = vmatpush2.xpose.msra.mxu0 0.0
    %2006 = vmatprep.subr.mxu0 0.0
    %2007 = vmatpush2.xpose.msra.mxu0 0.0
    %2008 = vmatprep.subr.mxu0 0.0
    %2009 = vmatpush2.xpose.msra.mxu0 0.0
    %2010 = vmatprep.subr.mxu0 0.0
    %2011 = vmatpush2.xpose.msra.mxu0 0.0
    %2012 = vmatprep.subr.mxu0 0.0
    %2013 = vmatpush2.xpose.msra.mxu0 0.0
    %2014 = vmatprep.subr.mxu0 0.0
    %2015 = vmatpush2.xpose.msra.mxu0 0.0
    %2016 = vmatprep.subr.mxu0 0.0
    %2017 = vmatpush2.xpose.msra.mxu0 0.0
    %2018 = vmatprep.mubr.f32.mxu0 %v358
    %2019 = vmatmul.mubr.f32.gmra.mxu0 %v350
    %v2020 = vpop.f32.mrf.mxu0
    %v2021 = vadd.f32 %v1951, %v2020
    %v2022 = vpop.f32.mrf.mxu0
    %2023 = vdwg.mxu0
    %2024 = vmatprep.subr.mxu0 0.0
    %2025 = vmatpush1.xpose.msra.mxu0 0.0
    %2026 = vmatprep.subr.mxu0 0.0
    %2027 = vmatpush1.xpose.msra.mxu0 0.0
    %2028 = vmatprep.subr.mxu0 0.0
    %2029 = vmatpush1.xpose.msra.mxu0 0.0
    %2030 = vmatprep.subr.mxu0 0.0
    %2031 = vmatpush1.xpose.msra.mxu0 0.0
    %2032 = vmatprep.subr.mxu0 0.0
    %2033 = vmatpush1.xpose.msra.mxu0 0.0
    %2034 = vmatprep.subr.mxu0 0.0
    %2035 = vmatpush1.xpose.msra.mxu0 0.0
    %2036 = vmatprep.subr.mxu0 0.0
    %2037 = vmatpush1.xpose.msra.mxu0 0.0
    %2038 = vmatprep.subr.mxu0 0.0
    %2039 = vmatpush1.xpose.msra.mxu0 0.0
    %2040 = vmatprep.subr.mxu0 0.0
    %2041 = vmatpush1.xpose.msra.mxu0 0.0
    %2042 = vmatprep.subr.mxu0 0.0
    %2043 = vmatpush1.xpose.msra.mxu0 0.0
    %2044 = vmatprep.subr.mxu0 0.0
    %2045 = vmatpush1.xpose.msra.mxu0 0.0
    %2046 = vmatprep.subr.mxu0 0.0
    %2047 = vmatpush1.xpose.msra.mxu0 0.0
    %2048 = vmatprep.subr.mxu0 0.0
    %2049 = vmatpush1.xpose.msra.mxu0 0.0
    %2050 = vmatprep.subr.mxu0 0.0
    %2051 = vmatpush1.xpose.msra.mxu0 0.0
    %2052 = vmatprep.subr.mxu0 0.0
    %2053 = vmatpush1.xpose.msra.mxu0 0.0
    %2054 = vmatprep.subr.mxu0 %v102
    %2055 = vmatpush1.xpose.msra.mxu0 %v101
    %2056 = vmatprep.subr.mxu0 0.0
    %2057 = vmatpush2.xpose.msra.mxu0 0.0
    %2058 = vmatprep.subr.mxu0 0.0
    %2059 = vmatpush2.xpose.msra.mxu0 0.0
    %2060 = vmatprep.subr.mxu0 0.0
    %2061 = vmatpush2.xpose.msra.mxu0 0.0
    %2062 = vmatprep.subr.mxu0 0.0
    %2063 = vmatpush2.xpose.msra.mxu0 0.0
    %2064 = vmatprep.subr.mxu0 0.0
    %2065 = vmatpush2.xpose.msra.mxu0 0.0
    %2066 = vmatprep.subr.mxu0 0.0
    %2067 = vmatpush2.xpose.msra.mxu0 0.0
    %2068 = vmatprep.subr.mxu0 0.0
    %2069 = vmatpush2.xpose.msra.mxu0 0.0
    %2070 = vmatprep.subr.mxu0 0.0
    %2071 = vmatpush2.xpose.msra.mxu0 0.0
    %2072 = vmatprep.subr.mxu0 0.0
    %2073 = vmatpush2.xpose.msra.mxu0 0.0
    %2074 = vmatprep.subr.mxu0 0.0
    %2075 = vmatpush2.xpose.msra.mxu0 0.0
    %2076 = vmatprep.subr.mxu0 0.0
    %2077 = vmatpush2.xpose.msra.mxu0 0.0
    %2078 = vmatprep.subr.mxu0 0.0
    %2079 = vmatpush2.xpose.msra.mxu0 0.0
    %2080 = vmatprep.subr.mxu0 0.0
    %2081 = vmatpush2.xpose.msra.mxu0 0.0
    %2082 = vmatprep.subr.mxu0 0.0
    %2083 = vmatpush2.xpose.msra.mxu0 0.0
    %2084 = vmatprep.subr.mxu0 0.0
    %2085 = vmatpush2.xpose.msra.mxu0 0.0
    %2086 = vmatprep.subr.mxu0 0.0
    %2087 = vmatpush2.xpose.msra.mxu0 0.0
    %2088 = vmatprep.mubr.f32.mxu0 %v359
    %2089 = vmatmul.mubr.f32.gmra.mxu0 %v357
    %v2090 = vpop.f32.mrf.mxu0
    %v2091 = vadd.f32 %v2021, %v2090
    %v2092 = vpop.f32.mrf.mxu0
    %2093 = vdwg.mxu0
    %2094 = vmatprep.subr.mxu0 0.0
    %2095 = vmatpush1.xpose.msra.mxu0 0.0
    %2096 = vmatprep.subr.mxu0 0.0
    %2097 = vmatpush1.xpose.msra.mxu0 0.0
    %2098 = vmatprep.subr.mxu0 0.0
    %2099 = vmatpush1.xpose.msra.mxu0 0.0
    %2100 = vmatprep.subr.mxu0 0.0
    %2101 = vmatpush1.xpose.msra.mxu0 0.0
    %2102 = vmatprep.subr.mxu0 0.0
    %2103 = vmatpush1.xpose.msra.mxu0 0.0
    %2104 = vmatprep.subr.mxu0 0.0
    %2105 = vmatpush1.xpose.msra.mxu0 0.0
    %2106 = vmatprep.subr.mxu0 0.0
    %2107 = vmatpush1.xpose.msra.mxu0 0.0
    %2108 = vmatprep.subr.mxu0 0.0
    %2109 = vmatpush1.xpose.msra.mxu0 0.0
    %2110 = vmatprep.subr.mxu0 0.0
    %2111 = vmatpush1.xpose.msra.mxu0 0.0
    %2112 = vmatprep.subr.mxu0 0.0
    %2113 = vmatpush1.xpose.msra.mxu0 0.0
    %2114 = vmatprep.subr.mxu0 0.0
    %2115 = vmatpush1.xpose.msra.mxu0 0.0
    %2116 = vmatprep.subr.mxu0 0.0
    %2117 = vmatpush1.xpose.msra.mxu0 0.0
    %2118 = vmatprep.subr.mxu0 0.0
    %2119 = vmatpush1.xpose.msra.mxu0 0.0
    %2120 = vmatprep.subr.mxu0 0.0
    %2121 = vmatpush1.xpose.msra.mxu0 0.0
    %2122 = vmatprep.subr.mxu0 0.0
    %2123 = vmatpush1.xpose.msra.mxu0 0.0
    %2124 = vmatprep.subr.mxu0 %v104
    %2125 = vmatpush1.xpose.msra.mxu0 %v103
    %2126 = vmatprep.subr.mxu0 0.0
    %2127 = vmatpush2.xpose.msra.mxu0 0.0
    %2128 = vmatprep.subr.mxu0 0.0
    %2129 = vmatpush2.xpose.msra.mxu0 0.0
    %2130 = vmatprep.subr.mxu0 0.0
    %2131 = vmatpush2.xpose.msra.mxu0 0.0
    %2132 = vmatprep.subr.mxu0 0.0
    %2133 = vmatpush2.xpose.msra.mxu0 0.0
    %2134 = vmatprep.subr.mxu0 0.0
    %2135 = vmatpush2.xpose.msra.mxu0 0.0
    %2136 = vmatprep.subr.mxu0 0.0
    %2137 = vmatpush2.xpose.msra.mxu0 0.0
    %2138 = vmatprep.subr.mxu0 0.0
    %2139 = vmatpush2.xpose.msra.mxu0 0.0
    %2140 = vmatprep.subr.mxu0 0.0
    %2141 = vmatpush2.xpose.msra.mxu0 0.0
    %2142 = vmatprep.subr.mxu0 0.0
    %2143 = vmatpush2.xpose.msra.mxu0 0.0
    %2144 = vmatprep.subr.mxu0 0.0
    %2145 = vmatpush2.xpose.msra.mxu0 0.0
    %2146 = vmatprep.subr.mxu0 0.0
    %2147 = vmatpush2.xpose.msra.mxu0 0.0
    %2148 = vmatprep.subr.mxu0 0.0
    %2149 = vmatpush2.xpose.msra.mxu0 0.0
    %2150 = vmatprep.subr.mxu0 0.0
    %2151 = vmatpush2.xpose.msra.mxu0 0.0
    %2152 = vmatprep.subr.mxu0 0.0
    %2153 = vmatpush2.xpose.msra.mxu0 0.0
    %2154 = vmatprep.subr.mxu0 0.0
    %2155 = vmatpush2.xpose.msra.mxu0 0.0
    %2156 = vmatprep.subr.mxu0 0.0
    %2157 = vmatpush2.xpose.msra.mxu0 0.0
    %2158 = vmatprep.mubr.f32.mxu0 %v375
    %2159 = vmatmul.mubr.f32.gmra.mxu0 %v367
    %v2160 = vpop.f32.mrf.mxu0
    %v2161 = vadd.f32 %v2091, %v2160
    %v2162 = vpop.f32.mrf.mxu0
    %2163 = vdwg.mxu0
    %2164 = vmatprep.subr.mxu0 0.0
    %2165 = vmatpush1.xpose.msra.mxu0 0.0
    %2166 = vmatprep.subr.mxu0 0.0
    %2167 = vmatpush1.xpose.msra.mxu0 0.0
    %2168 = vmatprep.subr.mxu0 0.0
    %2169 = vmatpush1.xpose.msra.mxu0 0.0
    %2170 = vmatprep.subr.mxu0 0.0
    %2171 = vmatpush1.xpose.msra.mxu0 0.0
    %2172 = vmatprep.subr.mxu0 0.0
    %2173 = vmatpush1.xpose.msra.mxu0 0.0
    %2174 = vmatprep.subr.mxu0 0.0
    %2175 = vmatpush1.xpose.msra.mxu0 0.0
    %2176 = vmatprep.subr.mxu0 0.0
    %2177 = vmatpush1.xpose.msra.mxu0 0.0
    %2178 = vmatprep.subr.mxu0 0.0
    %2179 = vmatpush1.xpose.msra.mxu0 0.0
    %2180 = vmatprep.subr.mxu0 0.0
    %2181 = vmatpush1.xpose.msra.mxu0 0.0
    %2182 = vmatprep.subr.mxu0 0.0
    %2183 = vmatpush1.xpose.msra.mxu0 0.0
    %2184 = vmatprep.subr.mxu0 0.0
    %2185 = vmatpush1.xpose.msra.mxu0 0.0
    %2186 = vmatprep.subr.mxu0 0.0
    %2187 = vmatpush1.xpose.msra.mxu0 0.0
    %2188 = vmatprep.subr.mxu0 0.0
    %2189 = vmatpush1.xpose.msra.mxu0 0.0
    %2190 = vmatprep.subr.mxu0 0.0
    %2191 = vmatpush1.xpose.msra.mxu0 0.0
    %2192 = vmatprep.subr.mxu0 0.0
    %2193 = vmatpush1.xpose.msra.mxu0 0.0
    %2194 = vmatprep.subr.mxu0 %v106
    %2195 = vmatpush1.xpose.msra.mxu0 %v105
    %2196 = vmatprep.subr.mxu0 0.0
    %2197 = vmatpush2.xpose.msra.mxu0 0.0
    %2198 = vmatprep.subr.mxu0 0.0
    %2199 = vmatpush2.xpose.msra.mxu0 0.0
    %2200 = vmatprep.subr.mxu0 0.0
    %2201 = vmatpush2.xpose.msra.mxu0 0.0
    %2202 = vmatprep.subr.mxu0 0.0
    %2203 = vmatpush2.xpose.msra.mxu0 0.0
    %2204 = vmatprep.subr.mxu0 0.0
    %2205 = vmatpush2.xpose.msra.mxu0 0.0
    %2206 = vmatprep.subr.mxu0 0.0
    %2207 = vmatpush2.xpose.msra.mxu0 0.0
    %2208 = vmatprep.subr.mxu0 0.0
    %2209 = vmatpush2.xpose.msra.mxu0 0.0
    %2210 = vmatprep.subr.mxu0 0.0
    %2211 = vmatpush2.xpose.msra.mxu0 0.0
    %2212 = vmatprep.subr.mxu0 0.0
    %2213 = vmatpush2.xpose.msra.mxu0 0.0
    %2214 = vmatprep.subr.mxu0 0.0
    %2215 = vmatpush2.xpose.msra.mxu0 0.0
    %2216 = vmatprep.subr.mxu0 0.0
    %2217 = vmatpush2.xpose.msra.mxu0 0.0
    %2218 = vmatprep.subr.mxu0 0.0
    %2219 = vmatpush2.xpose.msra.mxu0 0.0
    %2220 = vmatprep.subr.mxu0 0.0
    %2221 = vmatpush2.xpose.msra.mxu0 0.0
    %2222 = vmatprep.subr.mxu0 0.0
    %2223 = vmatpush2.xpose.msra.mxu0 0.0
    %2224 = vmatprep.subr.mxu0 0.0
    %2225 = vmatpush2.xpose.msra.mxu0 0.0
    %2226 = vmatprep.subr.mxu0 0.0
    %2227 = vmatpush2.xpose.msra.mxu0 0.0
    %2228 = vmatprep.mubr.f32.mxu0 %v376
    %2229 = vmatmul.mubr.f32.gmra.mxu0 %v374
    %v2230 = vpop.f32.mrf.mxu0
    %v2231 = vadd.f32 %v2161, %v2230
    %v2232 = vpop.f32.mrf.mxu0
    %2233 = vdwg.mxu0
    %2234 = vmatprep.subr.mxu0 0.0
    %2235 = vmatpush1.xpose.msra.mxu0 0.0
    %2236 = vmatprep.subr.mxu0 0.0
    %2237 = vmatpush1.xpose.msra.mxu0 0.0
    %2238 = vmatprep.subr.mxu0 0.0
    %2239 = vmatpush1.xpose.msra.mxu0 0.0
    %2240 = vmatprep.subr.mxu0 0.0
    %2241 = vmatpush1.xpose.msra.mxu0 0.0
    %2242 = vmatprep.subr.mxu0 0.0
    %2243 = vmatpush1.xpose.msra.mxu0 0.0
    %2244 = vmatprep.subr.mxu0 0.0
    %2245 = vmatpush1.xpose.msra.mxu0 0.0
    %2246 = vmatprep.subr.mxu0 0.0
    %2247 = vmatpush1.xpose.msra.mxu0 0.0
    %2248 = vmatprep.subr.mxu0 0.0
    %2249 = vmatpush1.xpose.msra.mxu0 0.0
    %2250 = vmatprep.subr.mxu0 0.0
    %2251 = vmatpush1.xpose.msra.mxu0 0.0
    %2252 = vmatprep.subr.mxu0 0.0
    %2253 = vmatpush1.xpose.msra.mxu0 0.0
    %2254 = vmatprep.subr.mxu0 0.0
    %2255 = vmatpush1.xpose.msra.mxu0 0.0
    %2256 = vmatprep.subr.mxu0 0.0
    %2257 = vmatpush1.xpose.msra.mxu0 0.0
    %2258 = vmatprep.subr.mxu0 0.0
    %2259 = vmatpush1.xpose.msra.mxu0 0.0
    %2260 = vmatprep.subr.mxu0 0.0
    %2261 = vmatpush1.xpose.msra.mxu0 0.0
    %2262 = vmatprep.subr.mxu0 0.0
    %2263 = vmatpush1.xpose.msra.mxu0 0.0
    %2264 = vmatprep.subr.mxu0 %v108
    %2265 = vmatpush1.xpose.msra.mxu0 %v107
    %2266 = vmatprep.subr.mxu0 0.0
    %2267 = vmatpush2.xpose.msra.mxu0 0.0
    %2268 = vmatprep.subr.mxu0 0.0
    %2269 = vmatpush2.xpose.msra.mxu0 0.0
    %2270 = vmatprep.subr.mxu0 0.0
    %2271 = vmatpush2.xpose.msra.mxu0 0.0
    %2272 = vmatprep.subr.mxu0 0.0
    %2273 = vmatpush2.xpose.msra.mxu0 0.0
    %2274 = vmatprep.subr.mxu0 0.0
    %2275 = vmatpush2.xpose.msra.mxu0 0.0
    %2276 = vmatprep.subr.mxu0 0.0
    %2277 = vmatpush2.xpose.msra.mxu0 0.0
    %2278 = vmatprep.subr.mxu0 0.0
    %2279 = vmatpush2.xpose.msra.mxu0 0.0
    %2280 = vmatprep.subr.mxu0 0.0
    %2281 = vmatpush2.xpose.msra.mxu0 0.0
    %2282 = vmatprep.subr.mxu0 0.0
    %2283 = vmatpush2.xpose.msra.mxu0 0.0
    %2284 = vmatprep.subr.mxu0 0.0
    %2285 = vmatpush2.xpose.msra.mxu0 0.0
    %2286 = vmatprep.subr.mxu0 0.0
    %2287 = vmatpush2.xpose.msra.mxu0 0.0
    %2288 = vmatprep.subr.mxu0 0.0
    %2289 = vmatpush2.xpose.msra.mxu0 0.0
    %2290 = vmatprep.subr.mxu0 0.0
    %2291 = vmatpush2.xpose.msra.mxu0 0.0
    %2292 = vmatprep.subr.mxu0 0.0
    %2293 = vmatpush2.xpose.msra.mxu0 0.0
    %2294 = vmatprep.subr.mxu0 0.0
    %2295 = vmatpush2.xpose.msra.mxu0 0.0
    %2296 = vmatprep.subr.mxu0 0.0
    %2297 = vmatpush2.xpose.msra.mxu0 0.0
    %2298 = vmatprep.mubr.f32.mxu0 %v392
    %2299 = vmatmul.mubr.f32.gmra.mxu0 %v384
    %v2300 = vpop.f32.mrf.mxu0
    %v2301 = vadd.f32 %v2231, %v2300
    %v2302 = vpop.f32.mrf.mxu0
    %2303 = vdwg.mxu0
    %2304 = vmatprep.subr.mxu0 0.0
    %2305 = vmatpush1.xpose.msra.mxu0 0.0
    %2306 = vmatprep.subr.mxu0 0.0
    %2307 = vmatpush1.xpose.msra.mxu0 0.0
    %2308 = vmatprep.subr.mxu0 0.0
    %2309 = vmatpush1.xpose.msra.mxu0 0.0
    %2310 = vmatprep.subr.mxu0 0.0
    %2311 = vmatpush1.xpose.msra.mxu0 0.0
    %2312 = vmatprep.subr.mxu0 0.0
    %2313 = vmatpush1.xpose.msra.mxu0 0.0
    %2314 = vmatprep.subr.mxu0 0.0
    %2315 = vmatpush1.xpose.msra.mxu0 0.0
    %2316 = vmatprep.subr.mxu0 0.0
    %2317 = vmatpush1.xpose.msra.mxu0 0.0
    %2318 = vmatprep.subr.mxu0 0.0
    %2319 = vmatpush1.xpose.msra.mxu0 0.0
    %2320 = vmatprep.subr.mxu0 0.0
    %2321 = vmatpush1.xpose.msra.mxu0 0.0
    %2322 = vmatprep.subr.mxu0 0.0
    %2323 = vmatpush1.xpose.msra.mxu0 0.0
    %2324 = vmatprep.subr.mxu0 0.0
    %2325 = vmatpush1.xpose.msra.mxu0 0.0
    %2326 = vmatprep.subr.mxu0 0.0
    %2327 = vmatpush1.xpose.msra.mxu0 0.0
    %2328 = vmatprep.subr.mxu0 0.0
    %2329 = vmatpush1.xpose.msra.mxu0 0.0
    %2330 = vmatprep.subr.mxu0 0.0
    %2331 = vmatpush1.xpose.msra.mxu0 0.0
    %2332 = vmatprep.subr.mxu0 0.0
    %2333 = vmatpush1.xpose.msra.mxu0 0.0
    %2334 = vmatprep.subr.mxu0 %v110
    %2335 = vmatpush1.xpose.msra.mxu0 %v109
    %2336 = vmatprep.subr.mxu0 0.0
    %2337 = vmatpush2.xpose.msra.mxu0 0.0
    %2338 = vmatprep.subr.mxu0 0.0
    %2339 = vmatpush2.xpose.msra.mxu0 0.0
    %2340 = vmatprep.subr.mxu0 0.0
    %2341 = vmatpush2.xpose.msra.mxu0 0.0
    %2342 = vmatprep.subr.mxu0 0.0
    %2343 = vmatpush2.xpose.msra.mxu0 0.0
    %2344 = vmatprep.subr.mxu0 0.0
    %2345 = vmatpush2.xpose.msra.mxu0 0.0
    %2346 = vmatprep.subr.mxu0 0.0
    %2347 = vmatpush2.xpose.msra.mxu0 0.0
    %2348 = vmatprep.subr.mxu0 0.0
    %2349 = vmatpush2.xpose.msra.mxu0 0.0
    %2350 = vmatprep.subr.mxu0 0.0
    %2351 = vmatpush2.xpose.msra.mxu0 0.0
    %2352 = vmatprep.subr.mxu0 0.0
    %2353 = vmatpush2.xpose.msra.mxu0 0.0
    %2354 = vmatprep.subr.mxu0 0.0
    %2355 = vmatpush2.xpose.msra.mxu0 0.0
    %2356 = vmatprep.subr.mxu0 0.0
    %2357 = vmatpush2.xpose.msra.mxu0 0.0
    %2358 = vmatprep.subr.mxu0 0.0
    %2359 = vmatpush2.xpose.msra.mxu0 0.0
    %2360 = vmatprep.subr.mxu0 0.0
    %2361 = vmatpush2.xpose.msra.mxu0 0.0
    %2362 = vmatprep.subr.mxu0 0.0
    %2363 = vmatpush2.xpose.msra.mxu0 0.0
    %2364 = vmatprep.subr.mxu0 0.0
    %2365 = vmatpush2.xpose.msra.mxu0 0.0
    %2366 = vmatprep.subr.mxu0 0.0
    %2367 = vmatpush2.xpose.msra.mxu0 0.0
    %2368 = vmatprep.mubr.f32.mxu0 %v393
    %2369 = vmatmul.mubr.f32.gmra.mxu0 %v391
    %v2370 = vpop.f32.mrf.mxu0
    %v2371 = vadd.f32 %v2301, %v2370
    %v2372 = vpop.f32.mrf.mxu0
    %2373 = vdwg.mxu0
    %2374 = vmatprep.subr.mxu0 0.0
    %2375 = vmatpush1.xpose.msra.mxu0 0.0
    %2376 = vmatprep.subr.mxu0 0.0
    %2377 = vmatpush1.xpose.msra.mxu0 0.0
    %2378 = vmatprep.subr.mxu0 0.0
    %2379 = vmatpush1.xpose.msra.mxu0 0.0
    %2380 = vmatprep.subr.mxu0 0.0
    %2381 = vmatpush1.xpose.msra.mxu0 0.0
    %2382 = vmatprep.subr.mxu0 0.0
    %2383 = vmatpush1.xpose.msra.mxu0 0.0
    %2384 = vmatprep.subr.mxu0 0.0
    %2385 = vmatpush1.xpose.msra.mxu0 0.0
    %2386 = vmatprep.subr.mxu0 0.0
    %2387 = vmatpush1.xpose.msra.mxu0 0.0
    %2388 = vmatprep.subr.mxu0 0.0
    %2389 = vmatpush1.xpose.msra.mxu0 0.0
    %2390 = vmatprep.subr.mxu0 0.0
    %2391 = vmatpush1.xpose.msra.mxu0 0.0
    %2392 = vmatprep.subr.mxu0 0.0
    %2393 = vmatpush1.xpose.msra.mxu0 0.0
    %2394 = vmatprep.subr.mxu0 0.0
    %2395 = vmatpush1.xpose.msra.mxu0 0.0
    %2396 = vmatprep.subr.mxu0 0.0
    %2397 = vmatpush1.xpose.msra.mxu0 0.0
    %2398 = vmatprep.subr.mxu0 0.0
    %2399 = vmatpush1.xpose.msra.mxu0 0.0
    %2400 = vmatprep.subr.mxu0 0.0
    %2401 = vmatpush1.xpose.msra.mxu0 0.0
    %2402 = vmatprep.subr.mxu0 0.0
    %2403 = vmatpush1.xpose.msra.mxu0 0.0
    %2404 = vmatprep.subr.mxu0 %v112
    %2405 = vmatpush1.xpose.msra.mxu0 %v111
    %2406 = vmatprep.subr.mxu0 0.0
    %2407 = vmatpush2.xpose.msra.mxu0 0.0
    %2408 = vmatprep.subr.mxu0 0.0
    %2409 = vmatpush2.xpose.msra.mxu0 0.0
    %2410 = vmatprep.subr.mxu0 0.0
    %2411 = vmatpush2.xpose.msra.mxu0 0.0
    %2412 = vmatprep.subr.mxu0 0.0
    %2413 = vmatpush2.xpose.msra.mxu0 0.0
    %2414 = vmatprep.subr.mxu0 0.0
    %2415 = vmatpush2.xpose.msra.mxu0 0.0
    %2416 = vmatprep.subr.mxu0 0.0
    %2417 = vmatpush2.xpose.msra.mxu0 0.0
    %2418 = vmatprep.subr.mxu0 0.0
    %2419 = vmatpush2.xpose.msra.mxu0 0.0
    %2420 = vmatprep.subr.mxu0 0.0
    %2421 = vmatpush2.xpose.msra.mxu0 0.0
    %2422 = vmatprep.subr.mxu0 0.0
    %2423 = vmatpush2.xpose.msra.mxu0 0.0
    %2424 = vmatprep.subr.mxu0 0.0
    %2425 = vmatpush2.xpose.msra.mxu0 0.0
    %2426 = vmatprep.subr.mxu0 0.0
    %2427 = vmatpush2.xpose.msra.mxu0 0.0
    %2428 = vmatprep.subr.mxu0 0.0
    %2429 = vmatpush2.xpose.msra.mxu0 0.0
    %2430 = vmatprep.subr.mxu0 0.0
    %2431 = vmatpush2.xpose.msra.mxu0 0.0
    %2432 = vmatprep.subr.mxu0 0.0
    %2433 = vmatpush2.xpose.msra.mxu0 0.0
    %2434 = vmatprep.subr.mxu0 0.0
    %2435 = vmatpush2.xpose.msra.mxu0 0.0
    %2436 = vmatprep.subr.mxu0 0.0
    %2437 = vmatpush2.xpose.msra.mxu0 0.0
    %2438 = vmatprep.mubr.f32.mxu0 %v409
    %2439 = vmatmul.mubr.f32.gmra.mxu0 %v401
    %v2440 = vpop.f32.mrf.mxu0
    %v2441 = vadd.f32 %v2371, %v2440
    %v2442 = vpop.f32.mrf.mxu0
    %2443 = vdwg.mxu0
    %2444 = vmatprep.subr.mxu0 0.0
    %2445 = vmatpush1.xpose.msra.mxu0 0.0
    %2446 = vmatprep.subr.mxu0 0.0
    %2447 = vmatpush1.xpose.msra.mxu0 0.0
    %2448 = vmatprep.subr.mxu0 0.0
    %2449 = vmatpush1.xpose.msra.mxu0 0.0
    %2450 = vmatprep.subr.mxu0 0.0
    %2451 = vmatpush1.xpose.msra.mxu0 0.0
    %2452 = vmatprep.subr.mxu0 0.0
    %2453 = vmatpush1.xpose.msra.mxu0 0.0
    %2454 = vmatprep.subr.mxu0 0.0
    %2455 = vmatpush1.xpose.msra.mxu0 0.0
    %2456 = vmatprep.subr.mxu0 0.0
    %2457 = vmatpush1.xpose.msra.mxu0 0.0
    %2458 = vmatprep.subr.mxu0 0.0
    %2459 = vmatpush1.xpose.msra.mxu0 0.0
    %2460 = vmatprep.subr.mxu0 0.0
    %2461 = vmatpush1.xpose.msra.mxu0 0.0
    %2462 = vmatprep.subr.mxu0 0.0
    %2463 = vmatpush1.xpose.msra.mxu0 0.0
    %2464 = vmatprep.subr.mxu0 0.0
    %2465 = vmatpush1.xpose.msra.mxu0 0.0
    %2466 = vmatprep.subr.mxu0 0.0
    %2467 = vmatpush1.xpose.msra.mxu0 0.0
    %2468 = vmatprep.subr.mxu0 0.0
    %2469 = vmatpush1.xpose.msra.mxu0 0.0
    %2470 = vmatprep.subr.mxu0 0.0
    %2471 = vmatpush1.xpose.msra.mxu0 0.0
    %2472 = vmatprep.subr.mxu0 0.0
    %2473 = vmatpush1.xpose.msra.mxu0 0.0
    %2474 = vmatprep.subr.mxu0 %v114
    %2475 = vmatpush1.xpose.msra.mxu0 %v113
    %2476 = vmatprep.subr.mxu0 0.0
    %2477 = vmatpush2.xpose.msra.mxu0 0.0
    %2478 = vmatprep.subr.mxu0 0.0
    %2479 = vmatpush2.xpose.msra.mxu0 0.0
    %2480 = vmatprep.subr.mxu0 0.0
    %2481 = vmatpush2.xpose.msra.mxu0 0.0
    %2482 = vmatprep.subr.mxu0 0.0
    %2483 = vmatpush2.xpose.msra.mxu0 0.0
    %2484 = vmatprep.subr.mxu0 0.0
    %2485 = vmatpush2.xpose.msra.mxu0 0.0
    %2486 = vmatprep.subr.mxu0 0.0
    %2487 = vmatpush2.xpose.msra.mxu0 0.0
    %2488 = vmatprep.subr.mxu0 0.0
    %2489 = vmatpush2.xpose.msra.mxu0 0.0
    %2490 = vmatprep.subr.mxu0 0.0
    %2491 = vmatpush2.xpose.msra.mxu0 0.0
    %2492 = vmatprep.subr.mxu0 0.0
    %2493 = vmatpush2.xpose.msra.mxu0 0.0
    %2494 = vmatprep.subr.mxu0 0.0
    %2495 = vmatpush2.xpose.msra.mxu0 0.0
    %2496 = vmatprep.subr.mxu0 0.0
    %2497 = vmatpush2.xpose.msra.mxu0 0.0
    %2498 = vmatprep.subr.mxu0 0.0
    %2499 = vmatpush2.xpose.msra.mxu0 0.0
    %2500 = vmatprep.subr.mxu0 0.0
    %2501 = vmatpush2.xpose.msra.mxu0 0.0
    %2502 = vmatprep.subr.mxu0 0.0
    %2503 = vmatpush2.xpose.msra.mxu0 0.0
    %2504 = vmatprep.subr.mxu0 0.0
    %2505 = vmatpush2.xpose.msra.mxu0 0.0
    %2506 = vmatprep.subr.mxu0 0.0
    %2507 = vmatpush2.xpose.msra.mxu0 0.0
    %2508 = vmatprep.mubr.f32.mxu0 %v410
    %2509 = vmatmul.mubr.f32.gmra.mxu0 %v408
    %v2510 = vpop.f32.mrf.mxu0
    %v2511 = vadd.f32 %v2441, %v2510
    %v2512 = vpop.f32.mrf.mxu0
    %2513 = vdwg.mxu0
    %2514 = vmatprep.subr.mxu0 0.0
    %2515 = vmatpush1.xpose.msra.mxu0 0.0
    %2516 = vmatprep.subr.mxu0 0.0
    %2517 = vmatpush1.xpose.msra.mxu0 0.0
    %2518 = vmatprep.subr.mxu0 0.0
    %2519 = vmatpush1.xpose.msra.mxu0 0.0
    %2520 = vmatprep.subr.mxu0 0.0
    %2521 = vmatpush1.xpose.msra.mxu0 0.0
    %2522 = vmatprep.subr.mxu0 0.0
    %2523 = vmatpush1.xpose.msra.mxu0 0.0
    %2524 = vmatprep.subr.mxu0 0.0
    %2525 = vmatpush1.xpose.msra.mxu0 0.0
    %2526 = vmatprep.subr.mxu0 0.0
    %2527 = vmatpush1.xpose.msra.mxu0 0.0
    %2528 = vmatprep.subr.mxu0 0.0
    %2529 = vmatpush1.xpose.msra.mxu0 0.0
    %2530 = vmatprep.subr.mxu0 0.0
    %2531 = vmatpush1.xpose.msra.mxu0 0.0
    %2532 = vmatprep.subr.mxu0 0.0
    %2533 = vmatpush1.xpose.msra.mxu0 0.0
    %2534 = vmatprep.subr.mxu0 0.0
    %2535 = vmatpush1.xpose.msra.mxu0 0.0
    %2536 = vmatprep.subr.mxu0 0.0
    %2537 = vmatpush1.xpose.msra.mxu0 0.0
    %2538 = vmatprep.subr.mxu0 0.0
    %2539 = vmatpush1.xpose.msra.mxu0 0.0
    %2540 = vmatprep.subr.mxu0 0.0
    %2541 = vmatpush1.xpose.msra.mxu0 0.0
    %2542 = vmatprep.subr.mxu0 0.0
    %2543 = vmatpush1.xpose.msra.mxu0 0.0
    %2544 = vmatprep.subr.mxu0 %v116
    %2545 = vmatpush1.xpose.msra.mxu0 %v115
    %2546 = vmatprep.subr.mxu0 0.0
    %2547 = vmatpush2.xpose.msra.mxu0 0.0
    %2548 = vmatprep.subr.mxu0 0.0
    %2549 = vmatpush2.xpose.msra.mxu0 0.0
    %2550 = vmatprep.subr.mxu0 0.0
    %2551 = vmatpush2.xpose.msra.mxu0 0.0
    %2552 = vmatprep.subr.mxu0 0.0
    %2553 = vmatpush2.xpose.msra.mxu0 0.0
    %2554 = vmatprep.subr.mxu0 0.0
    %2555 = vmatpush2.xpose.msra.mxu0 0.0
    %2556 = vmatprep.subr.mxu0 0.0
    %2557 = vmatpush2.xpose.msra.mxu0 0.0
    %2558 = vmatprep.subr.mxu0 0.0
    %2559 = vmatpush2.xpose.msra.mxu0 0.0
    %2560 = vmatprep.subr.mxu0 0.0
    %2561 = vmatpush2.xpose.msra.mxu0 0.0
    %2562 = vmatprep.subr.mxu0 0.0
    %2563 = vmatpush2.xpose.msra.mxu0 0.0
    %2564 = vmatprep.subr.mxu0 0.0
    %2565 = vmatpush2.xpose.msra.mxu0 0.0
    %2566 = vmatprep.subr.mxu0 0.0
    %2567 = vmatpush2.xpose.msra.mxu0 0.0
    %2568 = vmatprep.subr.mxu0 0.0
    %2569 = vmatpush2.xpose.msra.mxu0 0.0
    %2570 = vmatprep.subr.mxu0 0.0
    %2571 = vmatpush2.xpose.msra.mxu0 0.0
    %2572 = vmatprep.subr.mxu0 0.0
    %2573 = vmatpush2.xpose.msra.mxu0 0.0
    %2574 = vmatprep.subr.mxu0 0.0
    %2575 = vmatpush2.xpose.msra.mxu0 0.0
    %2576 = vmatprep.subr.mxu0 0.0
    %2577 = vmatpush2.xpose.msra.mxu0 0.0
    %2578 = vmatprep.mubr.f32.mxu0 %v426
    %2579 = vmatmul.mubr.f32.gmra.mxu0 %v418
    %v2580 = vpop.f32.mrf.mxu0
    %v2581 = vadd.f32 %v2511, %v2580
    %v2582 = vpop.f32.mrf.mxu0
    %2583 = vdwg.mxu0
    %2584 = vmatprep.subr.mxu0 0.0
    %2585 = vmatpush1.xpose.msra.mxu0 0.0
    %2586 = vmatprep.subr.mxu0 0.0
    %2587 = vmatpush1.xpose.msra.mxu0 0.0
    %2588 = vmatprep.subr.mxu0 0.0
    %2589 = vmatpush1.xpose.msra.mxu0 0.0
    %2590 = vmatprep.subr.mxu0 0.0
    %2591 = vmatpush1.xpose.msra.mxu0 0.0
    %2592 = vmatprep.subr.mxu0 0.0
    %2593 = vmatpush1.xpose.msra.mxu0 0.0
    %2594 = vmatprep.subr.mxu0 0.0
    %2595 = vmatpush1.xpose.msra.mxu0 0.0
    %2596 = vmatprep.subr.mxu0 0.0
    %2597 = vmatpush1.xpose.msra.mxu0 0.0
    %2598 = vmatprep.subr.mxu0 0.0
    %2599 = vmatpush1.xpose.msra.mxu0 0.0
    %2600 = vmatprep.subr.mxu0 0.0
    %2601 = vmatpush1.xpose.msra.mxu0 0.0
    %2602 = vmatprep.subr.mxu0 0.0
    %2603 = vmatpush1.xpose.msra.mxu0 0.0
    %2604 = vmatprep.subr.mxu0 0.0
    %2605 = vmatpush1.xpose.msra.mxu0 0.0
    %2606 = vmatprep.subr.mxu0 0.0
    %2607 = vmatpush1.xpose.msra.mxu0 0.0
    %2608 = vmatprep.subr.mxu0 0.0
    %2609 = vmatpush1.xpose.msra.mxu0 0.0
    %2610 = vmatprep.subr.mxu0 0.0
    %2611 = vmatpush1.xpose.msra.mxu0 0.0
    %2612 = vmatprep.subr.mxu0 0.0
    %2613 = vmatpush1.xpose.msra.mxu0 0.0
    %2614 = vmatprep.subr.mxu0 %v118
    %2615 = vmatpush1.xpose.msra.mxu0 %v117
    %2616 = vmatprep.subr.mxu0 0.0
    %2617 = vmatpush2.xpose.msra.mxu0 0.0
    %2618 = vmatprep.subr.mxu0 0.0
    %2619 = vmatpush2.xpose.msra.mxu0 0.0
    %2620 = vmatprep.subr.mxu0 0.0
    %2621 = vmatpush2.xpose.msra.mxu0 0.0
    %2622 = vmatprep.subr.mxu0 0.0
    %2623 = vmatpush2.xpose.msra.mxu0 0.0
    %2624 = vmatprep.subr.mxu0 0.0
    %2625 = vmatpush2.xpose.msra.mxu0 0.0
    %2626 = vmatprep.subr.mxu0 0.0
    %2627 = vmatpush2.xpose.msra.mxu0 0.0
    %2628 = vmatprep.subr.mxu0 0.0
    %2629 = vmatpush2.xpose.msra.mxu0 0.0
    %2630 = vmatprep.subr.mxu0 0.0
    %2631 = vmatpush2.xpose.msra.mxu0 0.0
    %2632 = vmatprep.subr.mxu0 0.0
    %2633 = vmatpush2.xpose.msra.mxu0 0.0
    %2634 = vmatprep.subr.mxu0 0.0
    %2635 = vmatpush2.xpose.msra.mxu0 0.0
    %2636 = vmatprep.subr.mxu0 0.0
    %2637 = vmatpush2.xpose.msra.mxu0 0.0
    %2638 = vmatprep.subr.mxu0 0.0
    %2639 = vmatpush2.xpose.msra.mxu0 0.0
    %2640 = vmatprep.subr.mxu0 0.0
    %2641 = vmatpush2.xpose.msra.mxu0 0.0
    %2642 = vmatprep.subr.mxu0 0.0
    %2643 = vmatpush2.xpose.msra.mxu0 0.0
    %2644 = vmatprep.subr.mxu0 0.0
    %2645 = vmatpush2.xpose.msra.mxu0 0.0
    %2646 = vmatprep.subr.mxu0 0.0
    %2647 = vmatpush2.xpose.msra.mxu0 0.0
    %2648 = vmatprep.mubr.f32.mxu0 %v427
    %2649 = vmatmul.mubr.f32.gmra.mxu0 %v425
    %v2650 = vpop.f32.mrf.mxu0
    %v2651 = vadd.f32 %v2581, %v2650
    %v2652 = vpop.f32.mrf.mxu0
    %2653 = vdwg.mxu0
    %2654 = vmatprep.subr.mxu0 0.0
    %2655 = vmatpush1.xpose.msra.mxu0 0.0
    %2656 = vmatprep.subr.mxu0 0.0
    %2657 = vmatpush1.xpose.msra.mxu0 0.0
    %2658 = vmatprep.subr.mxu0 0.0
    %2659 = vmatpush1.xpose.msra.mxu0 0.0
    %2660 = vmatprep.subr.mxu0 0.0
    %2661 = vmatpush1.xpose.msra.mxu0 0.0
    %2662 = vmatprep.subr.mxu0 0.0
    %2663 = vmatpush1.xpose.msra.mxu0 0.0
    %2664 = vmatprep.subr.mxu0 0.0
    %2665 = vmatpush1.xpose.msra.mxu0 0.0
    %2666 = vmatprep.subr.mxu0 0.0
    %2667 = vmatpush1.xpose.msra.mxu0 0.0
    %2668 = vmatprep.subr.mxu0 0.0
    %2669 = vmatpush1.xpose.msra.mxu0 0.0
    %2670 = vmatprep.subr.mxu0 0.0
    %2671 = vmatpush1.xpose.msra.mxu0 0.0
    %2672 = vmatprep.subr.mxu0 0.0
    %2673 = vmatpush1.xpose.msra.mxu0 0.0
    %2674 = vmatprep.subr.mxu0 0.0
    %2675 = vmatpush1.xpose.msra.mxu0 0.0
    %2676 = vmatprep.subr.mxu0 0.0
    %2677 = vmatpush1.xpose.msra.mxu0 0.0
    %2678 = vmatprep.subr.mxu0 0.0
    %2679 = vmatpush1.xpose.msra.mxu0 0.0
    %2680 = vmatprep.subr.mxu0 0.0
    %2681 = vmatpush1.xpose.msra.mxu0 0.0
    %2682 = vmatprep.subr.mxu0 0.0
    %2683 = vmatpush1.xpose.msra.mxu0 0.0
    %2684 = vmatprep.subr.mxu0 %v120
    %2685 = vmatpush1.xpose.msra.mxu0 %v119
    %2686 = vmatprep.subr.mxu0 0.0
    %2687 = vmatpush2.xpose.msra.mxu0 0.0
    %2688 = vmatprep.subr.mxu0 0.0
    %2689 = vmatpush2.xpose.msra.mxu0 0.0
    %2690 = vmatprep.subr.mxu0 0.0
    %2691 = vmatpush2.xpose.msra.mxu0 0.0
    %2692 = vmatprep.subr.mxu0 0.0
    %2693 = vmatpush2.xpose.msra.mxu0 0.0
    %2694 = vmatprep.subr.mxu0 0.0
    %2695 = vmatpush2.xpose.msra.mxu0 0.0
    %2696 = vmatprep.subr.mxu0 0.0
    %2697 = vmatpush2.xpose.msra.mxu0 0.0
    %2698 = vmatprep.subr.mxu0 0.0
    %2699 = vmatpush2.xpose.msra.mxu0 0.0
    %2700 = vmatprep.subr.mxu0 0.0
    %2701 = vmatpush2.xpose.msra.mxu0 0.0
    %2702 = vmatprep.subr.mxu0 0.0
    %2703 = vmatpush2.xpose.msra.mxu0 0.0
    %2704 = vmatprep.subr.mxu0 0.0
    %2705 = vmatpush2.xpose.msra.mxu0 0.0
    %2706 = vmatprep.subr.mxu0 0.0
    %2707 = vmatpush2.xpose.msra.mxu0 0.0
    %2708 = vmatprep.subr.mxu0 0.0
    %2709 = vmatpush2.xpose.msra.mxu0 0.0
    %2710 = vmatprep.subr.mxu0 0.0
    %2711 = vmatpush2.xpose.msra.mxu0 0.0
    %2712 = vmatprep.subr.mxu0 0.0
    %2713 = vmatpush2.xpose.msra.mxu0 0.0
    %2714 = vmatprep.subr.mxu0 0.0
    %2715 = vmatpush2.xpose.msra.mxu0 0.0
    %2716 = vmatprep.subr.mxu0 0.0
    %2717 = vmatpush2.xpose.msra.mxu0 0.0
    %2718 = vmatprep.mubr.f32.mxu0 %v443
    %2719 = vmatmul.mubr.f32.gmra.mxu0 %v435
    %v2720 = vpop.f32.mrf.mxu0
    %v2721 = vadd.f32 %v2651, %v2720
    %v2722 = vpop.f32.mrf.mxu0
    %2723 = vdwg.mxu0
    %2724 = vmatprep.subr.mxu0 0.0
    %2725 = vmatpush1.xpose.msra.mxu0 0.0
    %2726 = vmatprep.subr.mxu0 0.0
    %2727 = vmatpush1.xpose.msra.mxu0 0.0
    %2728 = vmatprep.subr.mxu0 0.0
    %2729 = vmatpush1.xpose.msra.mxu0 0.0
    %2730 = vmatprep.subr.mxu0 0.0
    %2731 = vmatpush1.xpose.msra.mxu0 0.0
    %2732 = vmatprep.subr.mxu0 0.0
    %2733 = vmatpush1.xpose.msra.mxu0 0.0
    %2734 = vmatprep.subr.mxu0 0.0
    %2735 = vmatpush1.xpose.msra.mxu0 0.0
    %2736 = vmatprep.subr.mxu0 0.0
    %2737 = vmatpush1.xpose.msra.mxu0 0.0
    %2738 = vmatprep.subr.mxu0 0.0
    %2739 = vmatpush1.xpose.msra.mxu0 0.0
    %2740 = vmatprep.subr.mxu0 0.0
    %2741 = vmatpush1.xpose.msra.mxu0 0.0
    %2742 = vmatprep.subr.mxu0 0.0
    %2743 = vmatpush1.xpose.msra.mxu0 0.0
    %2744 = vmatprep.subr.mxu0 0.0
    %2745 = vmatpush1.xpose.msra.mxu0 0.0
    %2746 = vmatprep.subr.mxu0 0.0
    %2747 = vmatpush1.xpose.msra.mxu0 0.0
    %2748 = vmatprep.subr.mxu0 0.0
    %2749 = vmatpush1.xpose.msra.mxu0 0.0
    %2750 = vmatprep.subr.mxu0 0.0
    %2751 = vmatpush1.xpose.msra.mxu0 0.0
    %2752 = vmatprep.subr.mxu0 0.0
    %2753 = vmatpush1.xpose.msra.mxu0 0.0
    %2754 = vmatprep.subr.mxu0 %v122
    %2755 = vmatpush1.xpose.msra.mxu0 %v121
    %2756 = vmatprep.subr.mxu0 0.0
    %2757 = vmatpush2.xpose.msra.mxu0 0.0
    %2758 = vmatprep.subr.mxu0 0.0
    %2759 = vmatpush2.xpose.msra.mxu0 0.0
    %2760 = vmatprep.subr.mxu0 0.0
    %2761 = vmatpush2.xpose.msra.mxu0 0.0
    %2762 = vmatprep.subr.mxu0 0.0
    %2763 = vmatpush2.xpose.msra.mxu0 0.0
    %2764 = vmatprep.subr.mxu0 0.0
    %2765 = vmatpush2.xpose.msra.mxu0 0.0
    %2766 = vmatprep.subr.mxu0 0.0
    %2767 = vmatpush2.xpose.msra.mxu0 0.0
    %2768 = vmatprep.subr.mxu0 0.0
    %2769 = vmatpush2.xpose.msra.mxu0 0.0
    %2770 = vmatprep.subr.mxu0 0.0
    %2771 = vmatpush2.xpose.msra.mxu0 0.0
    %2772 = vmatprep.subr.mxu0 0.0
    %2773 = vmatpush2.xpose.msra.mxu0 0.0
    %2774 = vmatprep.subr.mxu0 0.0
    %2775 = vmatpush2.xpose.msra.mxu0 0.0
    %2776 = vmatprep.subr.mxu0 0.0
    %2777 = vmatpush2.xpose.msra.mxu0 0.0
    %2778 = vmatprep.subr.mxu0 0.0
    %2779 = vmatpush2.xpose.msra.mxu0 0.0
    %2780 = vmatprep.subr.mxu0 0.0
    %2781 = vmatpush2.xpose.msra.mxu0 0.0
    %2782 = vmatprep.subr.mxu0 0.0
    %2783 = vmatpush2.xpose.msra.mxu0 0.0
    %2784 = vmatprep.subr.mxu0 0.0
    %2785 = vmatpush2.xpose.msra.mxu0 0.0
    %2786 = vmatprep.subr.mxu0 0.0
    %2787 = vmatpush2.xpose.msra.mxu0 0.0
    %2788 = vmatprep.mubr.f32.mxu0 %v444
    %2789 = vmatmul.mubr.f32.gmra.mxu0 %v442
    %v2790 = vpop.f32.mrf.mxu0
    %v2791 = vadd.f32 %v2721, %v2790
    %v2792 = vpop.f32.mrf.mxu0
    %2793 = vdwg.mxu0
    %2794 = vmatprep.subr.mxu0 0.0
    %2795 = vmatpush1.xpose.msra.mxu0 0.0
    %2796 = vmatprep.subr.mxu0 0.0
    %2797 = vmatpush1.xpose.msra.mxu0 0.0
    %2798 = vmatprep.subr.mxu0 0.0
    %2799 = vmatpush1.xpose.msra.mxu0 0.0
    %2800 = vmatprep.subr.mxu0 0.0
    %2801 = vmatpush1.xpose.msra.mxu0 0.0
    %2802 = vmatprep.subr.mxu0 0.0
    %2803 = vmatpush1.xpose.msra.mxu0 0.0
    %2804 = vmatprep.subr.mxu0 0.0
    %2805 = vmatpush1.xpose.msra.mxu0 0.0
    %2806 = vmatprep.subr.mxu0 0.0
    %2807 = vmatpush1.xpose.msra.mxu0 0.0
    %2808 = vmatprep.subr.mxu0 0.0
    %2809 = vmatpush1.xpose.msra.mxu0 0.0
    %2810 = vmatprep.subr.mxu0 0.0
    %2811 = vmatpush1.xpose.msra.mxu0 0.0
    %2812 = vmatprep.subr.mxu0 0.0
    %2813 = vmatpush1.xpose.msra.mxu0 0.0
    %2814 = vmatprep.subr.mxu0 0.0
    %2815 = vmatpush1.xpose.msra.mxu0 0.0
    %2816 = vmatprep.subr.mxu0 0.0
    %2817 = vmatpush1.xpose.msra.mxu0 0.0
    %2818 = vmatprep.subr.mxu0 0.0
    %2819 = vmatpush1.xpose.msra.mxu0 0.0
    %2820 = vmatprep.subr.mxu0 0.0
    %2821 = vmatpush1.xpose.msra.mxu0 0.0
    %2822 = vmatprep.subr.mxu0 0.0
    %2823 = vmatpush1.xpose.msra.mxu0 0.0
    %2824 = vmatprep.subr.mxu0 %v124
    %2825 = vmatpush1.xpose.msra.mxu0 %v123
    %2826 = vmatprep.subr.mxu0 0.0
    %2827 = vmatpush2.xpose.msra.mxu0 0.0
    %2828 = vmatprep.subr.mxu0 0.0
    %2829 = vmatpush2.xpose.msra.mxu0 0.0
    %2830 = vmatprep.subr.mxu0 0.0
    %2831 = vmatpush2.xpose.msra.mxu0 0.0
    %2832 = vmatprep.subr.mxu0 0.0
    %2833 = vmatpush2.xpose.msra.mxu0 0.0
    %2834 = vmatprep.subr.mxu0 0.0
    %2835 = vmatpush2.xpose.msra.mxu0 0.0
    %2836 = vmatprep.subr.mxu0 0.0
    %2837 = vmatpush2.xpose.msra.mxu0 0.0
    %2838 = vmatprep.subr.mxu0 0.0
    %2839 = vmatpush2.xpose.msra.mxu0 0.0
    %2840 = vmatprep.subr.mxu0 0.0
    %2841 = vmatpush2.xpose.msra.mxu0 0.0
    %2842 = vmatprep.subr.mxu0 0.0
    %2843 = vmatpush2.xpose.msra.mxu0 0.0
    %2844 = vmatprep.subr.mxu0 0.0
    %2845 = vmatpush2.xpose.msra.mxu0 0.0
    %2846 = vmatprep.subr.mxu0 0.0
    %2847 = vmatpush2.xpose.msra.mxu0 0.0
    %2848 = vmatprep.subr.mxu0 0.0
    %2849 = vmatpush2.xpose.msra.mxu0 0.0
    %2850 = vmatprep.subr.mxu0 0.0
    %2851 = vmatpush2.xpose.msra.mxu0 0.0
    %2852 = vmatprep.subr.mxu0 0.0
    %2853 = vmatpush2.xpose.msra.mxu0 0.0
    %2854 = vmatprep.subr.mxu0 0.0
    %2855 = vmatpush2.xpose.msra.mxu0 0.0
    %2856 = vmatprep.subr.mxu0 0.0
    %2857 = vmatpush2.xpose.msra.mxu0 0.0
    %2858 = vmatprep.mubr.f32.mxu0 %v460
    %2859 = vmatmul.mubr.f32.gmra.mxu0 %v452
    %v2860 = vpop.f32.mrf.mxu0
    %v2861 = vadd.f32 %v2791, %v2860
    %v2862 = vpop.f32.mrf.mxu0
    %2863 = vdwg.mxu0
    %2864 = vmatprep.subr.mxu0 0.0
    %2865 = vmatpush1.xpose.msra.mxu0 0.0
    %2866 = vmatprep.subr.mxu0 0.0
    %2867 = vmatpush1.xpose.msra.mxu0 0.0
    %2868 = vmatprep.subr.mxu0 0.0
    %2869 = vmatpush1.xpose.msra.mxu0 0.0
    %2870 = vmatprep.subr.mxu0 0.0
    %2871 = vmatpush1.xpose.msra.mxu0 0.0
    %2872 = vmatprep.subr.mxu0 0.0
    %2873 = vmatpush1.xpose.msra.mxu0 0.0
    %2874 = vmatprep.subr.mxu0 0.0
    %2875 = vmatpush1.xpose.msra.mxu0 0.0
    %2876 = vmatprep.subr.mxu0 0.0
    %2877 = vmatpush1.xpose.msra.mxu0 0.0
    %2878 = vmatprep.subr.mxu0 0.0
    %2879 = vmatpush1.xpose.msra.mxu0 0.0
    %2880 = vmatprep.subr.mxu0 0.0
    %2881 = vmatpush1.xpose.msra.mxu0 0.0
    %2882 = vmatprep.subr.mxu0 0.0
    %2883 = vmatpush1.xpose.msra.mxu0 0.0
    %2884 = vmatprep.subr.mxu0 0.0
    %2885 = vmatpush1.xpose.msra.mxu0 0.0
    %2886 = vmatprep.subr.mxu0 0.0
    %2887 = vmatpush1.xpose.msra.mxu0 0.0
    %2888 = vmatprep.subr.mxu0 0.0
    %2889 = vmatpush1.xpose.msra.mxu0 0.0
    %2890 = vmatprep.subr.mxu0 0.0
    %2891 = vmatpush1.xpose.msra.mxu0 0.0
    %2892 = vmatprep.subr.mxu0 0.0
    %2893 = vmatpush1.xpose.msra.mxu0 0.0
    %2894 = vmatprep.subr.mxu0 %v126
    %2895 = vmatpush1.xpose.msra.mxu0 %v125
    %2896 = vmatprep.subr.mxu0 0.0
    %2897 = vmatpush2.xpose.msra.mxu0 0.0
    %2898 = vmatprep.subr.mxu0 0.0
    %2899 = vmatpush2.xpose.msra.mxu0 0.0
    %2900 = vmatprep.subr.mxu0 0.0
    %2901 = vmatpush2.xpose.msra.mxu0 0.0
    %2902 = vmatprep.subr.mxu0 0.0
    %2903 = vmatpush2.xpose.msra.mxu0 0.0
    %2904 = vmatprep.subr.mxu0 0.0
    %2905 = vmatpush2.xpose.msra.mxu0 0.0
    %2906 = vmatprep.subr.mxu0 0.0
    %2907 = vmatpush2.xpose.msra.mxu0 0.0
    %2908 = vmatprep.subr.mxu0 0.0
    %2909 = vmatpush2.xpose.msra.mxu0 0.0
    %2910 = vmatprep.subr.mxu0 0.0
    %2911 = vmatpush2.xpose.msra.mxu0 0.0
    %2912 = vmatprep.subr.mxu0 0.0
    %2913 = vmatpush2.xpose.msra.mxu0 0.0
    %2914 = vmatprep.subr.mxu0 0.0
    %2915 = vmatpush2.xpose.msra.mxu0 0.0
    %2916 = vmatprep.subr.mxu0 0.0
    %2917 = vmatpush2.xpose.msra.mxu0 0.0
    %2918 = vmatprep.subr.mxu0 0.0
    %2919 = vmatpush2.xpose.msra.mxu0 0.0
    %2920 = vmatprep.subr.mxu0 0.0
    %2921 = vmatpush2.xpose.msra.mxu0 0.0
    %2922 = vmatprep.subr.mxu0 0.0
    %2923 = vmatpush2.xpose.msra.mxu0 0.0
    %2924 = vmatprep.subr.mxu0 0.0
    %2925 = vmatpush2.xpose.msra.mxu0 0.0
    %2926 = vmatprep.subr.mxu0 0.0
    %2927 = vmatpush2.xpose.msra.mxu0 0.0
    %2928 = vmatprep.mubr.f32.mxu0 %v461
    %2929 = vmatmul.mubr.f32.gmra.mxu0 %v459
    %v2930 = vpop.f32.mrf.mxu0
    %v2931 = vadd.f32 %v2861, %v2930
    %v2932 = vpop.f32.mrf.mxu0
    %2933 = vdwg.mxu0
    %2934 = vmatprep.subr.mxu0 0.0
    %2935 = vmatpush1.xpose.msra.mxu0 0.0
    %2936 = vmatprep.subr.mxu0 0.0
    %2937 = vmatpush1.xpose.msra.mxu0 0.0
    %2938 = vmatprep.subr.mxu0 0.0
    %2939 = vmatpush1.xpose.msra.mxu0 0.0
    %2940 = vmatprep.subr.mxu0 0.0
    %2941 = vmatpush1.xpose.msra.mxu0 0.0
    %2942 = vmatprep.subr.mxu0 0.0
    %2943 = vmatpush1.xpose.msra.mxu0 0.0
    %2944 = vmatprep.subr.mxu0 0.0
    %2945 = vmatpush1.xpose.msra.mxu0 0.0
    %2946 = vmatprep.subr.mxu0 0.0
    %2947 = vmatpush1.xpose.msra.mxu0 0.0
    %2948 = vmatprep.subr.mxu0 0.0
    %2949 = vmatpush1.xpose.msra.mxu0 0.0
    %2950 = vmatprep.subr.mxu0 0.0
    %2951 = vmatpush1.xpose.msra.mxu0 0.0
    %2952 = vmatprep.subr.mxu0 0.0
    %2953 = vmatpush1.xpose.msra.mxu0 0.0
    %2954 = vmatprep.subr.mxu0 0.0
    %2955 = vmatpush1.xpose.msra.mxu0 0.0
    %2956 = vmatprep.subr.mxu0 0.0
    %2957 = vmatpush1.xpose.msra.mxu0 0.0
    %2958 = vmatprep.subr.mxu0 0.0
    %2959 = vmatpush1.xpose.msra.mxu0 0.0
    %2960 = vmatprep.subr.mxu0 0.0
    %2961 = vmatpush1.xpose.msra.mxu0 0.0
    %2962 = vmatprep.subr.mxu0 0.0
    %2963 = vmatpush1.xpose.msra.mxu0 0.0
    %2964 = vmatprep.subr.mxu0 %v128
    %2965 = vmatpush1.xpose.msra.mxu0 %v127
    %2966 = vmatprep.subr.mxu0 0.0
    %2967 = vmatpush2.xpose.msra.mxu0 0.0
    %2968 = vmatprep.subr.mxu0 0.0
    %2969 = vmatpush2.xpose.msra.mxu0 0.0
    %2970 = vmatprep.subr.mxu0 0.0
    %2971 = vmatpush2.xpose.msra.mxu0 0.0
    %2972 = vmatprep.subr.mxu0 0.0
    %2973 = vmatpush2.xpose.msra.mxu0 0.0
    %2974 = vmatprep.subr.mxu0 0.0
    %2975 = vmatpush2.xpose.msra.mxu0 0.0
    %2976 = vmatprep.subr.mxu0 0.0
    %2977 = vmatpush2.xpose.msra.mxu0 0.0
    %2978 = vmatprep.subr.mxu0 0.0
    %2979 = vmatpush2.xpose.msra.mxu0 0.0
    %2980 = vmatprep.subr.mxu0 0.0
    %2981 = vmatpush2.xpose.msra.mxu0 0.0
    %2982 = vmatprep.subr.mxu0 0.0
    %2983 = vmatpush2.xpose.msra.mxu0 0.0
    %2984 = vmatprep.subr.mxu0 0.0
    %2985 = vmatpush2.xpose.msra.mxu0 0.0
    %2986 = vmatprep.subr.mxu0 0.0
    %2987 = vmatpush2.xpose.msra.mxu0 0.0
    %2988 = vmatprep.subr.mxu0 0.0
    %2989 = vmatpush2.xpose.msra.mxu0 0.0
    %2990 = vmatprep.subr.mxu0 0.0
    %2991 = vmatpush2.xpose.msra.mxu0 0.0
    %2992 = vmatprep.subr.mxu0 0.0
    %2993 = vmatpush2.xpose.msra.mxu0 0.0
    %2994 = vmatprep.subr.mxu0 0.0
    %2995 = vmatpush2.xpose.msra.mxu0 0.0
    %2996 = vmatprep.subr.mxu0 0.0
    %2997 = vmatpush2.xpose.msra.mxu0 0.0
    %2998 = vmatprep.mubr.f32.mxu0 %v477
    %2999 = vmatmul.mubr.f32.gmra.mxu0 %v469
    %v3000 = vpop.f32.mrf.mxu0
    %v3001 = vadd.f32 %v2931, %v3000
    %v3002 = vpop.f32.mrf.mxu0
    %3003 = vdwg.mxu0
    %3004 = vmatprep.subr.mxu0 0.0
    %3005 = vmatpush1.xpose.msra.mxu0 0.0
    %3006 = vmatprep.subr.mxu0 0.0
    %3007 = vmatpush1.xpose.msra.mxu0 0.0
    %3008 = vmatprep.subr.mxu0 0.0
    %3009 = vmatpush1.xpose.msra.mxu0 0.0
    %3010 = vmatprep.subr.mxu0 0.0
    %3011 = vmatpush1.xpose.msra.mxu0 0.0
    %3012 = vmatprep.subr.mxu0 0.0
    %3013 = vmatpush1.xpose.msra.mxu0 0.0
    %3014 = vmatprep.subr.mxu0 0.0
    %3015 = vmatpush1.xpose.msra.mxu0 0.0
    %3016 = vmatprep.subr.mxu0 0.0
    %3017 = vmatpush1.xpose.msra.mxu0 0.0
    %3018 = vmatprep.subr.mxu0 0.0
    %3019 = vmatpush1.xpose.msra.mxu0 0.0
    %3020 = vmatprep.subr.mxu0 0.0
    %3021 = vmatpush1.xpose.msra.mxu0 0.0
    %3022 = vmatprep.subr.mxu0 0.0
    %3023 = vmatpush1.xpose.msra.mxu0 0.0
    %3024 = vmatprep.subr.mxu0 0.0
    %3025 = vmatpush1.xpose.msra.mxu0 0.0
    %3026 = vmatprep.subr.mxu0 0.0
    %3027 = vmatpush1.xpose.msra.mxu0 0.0
    %3028 = vmatprep.subr.mxu0 0.0
    %3029 = vmatpush1.xpose.msra.mxu0 0.0
    %3030 = vmatprep.subr.mxu0 0.0
    %3031 = vmatpush1.xpose.msra.mxu0 0.0
    %3032 = vmatprep.subr.mxu0 0.0
    %3033 = vmatpush1.xpose.msra.mxu0 0.0
    %3034 = vmatprep.subr.mxu0 %v130
    %3035 = vmatpush1.xpose.msra.mxu0 %v129
    %3036 = vmatprep.subr.mxu0 0.0
    %3037 = vmatpush2.xpose.msra.mxu0 0.0
    %3038 = vmatprep.subr.mxu0 0.0
    %3039 = vmatpush2.xpose.msra.mxu0 0.0
    %3040 = vmatprep.subr.mxu0 0.0
    %3041 = vmatpush2.xpose.msra.mxu0 0.0
    %3042 = vmatprep.subr.mxu0 0.0
    %3043 = vmatpush2.xpose.msra.mxu0 0.0
    %3044 = vmatprep.subr.mxu0 0.0
    %3045 = vmatpush2.xpose.msra.mxu0 0.0
    %3046 = vmatprep.subr.mxu0 0.0
    %3047 = vmatpush2.xpose.msra.mxu0 0.0
    %3048 = vmatprep.subr.mxu0 0.0
    %3049 = vmatpush2.xpose.msra.mxu0 0.0
    %3050 = vmatprep.subr.mxu0 0.0
    %3051 = vmatpush2.xpose.msra.mxu0 0.0
    %3052 = vmatprep.subr.mxu0 0.0
    %3053 = vmatpush2.xpose.msra.mxu0 0.0
    %3054 = vmatprep.subr.mxu0 0.0
    %3055 = vmatpush2.xpose.msra.mxu0 0.0
    %3056 = vmatprep.subr.mxu0 0.0
    %3057 = vmatpush2.xpose.msra.mxu0 0.0
    %3058 = vmatprep.subr.mxu0 0.0
    %3059 = vmatpush2.xpose.msra.mxu0 0.0
    %3060 = vmatprep.subr.mxu0 0.0
    %3061 = vmatpush2.xpose.msra.mxu0 0.0
    %3062 = vmatprep.subr.mxu0 0.0
    %3063 = vmatpush2.xpose.msra.mxu0 0.0
    %3064 = vmatprep.subr.mxu0 0.0
    %3065 = vmatpush2.xpose.msra.mxu0 0.0
    %3066 = vmatprep.subr.mxu0 0.0
    %3067 = vmatpush2.xpose.msra.mxu0 0.0
    %3068 = vmatprep.mubr.f32.mxu0 %v478
    %3069 = vmatmul.mubr.f32.gmra.mxu0 %v476
    %v3070 = vpop.f32.mrf.mxu0
    %v3071 = vadd.f32 %v3001, %v3070
    %v3072 = vpop.f32.mrf.mxu0
    %3073 = vdwg.mxu0
    %3074 = vmatprep.subr.mxu0 0.0
    %3075 = vmatpush1.xpose.msra.mxu0 0.0
    %3076 = vmatprep.subr.mxu0 0.0
    %3077 = vmatpush1.xpose.msra.mxu0 0.0
    %3078 = vmatprep.subr.mxu0 0.0
    %3079 = vmatpush1.xpose.msra.mxu0 0.0
    %3080 = vmatprep.subr.mxu0 0.0
    %3081 = vmatpush1.xpose.msra.mxu0 0.0
    %3082 = vmatprep.subr.mxu0 0.0
    %3083 = vmatpush1.xpose.msra.mxu0 0.0
    %3084 = vmatprep.subr.mxu0 0.0
    %3085 = vmatpush1.xpose.msra.mxu0 0.0
    %3086 = vmatprep.subr.mxu0 0.0
    %3087 = vmatpush1.xpose.msra.mxu0 0.0
    %3088 = vmatprep.subr.mxu0 0.0
    %3089 = vmatpush1.xpose.msra.mxu0 0.0
    %3090 = vmatprep.subr.mxu0 0.0
    %3091 = vmatpush1.xpose.msra.mxu0 0.0
    %3092 = vmatprep.subr.mxu0 0.0
    %3093 = vmatpush1.xpose.msra.mxu0 0.0
    %3094 = vmatprep.subr.mxu0 0.0
    %3095 = vmatpush1.xpose.msra.mxu0 0.0
    %3096 = vmatprep.subr.mxu0 0.0
    %3097 = vmatpush1.xpose.msra.mxu0 0.0
    %3098 = vmatprep.subr.mxu0 0.0
    %3099 = vmatpush1.xpose.msra.mxu0 0.0
    %3100 = vmatprep.subr.mxu0 0.0
    %3101 = vmatpush1.xpose.msra.mxu0 0.0
    %3102 = vmatprep.subr.mxu0 0.0
    %3103 = vmatpush1.xpose.msra.mxu0 0.0
    %3104 = vmatprep.subr.mxu0 %v132
    %3105 = vmatpush1.xpose.msra.mxu0 %v131
    %3106 = vmatprep.subr.mxu0 0.0
    %3107 = vmatpush2.xpose.msra.mxu0 0.0
    %3108 = vmatprep.subr.mxu0 0.0
    %3109 = vmatpush2.xpose.msra.mxu0 0.0
    %3110 = vmatprep.subr.mxu0 0.0
    %3111 = vmatpush2.xpose.msra.mxu0 0.0
    %3112 = vmatprep.subr.mxu0 0.0
    %3113 = vmatpush2.xpose.msra.mxu0 0.0
    %3114 = vmatprep.subr.mxu0 0.0
    %3115 = vmatpush2.xpose.msra.mxu0 0.0
    %3116 = vmatprep.subr.mxu0 0.0
    %3117 = vmatpush2.xpose.msra.mxu0 0.0
    %3118 = vmatprep.subr.mxu0 0.0
    %3119 = vmatpush2.xpose.msra.mxu0 0.0
    %3120 = vmatprep.subr.mxu0 0.0
    %3121 = vmatpush2.xpose.msra.mxu0 0.0
    %3122 = vmatprep.subr.mxu0 0.0
    %3123 = vmatpush2.xpose.msra.mxu0 0.0
    %3124 = vmatprep.subr.mxu0 0.0
    %3125 = vmatpush2.xpose.msra.mxu0 0.0
    %3126 = vmatprep.subr.mxu0 0.0
    %3127 = vmatpush2.xpose.msra.mxu0 0.0
    %3128 = vmatprep.subr.mxu0 0.0
    %3129 = vmatpush2.xpose.msra.mxu0 0.0
    %3130 = vmatprep.subr.mxu0 0.0
    %3131 = vmatpush2.xpose.msra.mxu0 0.0
    %3132 = vmatprep.subr.mxu0 0.0
    %3133 = vmatpush2.xpose.msra.mxu0 0.0
    %3134 = vmatprep.subr.mxu0 0.0
    %3135 = vmatpush2.xpose.msra.mxu0 0.0
    %3136 = vmatprep.subr.mxu0 0.0
    %3137 = vmatpush2.xpose.msra.mxu0 0.0
    %3138 = vmatprep.mubr.f32.mxu0 %v494
    %3139 = vmatmul.mubr.f32.gmra.mxu0 %v486
    %v3140 = vpop.f32.mrf.mxu0
    %v3141 = vadd.f32 %v3071, %v3140
    %v3142 = vpop.f32.mrf.mxu0
    %3143 = vdwg.mxu0
    %3144 = vmatprep.subr.mxu0 0.0
    %3145 = vmatpush1.xpose.msra.mxu0 0.0
    %3146 = vmatprep.subr.mxu0 0.0
    %3147 = vmatpush1.xpose.msra.mxu0 0.0
    %3148 = vmatprep.subr.mxu0 0.0
    %3149 = vmatpush1.xpose.msra.mxu0 0.0
    %3150 = vmatprep.subr.mxu0 0.0
    %3151 = vmatpush1.xpose.msra.mxu0 0.0
    %3152 = vmatprep.subr.mxu0 0.0
    %3153 = vmatpush1.xpose.msra.mxu0 0.0
    %3154 = vmatprep.subr.mxu0 0.0
    %3155 = vmatpush1.xpose.msra.mxu0 0.0
    %3156 = vmatprep.subr.mxu0 0.0
    %3157 = vmatpush1.xpose.msra.mxu0 0.0
    %3158 = vmatprep.subr.mxu0 0.0
    %3159 = vmatpush1.xpose.msra.mxu0 0.0
    %3160 = vmatprep.subr.mxu0 0.0
    %3161 = vmatpush1.xpose.msra.mxu0 0.0
    %3162 = vmatprep.subr.mxu0 0.0
    %3163 = vmatpush1.xpose.msra.mxu0 0.0
    %3164 = vmatprep.subr.mxu0 0.0
    %3165 = vmatpush1.xpose.msra.mxu0 0.0
    %3166 = vmatprep.subr.mxu0 0.0
    %3167 = vmatpush1.xpose.msra.mxu0 0.0
    %3168 = vmatprep.subr.mxu0 0.0
    %3169 = vmatpush1.xpose.msra.mxu0 0.0
    %3170 = vmatprep.subr.mxu0 0.0
    %3171 = vmatpush1.xpose.msra.mxu0 0.0
    %3172 = vmatprep.subr.mxu0 0.0
    %3173 = vmatpush1.xpose.msra.mxu0 0.0
    %3174 = vmatprep.subr.mxu0 %v134
    %3175 = vmatpush1.xpose.msra.mxu0 %v133
    %3176 = vmatprep.subr.mxu0 0.0
    %3177 = vmatpush2.xpose.msra.mxu0 0.0
    %3178 = vmatprep.subr.mxu0 0.0
    %3179 = vmatpush2.xpose.msra.mxu0 0.0
    %3180 = vmatprep.subr.mxu0 0.0
    %3181 = vmatpush2.xpose.msra.mxu0 0.0
    %3182 = vmatprep.subr.mxu0 0.0
    %3183 = vmatpush2.xpose.msra.mxu0 0.0
    %3184 = vmatprep.subr.mxu0 0.0
    %3185 = vmatpush2.xpose.msra.mxu0 0.0
    %3186 = vmatprep.subr.mxu0 0.0
    %3187 = vmatpush2.xpose.msra.mxu0 0.0
    %3188 = vmatprep.subr.mxu0 0.0
    %3189 = vmatpush2.xpose.msra.mxu0 0.0
    %3190 = vmatprep.subr.mxu0 0.0
    %3191 = vmatpush2.xpose.msra.mxu0 0.0
    %3192 = vmatprep.subr.mxu0 0.0
    %3193 = vmatpush2.xpose.msra.mxu0 0.0
    %3194 = vmatprep.subr.mxu0 0.0
    %3195 = vmatpush2.xpose.msra.mxu0 0.0
    %3196 = vmatprep.subr.mxu0 0.0
    %3197 = vmatpush2.xpose.msra.mxu0 0.0
    %3198 = vmatprep.subr.mxu0 0.0
    %3199 = vmatpush2.xpose.msra.mxu0 0.0
    %3200 = vmatprep.subr.mxu0 0.0
    %3201 = vmatpush2.xpose.msra.mxu0 0.0
    %3202 = vmatprep.subr.mxu0 0.0
    %3203 = vmatpush2.xpose.msra.mxu0 0.0
    %3204 = vmatprep.subr.mxu0 0.0
    %3205 = vmatpush2.xpose.msra.mxu0 0.0
    %3206 = vmatprep.subr.mxu0 0.0
    %3207 = vmatpush2.xpose.msra.mxu0 0.0
    %3208 = vmatprep.mubr.f32.mxu0 %v495
    %3209 = vmatmul.mubr.f32.gmra.mxu0 %v493
    %v3210 = vpop.f32.mrf.mxu0
    %v3211 = vadd.f32 %v3141, %v3210
    %v3212 = vpop.f32.mrf.mxu0
    %3213 = vdwg.mxu0
    %3214 = vmatprep.subr.mxu0 0.0
    %3215 = vmatpush1.xpose.msra.mxu0 0.0
    %3216 = vmatprep.subr.mxu0 0.0
    %3217 = vmatpush1.xpose.msra.mxu0 0.0
    %3218 = vmatprep.subr.mxu0 0.0
    %3219 = vmatpush1.xpose.msra.mxu0 0.0
    %3220 = vmatprep.subr.mxu0 0.0
    %3221 = vmatpush1.xpose.msra.mxu0 0.0
    %3222 = vmatprep.subr.mxu0 0.0
    %3223 = vmatpush1.xpose.msra.mxu0 0.0
    %3224 = vmatprep.subr.mxu0 0.0
    %3225 = vmatpush1.xpose.msra.mxu0 0.0
    %3226 = vmatprep.subr.mxu0 0.0
    %3227 = vmatpush1.xpose.msra.mxu0 0.0
    %3228 = vmatprep.subr.mxu0 0.0
    %3229 = vmatpush1.xpose.msra.mxu0 0.0
    %3230 = vmatprep.subr.mxu0 0.0
    %3231 = vmatpush1.xpose.msra.mxu0 0.0
    %3232 = vmatprep.subr.mxu0 0.0
    %3233 = vmatpush1.xpose.msra.mxu0 0.0
    %3234 = vmatprep.subr.mxu0 0.0
    %3235 = vmatpush1.xpose.msra.mxu0 0.0
    %3236 = vmatprep.subr.mxu0 0.0
    %3237 = vmatpush1.xpose.msra.mxu0 0.0
    %3238 = vmatprep.subr.mxu0 0.0
    %3239 = vmatpush1.xpose.msra.mxu0 0.0
    %3240 = vmatprep.subr.mxu0 0.0
    %3241 = vmatpush1.xpose.msra.mxu0 0.0
    %3242 = vmatprep.subr.mxu0 0.0
    %3243 = vmatpush1.xpose.msra.mxu0 0.0
    %3244 = vmatprep.subr.mxu0 %v136
    %3245 = vmatpush1.xpose.msra.mxu0 %v135
    %3246 = vmatprep.subr.mxu0 0.0
    %3247 = vmatpush2.xpose.msra.mxu0 0.0
    %3248 = vmatprep.subr.mxu0 0.0
    %3249 = vmatpush2.xpose.msra.mxu0 0.0
    %3250 = vmatprep.subr.mxu0 0.0
    %3251 = vmatpush2.xpose.msra.mxu0 0.0
    %3252 = vmatprep.subr.mxu0 0.0
    %3253 = vmatpush2.xpose.msra.mxu0 0.0
    %3254 = vmatprep.subr.mxu0 0.0
    %3255 = vmatpush2.xpose.msra.mxu0 0.0
    %3256 = vmatprep.subr.mxu0 0.0
    %3257 = vmatpush2.xpose.msra.mxu0 0.0
    %3258 = vmatprep.subr.mxu0 0.0
    %3259 = vmatpush2.xpose.msra.mxu0 0.0
    %3260 = vmatprep.subr.mxu0 0.0
    %3261 = vmatpush2.xpose.msra.mxu0 0.0
    %3262 = vmatprep.subr.mxu0 0.0
    %3263 = vmatpush2.xpose.msra.mxu0 0.0
    %3264 = vmatprep.subr.mxu0 0.0
    %3265 = vmatpush2.xpose.msra.mxu0 0.0
    %3266 = vmatprep.subr.mxu0 0.0
    %3267 = vmatpush2.xpose.msra.mxu0 0.0
    %3268 = vmatprep.subr.mxu0 0.0
    %3269 = vmatpush2.xpose.msra.mxu0 0.0
    %3270 = vmatprep.subr.mxu0 0.0
    %3271 = vmatpush2.xpose.msra.mxu0 0.0
    %3272 = vmatprep.subr.mxu0 0.0
    %3273 = vmatpush2.xpose.msra.mxu0 0.0
    %3274 = vmatprep.subr.mxu0 0.0
    %3275 = vmatpush2.xpose.msra.mxu0 0.0
    %3276 = vmatprep.subr.mxu0 0.0
    %3277 = vmatpush2.xpose.msra.mxu0 0.0
    %3278 = vmatprep.mubr.f32.mxu0 %v511
    %3279 = vmatmul.mubr.f32.gmra.mxu0 %v503
    %v3280 = vpop.f32.mrf.mxu0
    %v3281 = vadd.f32 %v3211, %v3280
    %v3282 = vpop.f32.mrf.mxu0
    %3283 = vdwg.mxu0
    %3284 = vmatprep.subr.mxu0 0.0
    %3285 = vmatpush1.xpose.msra.mxu0 0.0
    %3286 = vmatprep.subr.mxu0 0.0
    %3287 = vmatpush1.xpose.msra.mxu0 0.0
    %3288 = vmatprep.subr.mxu0 0.0
    %3289 = vmatpush1.xpose.msra.mxu0 0.0
    %3290 = vmatprep.subr.mxu0 0.0
    %3291 = vmatpush1.xpose.msra.mxu0 0.0
    %3292 = vmatprep.subr.mxu0 0.0
    %3293 = vmatpush1.xpose.msra.mxu0 0.0
    %3294 = vmatprep.subr.mxu0 0.0
    %3295 = vmatpush1.xpose.msra.mxu0 0.0
    %3296 = vmatprep.subr.mxu0 0.0
    %3297 = vmatpush1.xpose.msra.mxu0 0.0
    %3298 = vmatprep.subr.mxu0 0.0
    %3299 = vmatpush1.xpose.msra.mxu0 0.0
    %3300 = vmatprep.subr.mxu0 0.0
    %3301 = vmatpush1.xpose.msra.mxu0 0.0
    %3302 = vmatprep.subr.mxu0 0.0
    %3303 = vmatpush1.xpose.msra.mxu0 0.0
    %3304 = vmatprep.subr.mxu0 0.0
    %3305 = vmatpush1.xpose.msra.mxu0 0.0
    %3306 = vmatprep.subr.mxu0 0.0
    %3307 = vmatpush1.xpose.msra.mxu0 0.0
    %3308 = vmatprep.subr.mxu0 0.0
    %3309 = vmatpush1.xpose.msra.mxu0 0.0
    %3310 = vmatprep.subr.mxu0 0.0
    %3311 = vmatpush1.xpose.msra.mxu0 0.0
    %3312 = vmatprep.subr.mxu0 0.0
    %3313 = vmatpush1.xpose.msra.mxu0 0.0
    %3314 = vmatprep.subr.mxu0 %v138
    %3315 = vmatpush1.xpose.msra.mxu0 %v137
    %3316 = vmatprep.subr.mxu0 0.0
    %3317 = vmatpush2.xpose.msra.mxu0 0.0
    %3318 = vmatprep.subr.mxu0 0.0
    %3319 = vmatpush2.xpose.msra.mxu0 0.0
    %3320 = vmatprep.subr.mxu0 0.0
    %3321 = vmatpush2.xpose.msra.mxu0 0.0
    %3322 = vmatprep.subr.mxu0 0.0
    %3323 = vmatpush2.xpose.msra.mxu0 0.0
    %3324 = vmatprep.subr.mxu0 0.0
    %3325 = vmatpush2.xpose.msra.mxu0 0.0
    %3326 = vmatprep.subr.mxu0 0.0
    %3327 = vmatpush2.xpose.msra.mxu0 0.0
    %3328 = vmatprep.subr.mxu0 0.0
    %3329 = vmatpush2.xpose.msra.mxu0 0.0
    %3330 = vmatprep.subr.mxu0 0.0
    %3331 = vmatpush2.xpose.msra.mxu0 0.0
    %3332 = vmatprep.subr.mxu0 0.0
    %3333 = vmatpush2.xpose.msra.mxu0 0.0
    %3334 = vmatprep.subr.mxu0 0.0
    %3335 = vmatpush2.xpose.msra.mxu0 0.0
    %3336 = vmatprep.subr.mxu0 0.0
    %3337 = vmatpush2.xpose.msra.mxu0 0.0
    %3338 = vmatprep.subr.mxu0 0.0
    %3339 = vmatpush2.xpose.msra.mxu0 0.0
    %3340 = vmatprep.subr.mxu0 0.0
    %3341 = vmatpush2.xpose.msra.mxu0 0.0
    %3342 = vmatprep.subr.mxu0 0.0
    %3343 = vmatpush2.xpose.msra.mxu0 0.0
    %3344 = vmatprep.subr.mxu0 0.0
    %3345 = vmatpush2.xpose.msra.mxu0 0.0
    %3346 = vmatprep.subr.mxu0 0.0
    %3347 = vmatpush2.xpose.msra.mxu0 0.0
    %3348 = vmatprep.mubr.f32.mxu0 %v512
    %3349 = vmatmul.mubr.f32.gmra.mxu0 %v510
    %v3350 = vpop.f32.mrf.mxu0
    %v3351 = vadd.f32 %v3281, %v3350
    %v3352 = vpop.f32.mrf.mxu0
    %3353 = vdwg.mxu0
    %3354 = vmatprep.subr.mxu0 0.0
    %3355 = vmatpush1.xpose.msra.mxu0 0.0
    %3356 = vmatprep.subr.mxu0 0.0
    %3357 = vmatpush1.xpose.msra.mxu0 0.0
    %3358 = vmatprep.subr.mxu0 0.0
    %3359 = vmatpush1.xpose.msra.mxu0 0.0
    %3360 = vmatprep.subr.mxu0 0.0
    %3361 = vmatpush1.xpose.msra.mxu0 0.0
    %3362 = vmatprep.subr.mxu0 0.0
    %3363 = vmatpush1.xpose.msra.mxu0 0.0
    %3364 = vmatprep.subr.mxu0 0.0
    %3365 = vmatpush1.xpose.msra.mxu0 0.0
    %3366 = vmatprep.subr.mxu0 0.0
    %3367 = vmatpush1.xpose.msra.mxu0 0.0
    %3368 = vmatprep.subr.mxu0 0.0
    %3369 = vmatpush1.xpose.msra.mxu0 0.0
    %3370 = vmatprep.subr.mxu0 0.0
    %3371 = vmatpush1.xpose.msra.mxu0 0.0
    %3372 = vmatprep.subr.mxu0 0.0
    %3373 = vmatpush1.xpose.msra.mxu0 0.0
    %3374 = vmatprep.subr.mxu0 0.0
    %3375 = vmatpush1.xpose.msra.mxu0 0.0
    %3376 = vmatprep.subr.mxu0 0.0
    %3377 = vmatpush1.xpose.msra.mxu0 0.0
    %3378 = vmatprep.subr.mxu0 0.0
    %3379 = vmatpush1.xpose.msra.mxu0 0.0
    %3380 = vmatprep.subr.mxu0 0.0
    %3381 = vmatpush1.xpose.msra.mxu0 0.0
    %3382 = vmatprep.subr.mxu0 0.0
    %3383 = vmatpush1.xpose.msra.mxu0 0.0
    %3384 = vmatprep.subr.mxu0 %v140
    %3385 = vmatpush1.xpose.msra.mxu0 %v139
    %3386 = vmatprep.subr.mxu0 0.0
    %3387 = vmatpush2.xpose.msra.mxu0 0.0
    %3388 = vmatprep.subr.mxu0 0.0
    %3389 = vmatpush2.xpose.msra.mxu0 0.0
    %3390 = vmatprep.subr.mxu0 0.0
    %3391 = vmatpush2.xpose.msra.mxu0 0.0
    %3392 = vmatprep.subr.mxu0 0.0
    %3393 = vmatpush2.xpose.msra.mxu0 0.0
    %3394 = vmatprep.subr.mxu0 0.0
    %3395 = vmatpush2.xpose.msra.mxu0 0.0
    %3396 = vmatprep.subr.mxu0 0.0
    %3397 = vmatpush2.xpose.msra.mxu0 0.0
    %3398 = vmatprep.subr.mxu0 0.0
    %3399 = vmatpush2.xpose.msra.mxu0 0.0
    %3400 = vmatprep.subr.mxu0 0.0
    %3401 = vmatpush2.xpose.msra.mxu0 0.0
    %3402 = vmatprep.subr.mxu0 0.0
    %3403 = vmatpush2.xpose.msra.mxu0 0.0
    %3404 = vmatprep.subr.mxu0 0.0
    %3405 = vmatpush2.xpose.msra.mxu0 0.0
    %3406 = vmatprep.subr.mxu0 0.0
    %3407 = vmatpush2.xpose.msra.mxu0 0.0
    %3408 = vmatprep.subr.mxu0 0.0
    %3409 = vmatpush2.xpose.msra.mxu0 0.0
    %3410 = vmatprep.subr.mxu0 0.0
    %3411 = vmatpush2.xpose.msra.mxu0 0.0
    %3412 = vmatprep.subr.mxu0 0.0
    %3413 = vmatpush2.xpose.msra.mxu0 0.0
    %3414 = vmatprep.subr.mxu0 0.0
    %3415 = vmatpush2.xpose.msra.mxu0 0.0
    %3416 = vmatprep.subr.mxu0 0.0
    %3417 = vmatpush2.xpose.msra.mxu0 0.0
    %3418 = vmatprep.mubr.f32.mxu0 %v528
    %3419 = vmatmul.mubr.f32.gmra.mxu0 %v520
    %v3420 = vpop.f32.mrf.mxu0
    %v3421 = vadd.f32 %v3351, %v3420
    %v3422 = vpop.f32.mrf.mxu0
    %3423 = vdwg.mxu0
    %3424 = vmatprep.subr.mxu0 0.0
    %3425 = vmatpush1.xpose.msra.mxu0 0.0
    %3426 = vmatprep.subr.mxu0 0.0
    %3427 = vmatpush1.xpose.msra.mxu0 0.0
    %3428 = vmatprep.subr.mxu0 0.0
    %3429 = vmatpush1.xpose.msra.mxu0 0.0
    %3430 = vmatprep.subr.mxu0 0.0
    %3431 = vmatpush1.xpose.msra.mxu0 0.0
    %3432 = vmatprep.subr.mxu0 0.0
    %3433 = vmatpush1.xpose.msra.mxu0 0.0
    %3434 = vmatprep.subr.mxu0 0.0
    %3435 = vmatpush1.xpose.msra.mxu0 0.0
    %3436 = vmatprep.subr.mxu0 0.0
    %3437 = vmatpush1.xpose.msra.mxu0 0.0
    %3438 = vmatprep.subr.mxu0 0.0
    %3439 = vmatpush1.xpose.msra.mxu0 0.0
    %3440 = vmatprep.subr.mxu0 0.0
    %3441 = vmatpush1.xpose.msra.mxu0 0.0
    %3442 = vmatprep.subr.mxu0 0.0
    %3443 = vmatpush1.xpose.msra.mxu0 0.0
    %3444 = vmatprep.subr.mxu0 0.0
    %3445 = vmatpush1.xpose.msra.mxu0 0.0
    %3446 = vmatprep.subr.mxu0 0.0
    %3447 = vmatpush1.xpose.msra.mxu0 0.0
    %3448 = vmatprep.subr.mxu0 0.0
    %3449 = vmatpush1.xpose.msra.mxu0 0.0
    %3450 = vmatprep.subr.mxu0 0.0
    %3451 = vmatpush1.xpose.msra.mxu0 0.0
    %3452 = vmatprep.subr.mxu0 0.0
    %3453 = vmatpush1.xpose.msra.mxu0 0.0
    %3454 = vmatprep.subr.mxu0 %v142
    %3455 = vmatpush1.xpose.msra.mxu0 %v141
    %3456 = vmatprep.subr.mxu0 0.0
    %3457 = vmatpush2.xpose.msra.mxu0 0.0
    %3458 = vmatprep.subr.mxu0 0.0
    %3459 = vmatpush2.xpose.msra.mxu0 0.0
    %3460 = vmatprep.subr.mxu0 0.0
    %3461 = vmatpush2.xpose.msra.mxu0 0.0
    %3462 = vmatprep.subr.mxu0 0.0
    %3463 = vmatpush2.xpose.msra.mxu0 0.0
    %3464 = vmatprep.subr.mxu0 0.0
    %3465 = vmatpush2.xpose.msra.mxu0 0.0
    %3466 = vmatprep.subr.mxu0 0.0
    %3467 = vmatpush2.xpose.msra.mxu0 0.0
    %3468 = vmatprep.subr.mxu0 0.0
    %3469 = vmatpush2.xpose.msra.mxu0 0.0
    %3470 = vmatprep.subr.mxu0 0.0
    %3471 = vmatpush2.xpose.msra.mxu0 0.0
    %3472 = vmatprep.subr.mxu0 0.0
    %3473 = vmatpush2.xpose.msra.mxu0 0.0
    %3474 = vmatprep.subr.mxu0 0.0
    %3475 = vmatpush2.xpose.msra.mxu0 0.0
    %3476 = vmatprep.subr.mxu0 0.0
    %3477 = vmatpush2.xpose.msra.mxu0 0.0
    %3478 = vmatprep.subr.mxu0 0.0
    %3479 = vmatpush2.xpose.msra.mxu0 0.0
    %3480 = vmatprep.subr.mxu0 0.0
    %3481 = vmatpush2.xpose.msra.mxu0 0.0
    %3482 = vmatprep.subr.mxu0 0.0
    %3483 = vmatpush2.xpose.msra.mxu0 0.0
    %3484 = vmatprep.subr.mxu0 0.0
    %3485 = vmatpush2.xpose.msra.mxu0 0.0
    %3486 = vmatprep.subr.mxu0 0.0
    %3487 = vmatpush2.xpose.msra.mxu0 0.0
    %3488 = vmatprep.mubr.f32.mxu0 %v529
    %3489 = vmatmul.mubr.f32.gmra.mxu0 %v527
    %v3490 = vpop.f32.mrf.mxu0
    %v3491 = vadd.f32 %v3421, %v3490
    %v3492 = vpop.f32.mrf.mxu0
    %3493 = vdwg.mxu0
    %3494 = vmatprep.subr.mxu0 0.0
    %3495 = vmatpush1.xpose.msra.mxu0 0.0
    %3496 = vmatprep.subr.mxu0 0.0
    %3497 = vmatpush1.xpose.msra.mxu0 0.0
    %3498 = vmatprep.subr.mxu0 0.0
    %3499 = vmatpush1.xpose.msra.mxu0 0.0
    %3500 = vmatprep.subr.mxu0 0.0
    %3501 = vmatpush1.xpose.msra.mxu0 0.0
    %3502 = vmatprep.subr.mxu0 0.0
    %3503 = vmatpush1.xpose.msra.mxu0 0.0
    %3504 = vmatprep.subr.mxu0 0.0
    %3505 = vmatpush1.xpose.msra.mxu0 0.0
    %3506 = vmatprep.subr.mxu0 0.0
    %3507 = vmatpush1.xpose.msra.mxu0 0.0
    %3508 = vmatprep.subr.mxu0 0.0
    %3509 = vmatpush1.xpose.msra.mxu0 0.0
    %3510 = vmatprep.subr.mxu0 0.0
    %3511 = vmatpush1.xpose.msra.mxu0 0.0
    %3512 = vmatprep.subr.mxu0 0.0
    %3513 = vmatpush1.xpose.msra.mxu0 0.0
    %3514 = vmatprep.subr.mxu0 0.0
    %3515 = vmatpush1.xpose.msra.mxu0 0.0
    %3516 = vmatprep.subr.mxu0 0.0
    %3517 = vmatpush1.xpose.msra.mxu0 0.0
    %3518 = vmatprep.subr.mxu0 0.0
    %3519 = vmatpush1.xpose.msra.mxu0 0.0
    %3520 = vmatprep.subr.mxu0 0.0
    %3521 = vmatpush1.xpose.msra.mxu0 0.0
    %3522 = vmatprep.subr.mxu0 0.0
    %3523 = vmatpush1.xpose.msra.mxu0 0.0
    %3524 = vmatprep.subr.mxu0 %v144
    %3525 = vmatpush1.xpose.msra.mxu0 %v143
    %3526 = vmatprep.subr.mxu0 0.0
    %3527 = vmatpush2.xpose.msra.mxu0 0.0
    %3528 = vmatprep.subr.mxu0 0.0
    %3529 = vmatpush2.xpose.msra.mxu0 0.0
    %3530 = vmatprep.subr.mxu0 0.0
    %3531 = vmatpush2.xpose.msra.mxu0 0.0
    %3532 = vmatprep.subr.mxu0 0.0
    %3533 = vmatpush2.xpose.msra.mxu0 0.0
    %3534 = vmatprep.subr.mxu0 0.0
    %3535 = vmatpush2.xpose.msra.mxu0 0.0
    %3536 = vmatprep.subr.mxu0 0.0
    %3537 = vmatpush2.xpose.msra.mxu0 0.0
    %3538 = vmatprep.subr.mxu0 0.0
    %3539 = vmatpush2.xpose.msra.mxu0 0.0
    %3540 = vmatprep.subr.mxu0 0.0
    %3541 = vmatpush2.xpose.msra.mxu0 0.0
    %3542 = vmatprep.subr.mxu0 0.0
    %3543 = vmatpush2.xpose.msra.mxu0 0.0
    %3544 = vmatprep.subr.mxu0 0.0
    %3545 = vmatpush2.xpose.msra.mxu0 0.0
    %3546 = vmatprep.subr.mxu0 0.0
    %3547 = vmatpush2.xpose.msra.mxu0 0.0
    %3548 = vmatprep.subr.mxu0 0.0
    %3549 = vmatpush2.xpose.msra.mxu0 0.0
    %3550 = vmatprep.subr.mxu0 0.0
    %3551 = vmatpush2.xpose.msra.mxu0 0.0
    %3552 = vmatprep.subr.mxu0 0.0
    %3553 = vmatpush2.xpose.msra.mxu0 0.0
    %3554 = vmatprep.subr.mxu0 0.0
    %3555 = vmatpush2.xpose.msra.mxu0 0.0
    %3556 = vmatprep.subr.mxu0 0.0
    %3557 = vmatpush2.xpose.msra.mxu0 0.0
    %3558 = vmatprep.mubr.f32.mxu0 %v545
    %3559 = vmatmul.mubr.f32.gmra.mxu0 %v537
    %v3560 = vpop.f32.mrf.mxu0
    %v3561 = vadd.f32 %v3491, %v3560
    %v3562 = vpop.f32.mrf.mxu0
    %3563 = vdwg.mxu0
    %3564 = vmatprep.subr.mxu0 0.0
    %3565 = vmatpush1.xpose.msra.mxu0 0.0
    %3566 = vmatprep.subr.mxu0 0.0
    %3567 = vmatpush1.xpose.msra.mxu0 0.0
    %3568 = vmatprep.subr.mxu0 0.0
    %3569 = vmatpush1.xpose.msra.mxu0 0.0
    %3570 = vmatprep.subr.mxu0 0.0
    %3571 = vmatpush1.xpose.msra.mxu0 0.0
    %3572 = vmatprep.subr.mxu0 0.0
    %3573 = vmatpush1.xpose.msra.mxu0 0.0
    %3574 = vmatprep.subr.mxu0 0.0
    %3575 = vmatpush1.xpose.msra.mxu0 0.0
    %3576 = vmatprep.subr.mxu0 0.0
    %3577 = vmatpush1.xpose.msra.mxu0 0.0
    %3578 = vmatprep.subr.mxu0 0.0
    %3579 = vmatpush1.xpose.msra.mxu0 0.0
    %3580 = vmatprep.subr.mxu0 0.0
    %3581 = vmatpush1.xpose.msra.mxu0 0.0
    %3582 = vmatprep.subr.mxu0 0.0
    %3583 = vmatpush1.xpose.msra.mxu0 0.0
    %3584 = vmatprep.subr.mxu0 0.0
    %3585 = vmatpush1.xpose.msra.mxu0 0.0
    %3586 = vmatprep.subr.mxu0 0.0
    %3587 = vmatpush1.xpose.msra.mxu0 0.0
    %3588 = vmatprep.subr.mxu0 0.0
    %3589 = vmatpush1.xpose.msra.mxu0 0.0
    %3590 = vmatprep.subr.mxu0 0.0
    %3591 = vmatpush1.xpose.msra.mxu0 0.0
    %3592 = vmatprep.subr.mxu0 0.0
    %3593 = vmatpush1.xpose.msra.mxu0 0.0
    %3594 = vmatprep.subr.mxu0 %v146
    %3595 = vmatpush1.xpose.msra.mxu0 %v145
    %3596 = vmatprep.subr.mxu0 0.0
    %3597 = vmatpush2.xpose.msra.mxu0 0.0
    %3598 = vmatprep.subr.mxu0 0.0
    %3599 = vmatpush2.xpose.msra.mxu0 0.0
    %3600 = vmatprep.subr.mxu0 0.0
    %3601 = vmatpush2.xpose.msra.mxu0 0.0
    %3602 = vmatprep.subr.mxu0 0.0
    %3603 = vmatpush2.xpose.msra.mxu0 0.0
    %3604 = vmatprep.subr.mxu0 0.0
    %3605 = vmatpush2.xpose.msra.mxu0 0.0
    %3606 = vmatprep.subr.mxu0 0.0
    %3607 = vmatpush2.xpose.msra.mxu0 0.0
    %3608 = vmatprep.subr.mxu0 0.0
    %3609 = vmatpush2.xpose.msra.mxu0 0.0
    %3610 = vmatprep.subr.mxu0 0.0
    %3611 = vmatpush2.xpose.msra.mxu0 0.0
    %3612 = vmatprep.subr.mxu0 0.0
    %3613 = vmatpush2.xpose.msra.mxu0 0.0
    %3614 = vmatprep.subr.mxu0 0.0
    %3615 = vmatpush2.xpose.msra.mxu0 0.0
    %3616 = vmatprep.subr.mxu0 0.0
    %3617 = vmatpush2.xpose.msra.mxu0 0.0
    %3618 = vmatprep.subr.mxu0 0.0
    %3619 = vmatpush2.xpose.msra.mxu0 0.0
    %3620 = vmatprep.subr.mxu0 0.0
    %3621 = vmatpush2.xpose.msra.mxu0 0.0
    %3622 = vmatprep.subr.mxu0 0.0
    %3623 = vmatpush2.xpose.msra.mxu0 0.0
    %3624 = vmatprep.subr.mxu0 0.0
    %3625 = vmatpush2.xpose.msra.mxu0 0.0
    %3626 = vmatprep.subr.mxu0 0.0
    %3627 = vmatpush2.xpose.msra.mxu0 0.0
    %3628 = vmatprep.mubr.f32.mxu0 %v546
    %3629 = vmatmul.mubr.f32.gmra.mxu0 %v544
    %v3630 = vpop.f32.mrf.mxu0
    %v3631 = vadd.f32 %v3561, %v3630
    %v3632 = vpop.f32.mrf.mxu0
    %3633 = vdwg.mxu0
    %3634 = vmatprep.subr.mxu0 0.0
    %3635 = vmatpush1.xpose.msra.mxu0 0.0
    %3636 = vmatprep.subr.mxu0 0.0
    %3637 = vmatpush1.xpose.msra.mxu0 0.0
    %3638 = vmatprep.subr.mxu0 0.0
    %3639 = vmatpush1.xpose.msra.mxu0 0.0
    %3640 = vmatprep.subr.mxu0 0.0
    %3641 = vmatpush1.xpose.msra.mxu0 0.0
    %3642 = vmatprep.subr.mxu0 0.0
    %3643 = vmatpush1.xpose.msra.mxu0 0.0
    %3644 = vmatprep.subr.mxu0 0.0
    %3645 = vmatpush1.xpose.msra.mxu0 0.0
    %3646 = vmatprep.subr.mxu0 0.0
    %3647 = vmatpush1.xpose.msra.mxu0 0.0
    %3648 = vmatprep.subr.mxu0 0.0
    %3649 = vmatpush1.xpose.msra.mxu0 0.0
    %3650 = vmatprep.subr.mxu0 0.0
    %3651 = vmatpush1.xpose.msra.mxu0 0.0
    %3652 = vmatprep.subr.mxu0 0.0
    %3653 = vmatpush1.xpose.msra.mxu0 0.0
    %3654 = vmatprep.subr.mxu0 0.0
    %3655 = vmatpush1.xpose.msra.mxu0 0.0
    %3656 = vmatprep.subr.mxu0 0.0
    %3657 = vmatpush1.xpose.msra.mxu0 0.0
    %3658 = vmatprep.subr.mxu0 0.0
    %3659 = vmatpush1.xpose.msra.mxu0 0.0
    %3660 = vmatprep.subr.mxu0 0.0
    %3661 = vmatpush1.xpose.msra.mxu0 0.0
    %3662 = vmatprep.subr.mxu0 0.0
    %3663 = vmatpush1.xpose.msra.mxu0 0.0
    %3664 = vmatprep.subr.mxu0 %v148
    %3665 = vmatpush1.xpose.msra.mxu0 %v147
    %3666 = vmatprep.subr.mxu0 0.0
    %3667 = vmatpush2.xpose.msra.mxu0 0.0
    %3668 = vmatprep.subr.mxu0 0.0
    %3669 = vmatpush2.xpose.msra.mxu0 0.0
    %3670 = vmatprep.subr.mxu0 0.0
    %3671 = vmatpush2.xpose.msra.mxu0 0.0
    %3672 = vmatprep.subr.mxu0 0.0
    %3673 = vmatpush2.xpose.msra.mxu0 0.0
    %3674 = vmatprep.subr.mxu0 0.0
    %3675 = vmatpush2.xpose.msra.mxu0 0.0
    %3676 = vmatprep.subr.mxu0 0.0
    %3677 = vmatpush2.xpose.msra.mxu0 0.0
    %3678 = vmatprep.subr.mxu0 0.0
    %3679 = vmatpush2.xpose.msra.mxu0 0.0
    %3680 = vmatprep.subr.mxu0 0.0
    %3681 = vmatpush2.xpose.msra.mxu0 0.0
    %3682 = vmatprep.subr.mxu0 0.0
    %3683 = vmatpush2.xpose.msra.mxu0 0.0
    %3684 = vmatprep.subr.mxu0 0.0
    %3685 = vmatpush2.xpose.msra.mxu0 0.0
    %3686 = vmatprep.subr.mxu0 0.0
    %3687 = vmatpush2.xpose.msra.mxu0 0.0
    %3688 = vmatprep.subr.mxu0 0.0
    %3689 = vmatpush2.xpose.msra.mxu0 0.0
    %3690 = vmatprep.subr.mxu0 0.0
    %3691 = vmatpush2.xpose.msra.mxu0 0.0
    %3692 = vmatprep.subr.mxu0 0.0
    %3693 = vmatpush2.xpose.msra.mxu0 0.0
    %3694 = vmatprep.subr.mxu0 0.0
    %3695 = vmatpush2.xpose.msra.mxu0 0.0
    %3696 = vmatprep.subr.mxu0 0.0
    %3697 = vmatpush2.xpose.msra.mxu0 0.0
    %3698 = vmatprep.mubr.f32.mxu0 %v562
    %3699 = vmatmul.mubr.f32.gmra.mxu0 %v554
    %v3700 = vpop.f32.mrf.mxu0
    %v3701 = vadd.f32 %v3631, %v3700
    %v3702 = vpop.f32.mrf.mxu0
    %3703 = vdwg.mxu0
    %3704 = vmatprep.subr.mxu0 0.0
    %3705 = vmatpush1.xpose.msra.mxu0 0.0
    %3706 = vmatprep.subr.mxu0 0.0
    %3707 = vmatpush1.xpose.msra.mxu0 0.0
    %3708 = vmatprep.subr.mxu0 0.0
    %3709 = vmatpush1.xpose.msra.mxu0 0.0
    %3710 = vmatprep.subr.mxu0 0.0
    %3711 = vmatpush1.xpose.msra.mxu0 0.0
    %3712 = vmatprep.subr.mxu0 0.0
    %3713 = vmatpush1.xpose.msra.mxu0 0.0
    %3714 = vmatprep.subr.mxu0 0.0
    %3715 = vmatpush1.xpose.msra.mxu0 0.0
    %3716 = vmatprep.subr.mxu0 0.0
    %3717 = vmatpush1.xpose.msra.mxu0 0.0
    %3718 = vmatprep.subr.mxu0 0.0
    %3719 = vmatpush1.xpose.msra.mxu0 0.0
    %3720 = vmatprep.subr.mxu0 0.0
    %3721 = vmatpush1.xpose.msra.mxu0 0.0
    %3722 = vmatprep.subr.mxu0 0.0
    %3723 = vmatpush1.xpose.msra.mxu0 0.0
    %3724 = vmatprep.subr.mxu0 0.0
    %3725 = vmatpush1.xpose.msra.mxu0 0.0
    %3726 = vmatprep.subr.mxu0 0.0
    %3727 = vmatpush1.xpose.msra.mxu0 0.0
    %3728 = vmatprep.subr.mxu0 0.0
    %3729 = vmatpush1.xpose.msra.mxu0 0.0
    %3730 = vmatprep.subr.mxu0 0.0
    %3731 = vmatpush1.xpose.msra.mxu0 0.0
    %3732 = vmatprep.subr.mxu0 0.0
    %3733 = vmatpush1.xpose.msra.mxu0 0.0
    %3734 = vmatprep.subr.mxu0 %v150
    %3735 = vmatpush1.xpose.msra.mxu0 %v149
    %3736 = vmatprep.subr.mxu0 0.0
    %3737 = vmatpush2.xpose.msra.mxu0 0.0
    %3738 = vmatprep.subr.mxu0 0.0
    %3739 = vmatpush2.xpose.msra.mxu0 0.0
    %3740 = vmatprep.subr.mxu0 0.0
    %3741 = vmatpush2.xpose.msra.mxu0 0.0
    %3742 = vmatprep.subr.mxu0 0.0
    %3743 = vmatpush2.xpose.msra.mxu0 0.0
    %3744 = vmatprep.subr.mxu0 0.0
    %3745 = vmatpush2.xpose.msra.mxu0 0.0
    %3746 = vmatprep.subr.mxu0 0.0
    %3747 = vmatpush2.xpose.msra.mxu0 0.0
    %3748 = vmatprep.subr.mxu0 0.0
    %3749 = vmatpush2.xpose.msra.mxu0 0.0
    %3750 = vmatprep.subr.mxu0 0.0
    %3751 = vmatpush2.xpose.msra.mxu0 0.0
    %3752 = vmatprep.subr.mxu0 0.0
    %3753 = vmatpush2.xpose.msra.mxu0 0.0
    %3754 = vmatprep.subr.mxu0 0.0
    %3755 = vmatpush2.xpose.msra.mxu0 0.0
    %3756 = vmatprep.subr.mxu0 0.0
    %3757 = vmatpush2.xpose.msra.mxu0 0.0
    %3758 = vmatprep.subr.mxu0 0.0
    %3759 = vmatpush2.xpose.msra.mxu0 0.0
    %3760 = vmatprep.subr.mxu0 0.0
    %3761 = vmatpush2.xpose.msra.mxu0 0.0
    %3762 = vmatprep.subr.mxu0 0.0
    %3763 = vmatpush2.xpose.msra.mxu0 0.0
    %3764 = vmatprep.subr.mxu0 0.0
    %3765 = vmatpush2.xpose.msra.mxu0 0.0
    %3766 = vmatprep.subr.mxu0 0.0
    %3767 = vmatpush2.xpose.msra.mxu0 0.0
    %3768 = vmatprep.mubr.f32.mxu0 %v563
    %3769 = vmatmul.mubr.f32.gmra.mxu0 %v561
    %v3770 = vpop.f32.mrf.mxu0
    %v3771 = vadd.f32 %v3701, %v3770
    %v3772 = vpop.f32.mrf.mxu0
    %3773 = vdwg.mxu0
    %3774 = vmatprep.subr.mxu0 0.0
    %3775 = vmatpush1.xpose.msra.mxu0 0.0
    %3776 = vmatprep.subr.mxu0 0.0
    %3777 = vmatpush1.xpose.msra.mxu0 0.0
    %3778 = vmatprep.subr.mxu0 0.0
    %3779 = vmatpush1.xpose.msra.mxu0 0.0
    %3780 = vmatprep.subr.mxu0 0.0
    %3781 = vmatpush1.xpose.msra.mxu0 0.0
    %3782 = vmatprep.subr.mxu0 0.0
    %3783 = vmatpush1.xpose.msra.mxu0 0.0
    %3784 = vmatprep.subr.mxu0 0.0
    %3785 = vmatpush1.xpose.msra.mxu0 0.0
    %3786 = vmatprep.subr.mxu0 0.0
    %3787 = vmatpush1.xpose.msra.mxu0 0.0
    %3788 = vmatprep.subr.mxu0 0.0
    %3789 = vmatpush1.xpose.msra.mxu0 0.0
    %3790 = vmatprep.subr.mxu0 0.0
    %3791 = vmatpush1.xpose.msra.mxu0 0.0
    %3792 = vmatprep.subr.mxu0 0.0
    %3793 = vmatpush1.xpose.msra.mxu0 0.0
    %3794 = vmatprep.subr.mxu0 0.0
    %3795 = vmatpush1.xpose.msra.mxu0 0.0
    %3796 = vmatprep.subr.mxu0 0.0
    %3797 = vmatpush1.xpose.msra.mxu0 0.0
    %3798 = vmatprep.subr.mxu0 0.0
    %3799 = vmatpush1.xpose.msra.mxu0 0.0
    %3800 = vmatprep.subr.mxu0 0.0
    %3801 = vmatpush1.xpose.msra.mxu0 0.0
    %3802 = vmatprep.subr.mxu0 0.0
    %3803 = vmatpush1.xpose.msra.mxu0 0.0
    %3804 = vmatprep.subr.mxu0 %v152
    %3805 = vmatpush1.xpose.msra.mxu0 %v151
    %3806 = vmatprep.subr.mxu0 0.0
    %3807 = vmatpush2.xpose.msra.mxu0 0.0
    %3808 = vmatprep.subr.mxu0 0.0
    %3809 = vmatpush2.xpose.msra.mxu0 0.0
    %3810 = vmatprep.subr.mxu0 0.0
    %3811 = vmatpush2.xpose.msra.mxu0 0.0
    %3812 = vmatprep.subr.mxu0 0.0
    %3813 = vmatpush2.xpose.msra.mxu0 0.0
    %3814 = vmatprep.subr.mxu0 0.0
    %3815 = vmatpush2.xpose.msra.mxu0 0.0
    %3816 = vmatprep.subr.mxu0 0.0
    %3817 = vmatpush2.xpose.msra.mxu0 0.0
    %3818 = vmatprep.subr.mxu0 0.0
    %3819 = vmatpush2.xpose.msra.mxu0 0.0
    %3820 = vmatprep.subr.mxu0 0.0
    %3821 = vmatpush2.xpose.msra.mxu0 0.0
    %3822 = vmatprep.subr.mxu0 0.0
    %3823 = vmatpush2.xpose.msra.mxu0 0.0
    %3824 = vmatprep.subr.mxu0 0.0
    %3825 = vmatpush2.xpose.msra.mxu0 0.0
    %3826 = vmatprep.subr.mxu0 0.0
    %3827 = vmatpush2.xpose.msra.mxu0 0.0
    %3828 = vmatprep.subr.mxu0 0.0
    %3829 = vmatpush2.xpose.msra.mxu0 0.0
    %3830 = vmatprep.subr.mxu0 0.0
    %3831 = vmatpush2.xpose.msra.mxu0 0.0
    %3832 = vmatprep.subr.mxu0 0.0
    %3833 = vmatpush2.xpose.msra.mxu0 0.0
    %3834 = vmatprep.subr.mxu0 0.0
    %3835 = vmatpush2.xpose.msra.mxu0 0.0
    %3836 = vmatprep.subr.mxu0 0.0
    %3837 = vmatpush2.xpose.msra.mxu0 0.0
    %3838 = vmatprep.mubr.f32.mxu0 %v579
    %3839 = vmatmul.mubr.f32.gmra.mxu0 %v571
    %v3840 = vpop.f32.mrf.mxu0
    %v3841 = vadd.f32 %v3771, %v3840
    %v3842 = vpop.f32.mrf.mxu0
    %3843 = vdwg.mxu0
    %3844 = vmatprep.subr.mxu0 0.0
    %3845 = vmatpush1.xpose.msra.mxu0 0.0
    %3846 = vmatprep.subr.mxu0 0.0
    %3847 = vmatpush1.xpose.msra.mxu0 0.0
    %3848 = vmatprep.subr.mxu0 0.0
    %3849 = vmatpush1.xpose.msra.mxu0 0.0
    %3850 = vmatprep.subr.mxu0 0.0
    %3851 = vmatpush1.xpose.msra.mxu0 0.0
    %3852 = vmatprep.subr.mxu0 0.0
    %3853 = vmatpush1.xpose.msra.mxu0 0.0
    %3854 = vmatprep.subr.mxu0 0.0
    %3855 = vmatpush1.xpose.msra.mxu0 0.0
    %3856 = vmatprep.subr.mxu0 0.0
    %3857 = vmatpush1.xpose.msra.mxu0 0.0
    %3858 = vmatprep.subr.mxu0 0.0
    %3859 = vmatpush1.xpose.msra.mxu0 0.0
    %3860 = vmatprep.subr.mxu0 0.0
    %3861 = vmatpush1.xpose.msra.mxu0 0.0
    %3862 = vmatprep.subr.mxu0 0.0
    %3863 = vmatpush1.xpose.msra.mxu0 0.0
    %3864 = vmatprep.subr.mxu0 0.0
    %3865 = vmatpush1.xpose.msra.mxu0 0.0
    %3866 = vmatprep.subr.mxu0 0.0
    %3867 = vmatpush1.xpose.msra.mxu0 0.0
    %3868 = vmatprep.subr.mxu0 0.0
    %3869 = vmatpush1.xpose.msra.mxu0 0.0
    %3870 = vmatprep.subr.mxu0 0.0
    %3871 = vmatpush1.xpose.msra.mxu0 0.0
    %3872 = vmatprep.subr.mxu0 0.0
    %3873 = vmatpush1.xpose.msra.mxu0 0.0
    %3874 = vmatprep.subr.mxu0 %v154
    %3875 = vmatpush1.xpose.msra.mxu0 %v153
    %3876 = vmatprep.subr.mxu0 0.0
    %3877 = vmatpush2.xpose.msra.mxu0 0.0
    %3878 = vmatprep.subr.mxu0 0.0
    %3879 = vmatpush2.xpose.msra.mxu0 0.0
    %3880 = vmatprep.subr.mxu0 0.0
    %3881 = vmatpush2.xpose.msra.mxu0 0.0
    %3882 = vmatprep.subr.mxu0 0.0
    %3883 = vmatpush2.xpose.msra.mxu0 0.0
    %3884 = vmatprep.subr.mxu0 0.0
    %3885 = vmatpush2.xpose.msra.mxu0 0.0
    %3886 = vmatprep.subr.mxu0 0.0
    %3887 = vmatpush2.xpose.msra.mxu0 0.0
    %3888 = vmatprep.subr.mxu0 0.0
    %3889 = vmatpush2.xpose.msra.mxu0 0.0
    %3890 = vmatprep.subr.mxu0 0.0
    %3891 = vmatpush2.xpose.msra.mxu0 0.0
    %3892 = vmatprep.subr.mxu0 0.0
    %3893 = vmatpush2.xpose.msra.mxu0 0.0
    %3894 = vmatprep.subr.mxu0 0.0
    %3895 = vmatpush2.xpose.msra.mxu0 0.0
    %3896 = vmatprep.subr.mxu0 0.0
    %3897 = vmatpush2.xpose.msra.mxu0 0.0
    %3898 = vmatprep.subr.mxu0 0.0
    %3899 = vmatpush2.xpose.msra.mxu0 0.0
    %3900 = vmatprep.subr.mxu0 0.0
    %3901 = vmatpush2.xpose.msra.mxu0 0.0
    %3902 = vmatprep.subr.mxu0 0.0
    %3903 = vmatpush2.xpose.msra.mxu0 0.0
    %3904 = vmatprep.subr.mxu0 0.0
    %3905 = vmatpush2.xpose.msra.mxu0 0.0
    %3906 = vmatprep.subr.mxu0 0.0
    %3907 = vmatpush2.xpose.msra.mxu0 0.0
    %3908 = vmatprep.mubr.f32.mxu0 %v580
    %3909 = vmatmul.mubr.f32.gmra.mxu0 %v578
    %v3910 = vpop.f32.mrf.mxu0
    %v3911 = vadd.f32 %v3841, %v3910
    %v3912 = vpop.f32.mrf.mxu0
    %3913 = vdwg.mxu0
    %3914 = vmatprep.subr.mxu0 0.0
    %3915 = vmatpush1.xpose.msra.mxu0 0.0
    %3916 = vmatprep.subr.mxu0 0.0
    %3917 = vmatpush1.xpose.msra.mxu0 0.0
    %3918 = vmatprep.subr.mxu0 0.0
    %3919 = vmatpush1.xpose.msra.mxu0 0.0
    %3920 = vmatprep.subr.mxu0 0.0
    %3921 = vmatpush1.xpose.msra.mxu0 0.0
    %3922 = vmatprep.subr.mxu0 0.0
    %3923 = vmatpush1.xpose.msra.mxu0 0.0
    %3924 = vmatprep.subr.mxu0 0.0
    %3925 = vmatpush1.xpose.msra.mxu0 0.0
    %3926 = vmatprep.subr.mxu0 0.0
    %3927 = vmatpush1.xpose.msra.mxu0 0.0
    %3928 = vmatprep.subr.mxu0 0.0
    %3929 = vmatpush1.xpose.msra.mxu0 0.0
    %3930 = vmatprep.subr.mxu0 0.0
    %3931 = vmatpush1.xpose.msra.mxu0 0.0
    %3932 = vmatprep.subr.mxu0 0.0
    %3933 = vmatpush1.xpose.msra.mxu0 0.0
    %3934 = vmatprep.subr.mxu0 0.0
    %3935 = vmatpush1.xpose.msra.mxu0 0.0
    %3936 = vmatprep.subr.mxu0 0.0
    %3937 = vmatpush1.xpose.msra.mxu0 0.0
    %3938 = vmatprep.subr.mxu0 0.0
    %3939 = vmatpush1.xpose.msra.mxu0 0.0
    %3940 = vmatprep.subr.mxu0 0.0
    %3941 = vmatpush1.xpose.msra.mxu0 0.0
    %3942 = vmatprep.subr.mxu0 0.0
    %3943 = vmatpush1.xpose.msra.mxu0 0.0
    %3944 = vmatprep.subr.mxu0 %v156
    %3945 = vmatpush1.xpose.msra.mxu0 %v155
    %3946 = vmatprep.subr.mxu0 0.0
    %3947 = vmatpush2.xpose.msra.mxu0 0.0
    %3948 = vmatprep.subr.mxu0 0.0
    %3949 = vmatpush2.xpose.msra.mxu0 0.0
    %3950 = vmatprep.subr.mxu0 0.0
    %3951 = vmatpush2.xpose.msra.mxu0 0.0
    %3952 = vmatprep.subr.mxu0 0.0
    %3953 = vmatpush2.xpose.msra.mxu0 0.0
    %3954 = vmatprep.subr.mxu0 0.0
    %3955 = vmatpush2.xpose.msra.mxu0 0.0
    %3956 = vmatprep.subr.mxu0 0.0
    %3957 = vmatpush2.xpose.msra.mxu0 0.0
    %3958 = vmatprep.subr.mxu0 0.0
    %3959 = vmatpush2.xpose.msra.mxu0 0.0
    %3960 = vmatprep.subr.mxu0 0.0
    %3961 = vmatpush2.xpose.msra.mxu0 0.0
    %3962 = vmatprep.subr.mxu0 0.0
    %3963 = vmatpush2.xpose.msra.mxu0 0.0
    %3964 = vmatprep.subr.mxu0 0.0
    %3965 = vmatpush2.xpose.msra.mxu0 0.0
    %3966 = vmatprep.subr.mxu0 0.0
    %3967 = vmatpush2.xpose.msra.mxu0 0.0
    %3968 = vmatprep.subr.mxu0 0.0
    %3969 = vmatpush2.xpose.msra.mxu0 0.0
    %3970 = vmatprep.subr.mxu0 0.0
    %3971 = vmatpush2.xpose.msra.mxu0 0.0
    %3972 = vmatprep.subr.mxu0 0.0
    %3973 = vmatpush2.xpose.msra.mxu0 0.0
    %3974 = vmatprep.subr.mxu0 0.0
    %3975 = vmatpush2.xpose.msra.mxu0 0.0
    %3976 = vmatprep.subr.mxu0 0.0
    %3977 = vmatpush2.xpose.msra.mxu0 0.0
    %3978 = vmatprep.mubr.f32.mxu0 %v596
    %3979 = vmatmul.mubr.f32.gmra.mxu0 %v588
    %v3980 = vpop.f32.mrf.mxu0
    %v3981 = vadd.f32 %v3911, %v3980
    %v3982 = vpop.f32.mrf.mxu0
    %3983 = vdwg.mxu0
    %3984 = vmatprep.subr.mxu0 0.0
    %3985 = vmatpush1.xpose.msra.mxu0 0.0
    %3986 = vmatprep.subr.mxu0 0.0
    %3987 = vmatpush1.xpose.msra.mxu0 0.0
    %3988 = vmatprep.subr.mxu0 0.0
    %3989 = vmatpush1.xpose.msra.mxu0 0.0
    %3990 = vmatprep.subr.mxu0 0.0
    %3991 = vmatpush1.xpose.msra.mxu0 0.0
    %3992 = vmatprep.subr.mxu0 0.0
    %3993 = vmatpush1.xpose.msra.mxu0 0.0
    %3994 = vmatprep.subr.mxu0 0.0
    %3995 = vmatpush1.xpose.msra.mxu0 0.0
    %3996 = vmatprep.subr.mxu0 0.0
    %3997 = vmatpush1.xpose.msra.mxu0 0.0
    %3998 = vmatprep.subr.mxu0 0.0
    %3999 = vmatpush1.xpose.msra.mxu0 0.0
    %4000 = vmatprep.subr.mxu0 0.0
    %4001 = vmatpush1.xpose.msra.mxu0 0.0
    %4002 = vmatprep.subr.mxu0 0.0
    %4003 = vmatpush1.xpose.msra.mxu0 0.0
    %4004 = vmatprep.subr.mxu0 0.0
    %4005 = vmatpush1.xpose.msra.mxu0 0.0
    %4006 = vmatprep.subr.mxu0 0.0
    %4007 = vmatpush1.xpose.msra.mxu0 0.0
    %4008 = vmatprep.subr.mxu0 0.0
    %4009 = vmatpush1.xpose.msra.mxu0 0.0
    %4010 = vmatprep.subr.mxu0 0.0
    %4011 = vmatpush1.xpose.msra.mxu0 0.0
    %4012 = vmatprep.subr.mxu0 0.0
    %4013 = vmatpush1.xpose.msra.mxu0 0.0
    %4014 = vmatprep.subr.mxu0 %v158
    %4015 = vmatpush1.xpose.msra.mxu0 %v157
    %4016 = vmatprep.subr.mxu0 0.0
    %4017 = vmatpush2.xpose.msra.mxu0 0.0
    %4018 = vmatprep.subr.mxu0 0.0
    %4019 = vmatpush2.xpose.msra.mxu0 0.0
    %4020 = vmatprep.subr.mxu0 0.0
    %4021 = vmatpush2.xpose.msra.mxu0 0.0
    %4022 = vmatprep.subr.mxu0 0.0
    %4023 = vmatpush2.xpose.msra.mxu0 0.0
    %4024 = vmatprep.subr.mxu0 0.0
    %4025 = vmatpush2.xpose.msra.mxu0 0.0
    %4026 = vmatprep.subr.mxu0 0.0
    %4027 = vmatpush2.xpose.msra.mxu0 0.0
    %4028 = vmatprep.subr.mxu0 0.0
    %4029 = vmatpush2.xpose.msra.mxu0 0.0
    %4030 = vmatprep.subr.mxu0 0.0
    %4031 = vmatpush2.xpose.msra.mxu0 0.0
    %4032 = vmatprep.subr.mxu0 0.0
    %4033 = vmatpush2.xpose.msra.mxu0 0.0
    %4034 = vmatprep.subr.mxu0 0.0
    %4035 = vmatpush2.xpose.msra.mxu0 0.0
    %4036 = vmatprep.subr.mxu0 0.0
    %4037 = vmatpush2.xpose.msra.mxu0 0.0
    %4038 = vmatprep.subr.mxu0 0.0
    %4039 = vmatpush2.xpose.msra.mxu0 0.0
    %4040 = vmatprep.subr.mxu0 0.0
    %4041 = vmatpush2.xpose.msra.mxu0 0.0
    %4042 = vmatprep.subr.mxu0 0.0
    %4043 = vmatpush2.xpose.msra.mxu0 0.0
    %4044 = vmatprep.subr.mxu0 0.0
    %4045 = vmatpush2.xpose.msra.mxu0 0.0
    %4046 = vmatprep.subr.mxu0 0.0
    %4047 = vmatpush2.xpose.msra.mxu0 0.0
    %4048 = vmatprep.mubr.f32.mxu0 %v597
    %4049 = vmatmul.mubr.f32.gmra.mxu0 %v595
    %v4050 = vpop.f32.mrf.mxu0
    %v4051 = vadd.f32 %v3981, %v4050
    %v4052 = vpop.f32.mrf.mxu0
    %4053 = vdwg.mxu0
    %vm4054 = vcmask 41984
    %4055 = vst.msk [vmem:[#allocation7] sm:$0x3] %vm4054, %v4051
    // Predicated region
    $region22: #{tpu_custom_call.1} parent=1 // pred_check
      _
    $region23: #{tpu_custom_call.1} parent=1 // pred_check_branch
      %4057 = sbr.rel (0) target = $region25
    $region24: #{tpu_custom_call.1} parent=1 // pred_region
      %s4059 = ssub.s32 32, 32
      %4060 = vsyncadd [#allocation4], %s4059
      %s4062 = sshll.u32 [#allocation7], 4
      %s4063 = int_to_ptr.vmem [resolvable:$true] %s4062
      %4065 = dma.vmem_to_hbm [thread:$0]  %s4063, 32, %s3, [#allocation4]
    $region25: #{tpu_custom_call.1} parent=1 // pred_fallthru
      _
    // Predicated region
    $region26: #{tpu_custom_call.1} parent=1 // pred_check
      _
    $region27: #{tpu_custom_call.1} parent=1 // pred_check_branch
      %4067 = sbr.rel (0) target = $region29
    $region28: #{tpu_custom_call.1} parent=1 // pred_region
      %4068 = dma.done [#allocation4], 32
    $region29: #{tpu_custom_call.1} parent=1 // pred_fallthru
      _
    %4069 = vsyncpa [#allocation3], 1
    %4070 = vsyncpa [#allocation6], 1
    %4071 = vsyncpa [#allocation4], 1

</llo_original>
